<compile_context>
chip_gen: v7x
topology: tpu7x:2x2x1
jax: 0.10.0
libtpu: 0.0.40
codegen_flags: <defaults>
</compile_context>

<pallas_src>
import jax
import jax.numpy as jnp
from jax.experimental import pallas as pl
from jax.experimental.pallas import tpu as pltpu

_BN_EPS = 1e-5
_MM_DTYPE = jnp.bfloat16             # MXU operand dtype; accumulation stays f32
_OUT_PAD = 128                       # lane-dense width for the 3-channel decoder head
_LANE = 128
_VMEM_LIMIT_BYTES = 40 * 1024 * 1024  # > v5e's 16 MiB scoped default, < v7x physical
_HP = jax.lax.Precision.HIGHEST


def _round_up(x, m):
    return ((x + m - 1) // m) * m


def _fold_bn(w, b, gamma, beta, mean, var, eps=_BN_EPS):
    """Fold eval-mode BatchNorm1d into a preceding 1x1 conv / linear (w: (C_in, C_out))."""
    scale = gamma / jnp.sqrt(var + eps)
    return w * scale[None, :], (b - mean) * scale + beta


def _full_spec(shape):
    zeros = (0,) * len(shape)
    return pl.BlockSpec(shape, lambda *_: zeros)


# ---------------------------------------------------------------------------
# Kernels
# ---------------------------------------------------------------------------

def _encoder_kernel(x_ref, w1_ref, b1_ref, w2_ref, b2_ref, w3_ref, b3_ref,
                    o_ref, acc_ref):
    """PointNetfeat trunk + partial global max-pool.

    Grid = (B, n_split, tiles_per_split).  x tile: (1, tile_n, 3) f32.
    acc_ref: (1, 1024) f32 running max.  o_ref block (1,1,1,1024): per-(batch, split)
    partial max; the Linear head is applied in the wrapper (batched over B).
    """
    j = pl.program_id(2)

    @pl.when(j == 0)
    def _():
        acc_ref[...] = jnp.full(acc_ref.shape, -jnp.inf, dtype=acc_ref.dtype)

    x = x_ref[0]                                                   # (tile_n, 3) f32
    # Layer 1 kept fully in f32: K=3 is negligible MXU work and this preserves the
    # max-pool winner for near-tied points.
    h = jnp.dot(x, w1_ref[...], preferred_element_type=jnp.float32) + b1_ref[...]
    h = jnp.maximum(h, 0.0)                                        # relu(bn1(conv1))
    h = jnp.dot(h.astype(w2_ref.dtype), w2_ref[...],
                preferred_element_type=jnp.float32) + b2_ref[...]
    h = jnp.maximum(h, 0.0)                                        # relu(bn2(conv2))
    h = jnp.dot(h.astype(w3_ref.dtype), w3_ref[...],
                preferred_element_type=jnp.float32) + b3_ref[...]  # bn3(conv3)

    acc_ref[...] = jnp.maximum(acc_ref[...], jnp.max(h, axis=0, keepdims=True))

    @pl.when(j == pl.num_programs(2) - 1)
    def _():
        o_ref[0, 0] = acc_ref[...]


def _pointgencon_kernel(rand_ref, base_ref, w1c_ref, w2_ref, b2_ref,
                        w3_ref, b3_ref, w4_ref, b4_ref, o_ref):
    """PointGenCon with the layer-1 latent contribution hoisted out.

    h1 = relu(base + rand * w1_row0) is a VPU broadcast-FMA (no (tile_m,C0)@(C0,C0)
    matmul and no HBM latent broadcast).  base / w1_row0 / w2-in are zero-padded to a
    128-lane multiple so the remaining matmuls are fully aligned; w4/b4 are padded to
    128 output lanes so stores are unmasked (wrapper slices [:, :, :3]).
    """
    r = rand_ref[0]                                             # (tile_m, 1) f32
    h = jnp.maximum(base_ref[0] + r * w1c_ref[...], 0.0)        # (tile_m, C1p) f32
    h = jnp.dot(h.astype(w2_ref.dtype), w2_ref[...],
                preferred_element_type=jnp.float32) + b2_ref[...]
    h = jnp.maximum(h, 0.0)
    h = jnp.dot(h.astype(w3_ref.dtype), w3_ref[...],
                preferred_element_type=jnp.float32) + b3_ref[...]
    h = jnp.maximum(h, 0.0)
    h = jnp.dot(h.astype(w4_ref.dtype), w4_ref[...],
                preferred_element_type=jnp.float32) + b4_ref[...]
    o_ref[0] = jnp.tanh(h)


# ---------------------------------------------------------------------------
# Wrappers
# ---------------------------------------------------------------------------

def encoder_forward(x, enc, *, tile_n=2048):
    """x: (B, 3, N) f32 -> latent (B, bottleneck) f32."""
    B, _, N = x.shape

    w1, b1 = _fold_bn(enc["w1"], enc["b1"], *enc["bn1"])
    w2, b2 = _fold_bn(enc["w2"], enc["b2"], *enc["bn2"])
    w3, b3 = _fold_bn(enc["w3"], enc["b3"], *enc["bn3"])
    wl, bl = _fold_bn(enc["wl"], enc["bl"], *enc["bnl"])
    feat = w3.shape[1]                                   # 1024

    # Split the point axis in two so both v7x TensorCores get encoder work even at
    # B=1; each (batch, split) produces an independent partial max, combined below.
    n_split = 2 if N >= 1024 else 1
    per_split = -(-N // n_split)
    tile_eff = min(tile_n, _round_up(per_split, 512))
    tiles_per_split = -(-per_split // tile_eff)
    n_pad = tile_eff * tiles_per_split * n_split

    # (B, 3, N) -> (B, N, 3); pad points by edge-replication (max-pool invariant).
    x_pts = jnp.transpose(x, (0, 2, 1))
    if n_pad != N:
        x_pts = jnp.pad(x_pts, ((0, 0), (0, n_pad - N), (0, 0)), mode="edge")

    pooled = pl.pallas_call(
        _encoder_kernel,
        out_shape=jax.ShapeDtypeStruct((B, n_split, 1, feat), jnp.float32),
        grid_spec=pltpu.PrefetchScalarGridSpec(
            num_scalar_prefetch=0,
            grid=(B, n_split, tiles_per_split),
            in_specs=[
                pl.BlockSpec((1, tile_eff, 3),
                             lambda b, s, j: (b, s * tiles_per_split + j, 0)),
                _full_spec(w1.shape), _full_spec((1, w1.shape[1])),
                _full_spec(w2.shape), _full_spec((1, w2.shape[1])),
                _full_spec(w3.shape), _full_spec((1, w3.shape[1])),
            ],
            out_specs=pl.BlockSpec((1, 1, 1, feat), lambda b, s, j: (b, s, 0, 0)),
            scratch_shapes=[pltpu.VMEM((1, feat), jnp.float32)],
        ),
        compiler_params=pltpu.CompilerParams(
            dimension_semantics=("parallel", "parallel", "arbitrary"),
            vmem_limit_bytes=_VMEM_LIMIT_BYTES),
    )(x_pts,
      w1, b1.reshape(1, -1),
      w2.astype(_MM_DTYPE), b2.reshape(1, -1),
      w3.astype(_MM_DTYPE), b3.reshape(1, -1))

    g = jnp.max(pooled.reshape(B, n_split, feat), axis=1)         # (B, 1024)
    # Linear(1024 -> bneck) + folded BN + ReLU: one batched f32 matmul (MXU-efficient,
    # frees the ~2 MiB double-buffered wl from the per-tile kernel).
    lat = jnp.dot(g, wl, precision=_HP) + bl
    return jnp.maximum(lat, 0.0)


def pointgencon_forward(rand_grid, latent, dec, *, tile_m=2048):
    """rand_grid: (B, 1, npts) f32; latent: (B, bneck) f32 -> (B, npts, 3) f32."""
    B, _, npts = rand_grid.shape

    w1, b1 = _fold_bn(dec["w1"], dec["b1"], *dec["bn1"])
    w2, b2 = _fold_bn(dec["w2"], dec["b2"], *dec["bn2"])
    w3, b3 = _fold_bn(dec["w3"], dec["b3"], *dec["bn3"])
    w4, b4 = dec["w4"], dec["b4"]
    c1 = w1.shape[1]                    # bottleneck + 1 (odd, e.g. 513)
    c_out = w4.shape[1]                 # 3

    # Layer-1 hoist: the latent part of conv1+bn1 is identical for every point of a
    # batch; precompute it once per batch and keep only the rank-1 rand contribution
    # for the kernel.
    base = jnp.dot(latent, w1[1:, :], precision=_HP) + b1         # (B, c1)
    w1_row0 = w1[0, :]                                            # rand-channel weights

    # Kill the 513 misalignment: pad layer-1 width / layer-2 K to a 128 multiple
    # (zero rows/cols contribute nothing).
    c1p = _round_up(c1, _LANE)
    base_p = jnp.zeros((B, 1, c1p), jnp.float32).at[:, 0, :c1].set(base)
    w1c_p = jnp.zeros((1, c1p), jnp.float32).at[0, :c1].set(w1_row0)
    w2_p = jnp.zeros((c1p, w2.shape[1]), w2.dtype).at[:c1, :].set(w2)

    # Lane-dense 128-wide output head (unmasked vst); wrapper slices the first 3 cols.
    w4_p = jnp.zeros((w4.shape[0], _OUT_PAD), w4.dtype).at[:, :c_out].set(w4)
    b4_p = jnp.zeros((_OUT_PAD,), b4.dtype).at[:c_out].set(b4)

    tile_eff = min(tile_m, _round_up(npts, 512))
    m_pad = _round_up(npts, tile_eff)
    rand_rows = jnp.transpose(rand_grid, (0, 2, 1))               # (B, npts, 1)
    if m_pad != npts:
        rand_rows = jnp.pad(rand_rows, ((0, 0), (0, m_pad - npts), (0, 0)))

    out = pl.pallas_call(
        _pointgencon_kernel,
        out_shape=jax.ShapeDtypeStruct((B, m_pad, _OUT_PAD), jnp.float32),
        grid_spec=pltpu.PrefetchScalarGridSpec(
            num_scalar_prefetch=0,
            grid=(B, m_pad // tile_eff),
            in_specs=[
                pl.BlockSpec((1, tile_eff, 1), lambda b, i: (b, i, 0)),   # rand
                pl.BlockSpec((1, 1, c1p), lambda b, i: (b, 0, 0)),        # per-batch base
                _full_spec(w1c_p.shape),
                _full_spec(w2_p.shape), _full_spec((1, w2.shape[1])),
                _full_spec(w3.shape), _full_spec((1, w3.shape[1])),
                _full_spec(w4_p.shape), _full_spec((1, _OUT_PAD)),
            ],
            out_specs=pl.BlockSpec((1, tile_eff, _OUT_PAD), lambda b, i: (b, i, 0)),
        ),
        compiler_params=pltpu.CompilerParams(
            dimension_semantics=("parallel", "parallel"),
            vmem_limit_bytes=_VMEM_LIMIT_BYTES),
    )(rand_rows, base_p, w1c_p,
      w2_p.astype(_MM_DTYPE), b2.reshape(1, -1),
      w3.astype(_MM_DTYPE), b3.reshape(1, -1),
      w4_p.astype(_MM_DTYPE), b4_p.reshape(1, -1))
    return out[:, :npts, :c_out]


def ae_curskenet_forward(x, rand_grids, params, *, tile_m=2048, tile_n=2048):
    """AE_CurSkeNet forward.  x: (B, 3, num_points); rand_grids: list of
    (B, 1, num_points/nb_primitives) uniform grids.  Returns (B, num_points, 3)."""
    latent = encoder_forward(x, params["enc"], tile_n=tile_n)     # (B, bneck)
    # TODO(synk): the original forward() also concatenates an all-zero channel,
    # giving 2+bottleneck input channels, which mismatches the decoder's
    # Conv1d(1+bottleneck, ...); we follow forward_inference's 1-channel grid so
    # channel counts are consistent.
    outs = [pointgencon_forward(rg, latent, params["dec"][i], tile_m=tile_m)
            for i, rg in enumerate(rand_grids)]
    # torch.cat(outs, 2).transpose(2, 1) -> (B, num_points, 3); already points-major.
    return jnp.concatenate(outs, axis=1)


# ---------------------------------------------------------------------------
# Parameters & pure-JAX reference
# ---------------------------------------------------------------------------

def init_params(key, *, bottleneck_size=512, nb_primitives=1):
    n_keys = 24 + 20 * nb_primitives
    keys = iter(jax.random.split(key, n_keys))

    def conv(cin, cout):
        w = jax.random.normal(next(keys), (cin, cout), jnp.float32) * (1.0 / (cin ** 0.5))
        b = jax.random.normal(next(keys), (cout,), jnp.float32) * 0.1
        return w, b

    def bn(c):
        gamma = 1.0 + 0.1 * jax.random.normal(next(keys), (c,), jnp.float32)
        beta = 0.1 * jax.random.normal(next(keys), (c,), jnp.float32)
        mean = 0.05 * jax.random.normal(next(keys), (c,), jnp.float32)
        var = 1.0 + 0.1 * jax.random.uniform(next(keys), (c,), jnp.float32)
        return gamma, beta, mean, var

    enc = {}
    enc["w1"], enc["b1"] = conv(3, 64);      enc["bn1"] = bn(64)
    enc["w2"], enc["b2"] = conv(64, 128);    enc["bn2"] = bn(128)
    enc["w3"], enc["b3"] = conv(128, 1024);  enc["bn3"] = bn(1024)
    enc["wl"], enc["bl"] = conv(1024, bottleneck_size)
    enc["bnl"] = bn(bottleneck_size)

    decs = []
    c0 = bottleneck_size + 1
    for _ in range(nb_primitives):
        d = {}
        d["w1"], d["b1"] = conv(c0, c0);            d["bn1"] = bn(c0)
        d["w2"], d["b2"] = conv(c0, c0 // 2);       d["bn2"] = bn(c0 // 2)
        d["w3"], d["b3"] = conv(c0 // 2, c0 // 4);  d["bn3"] = bn(c0 // 4)
        d["w4"], d["b4"] = conv(c0 // 4, 3)
        decs.append(d)
    return {"enc": enc, "dec": decs}


def reference_forward(x, rand_grids, params, eps=_BN_EPS):
    """Pure-JAX f32 reference (eval-mode BN) matching the PyTorch forward."""
    hp = jax.lax.Precision.HIGHEST

    def conv(h, w, b):
        return jnp.einsum("bcn,cd->bdn", h, w, precision=hp) + b[None, :, None]

    def bn(h, g, bt, m, v):
        s = g / jnp.sqrt(v + eps)
        return (h - m[None, :, None]) * s[None, :, None] + bt[None, :, None]

    e = params["enc"]
    h = jax.nn.relu(bn(conv(x, e["w1"], e["b1"]), *e["bn1"]))
    h = jax.nn.relu(bn(conv(h, e["w2"], e["b2"]), *e["bn2"]))
    h = bn(conv(h, e["w3"], e["b3"]), *e["bn3"])
    g = jnp.max(h, axis=2)                                             # (B, 1024)
    lat = jnp.einsum("bf,fo->bo", g, e["wl"], precision=hp) + e["bl"]
    gam, bet, m, v = e["bnl"]
    lat = jax.nn.relu((lat - m) * (gam / jnp.sqrt(v + eps)) + bet)     # (B, bneck)

    outs = []
    for i, rg in enumerate(rand_grids):
        d = params["dec"][i]
        B, _, npts = rg.shape
        y = jnp.concatenate(
            [rg, jnp.broadcast_to(lat[:, :, None], (B, lat.shape[1], npts))], axis=1)
        h = jax.nn.relu(bn(conv(y, d["w1"], d["b1"]), *d["bn1"]))
        h = jax.nn.relu(bn(conv(h, d["w2"], d["b2"]), *d["bn2"]))
        h = jax.nn.relu(bn(conv(h, d["w3"], d["b3"]), *d["bn3"]))
        outs.append(jnp.tanh(conv(h, d["w4"], d["b4"])))
    out = jnp.concatenate(outs, axis=2)                                # (B, 3, N)
    return jnp.transpose(out, (0, 2, 1))                               # (B, N, 3)


# ---------------------------------------------------------------------------

if __name__ == "__main__":
    key = jax.random.PRNGKey(0)
    k_param, k_x, k_grid = jax.random.split(key, 3)

    B, NUM_POINTS, BOTTLENECK, NB_PRIM = 2, 1024, 512, 1

    params = init_params(k_param, bottleneck_size=BOTTLENECK, nb_primitives=NB_PRIM)
    x = jax.random.normal(k_x, (B, 3, NUM_POINTS), jnp.float32)

    npts = NUM_POINTS // NB_PRIM
    gkeys = jax.random.split(k_grid, NB_PRIM)
    rand_grids = [jax.random.uniform(gkeys[i], (B, 1, npts), jnp.float32)
                  for i in range(NB_PRIM)]

    out = jax.block_until_ready(
        ae_curskenet_forward(x, rand_grids, params, tile_m=2048, tile_n=2048))
    assert out.shape == (B, NUM_POINTS, 3), out.shape

    ref = jax.block_until_ready(reference_forward(x, rand_grids, params))
    diff = jnp.abs(out - ref)
    max_err = float(jnp.max(diff))
    mean_err = float(jnp.mean(diff))
    # bf16 MXU operands (layers 2+) with f32 accumulation vs. f32 reference.
    assert max_err < 7e-2 and mean_err < 1e-2, (max_err, mean_err)

    print("KERNEL_OK")
</pallas_src>

<mosaic_0001>
module attributes {stable_mosaic.version = 11 : i64} {
  func.func @_encoder_kernel(%arg0: i32, %arg1: i32, %arg2: i32, %arg3: memref<1x512x3xf32, #tpu.memory_space<vmem>>, %arg4: memref<3x64xf32, #tpu.memory_space<vmem>>, %arg5: memref<1x64xf32, #tpu.memory_space<vmem>>, %arg6: memref<64x128xbf16, #tpu.memory_space<vmem>>, %arg7: memref<1x128xf32, #tpu.memory_space<vmem>>, %arg8: memref<128x1024xbf16, #tpu.memory_space<vmem>>, %arg9: memref<1x1024xf32, #tpu.memory_space<vmem>>, %arg10: memref<1x1x1x1024xf32, #tpu.memory_space<vmem>>, %arg11: memref<1x1024xf32, #tpu.memory_space<vmem>>) attributes {dimension_semantics = [#tpu.dimension_semantics<parallel>, #tpu.dimension_semantics<parallel>, #tpu.dimension_semantics<arbitrary>], iteration_bounds = array<i64: 2, 2, 1>, scalar_prefetch = 0 : i64, scratch_operands = 1 : i64, tpu.core_type = #tpu.core_type<tc>, window_params = [{transform_indices = @transform_0, window_bounds = array<i64: 1, 512, 3>}, {pipeline_mode = #tpu.pipeline_mode<synchronous>, transform_indices = @transform_1, window_bounds = array<i64: 3, 64>}, {pipeline_mode = #tpu.pipeline_mode<synchronous>, transform_indices = @transform_2, window_bounds = array<i64: 1, 64>}, {pipeline_mode = #tpu.pipeline_mode<synchronous>, transform_indices = @transform_3, window_bounds = array<i64: 64, 128>}, {pipeline_mode = #tpu.pipeline_mode<synchronous>, transform_indices = @transform_4, window_bounds = array<i64: 1, 128>}, {pipeline_mode = #tpu.pipeline_mode<synchronous>, transform_indices = @transform_5, window_bounds = array<i64: 128, 1024>}, {pipeline_mode = #tpu.pipeline_mode<synchronous>, transform_indices = @transform_6, window_bounds = array<i64: 1, 1024>}, {transform_indices = @transform_7, window_bounds = array<i64: 1, 1, 1, 1024>}]} {
    %c0_i32 = arith.constant 0 : i32
    %0 = arith.cmpi eq, %arg2, %c0_i32 : i32
    %1 = arith.extui %0 : i1 to i32
    %c0_i32_0 = arith.constant 0 : i32
    %2 = arith.cmpi ne, %1, %c0_i32_0 : i32
    scf.if %2 {
      %cst_26 = arith.constant 0xFF800000 : f32
      %34 = vector.broadcast %cst_26 : f32 to vector<1x1024xf32>
      %c0_27 = arith.constant 0 : index
      %c0_28 = arith.constant 0 : index
      %35 = vector.load %arg11[%c0_27, %c0_28] : memref<1x1024xf32, #tpu.memory_space<vmem>>, vector<1x1024xf32>
      tpu.vector_store %arg11[%c0_27, %c0_28], %34 {strides = array<i32>} : memref<1x1024xf32, #tpu.memory_space<vmem>>, vector<1x1024xf32>,
    } else {
    }
    %c0 = arith.constant 0 : index
    %c0_1 = arith.constant 0 : index
    %c0_2 = arith.constant 0 : index
    %3 = vector.load %arg3[%c0, %c0_1, %c0_2] : memref<1x512x3xf32, #tpu.memory_space<vmem>>, vector<1x512x3xf32>
    %4 = vector.shape_cast %3 : vector<1x512x3xf32> to vector<512x3xf32>
    %c0_3 = arith.constant 0 : index
    %c0_4 = arith.constant 0 : index
    %5 = vector.load %arg4[%c0_3, %c0_4] : memref<3x64xf32, #tpu.memory_space<vmem>>, vector<3x64xf32>
    %cst = arith.constant dense<0.000000e+00> : vector<512x64xf32>
    %6 = tpu.matmul %4, %5, %cst {dimension_numbers = #tpu.dot_dimension_numbers<[1], [0], [0], [1], [0, 0, 1, 1], [], []>} : vector<512x3xf32>, vector<3x64xf32>, vector<512x64xf32> -> vector<512x64xf32>
    %c0_5 = arith.constant 0 : index
    %c0_6 = arith.constant 0 : index
    %7 = vector.load %arg5[%c0_5, %c0_6] : memref<1x64xf32, #tpu.memory_space<vmem>>, vector<1x64xf32>
    %8 = vector.broadcast %7 : vector<1x64xf32> to vector<512x64xf32>
    %9 = arith.addf %6, %8 : vector<512x64xf32>
    %cst_7 = arith.constant 0.000000e+00 : f32
    %10 = vector.broadcast %cst_7 : f32 to vector<512x64xf32>
    %11 = arith.maximumf %9, %10 : vector<512x64xf32>
    %12 = arith.truncf %11 : vector<512x64xf32> to vector<512x64xbf16>
    %c0_8 = arith.constant 0 : index
    %c0_9 = arith.constant 0 : index
    %13 = vector.load %arg6[%c0_8, %c0_9] : memref<64x128xbf16, #tpu.memory_space<vmem>>, vector<64x128xbf16>
    %cst_10 = arith.constant dense<0.000000e+00> : vector<512x128xf32>
    %14 = tpu.matmul %12, %13, %cst_10 {dimension_numbers = #tpu.dot_dimension_numbers<[1], [0], [0], [1], [0, 0, 1, 1], [], []>} : vector<512x64xbf16>, vector<64x128xbf16>, vector<512x128xf32> -> vector<512x128xf32>
    %c0_11 = arith.constant 0 : index
    %c0_12 = arith.constant 0 : index
    %15 = vector.load %arg7[%c0_11, %c0_12] : memref<1x128xf32, #tpu.memory_space<vmem>>, vector<1x128xf32>
    %16 = vector.broadcast %15 : vector<1x128xf32> to vector<512x128xf32>
    %17 = arith.addf %14, %16 : vector<512x128xf32>
    %cst_13 = arith.constant 0.000000e+00 : f32
    %18 = vector.broadcast %cst_13 : f32 to vector<512x128xf32>
    %19 = arith.maximumf %17, %18 : vector<512x128xf32>
    %20 = arith.truncf %19 : vector<512x128xf32> to vector<512x128xbf16>
    %c0_14 = arith.constant 0 : index
    %c0_15 = arith.constant 0 : index
    %21 = vector.load %arg8[%c0_14, %c0_15] : memref<128x1024xbf16, #tpu.memory_space<vmem>>, vector<128x1024xbf16>
    %cst_16 = arith.constant dense<0.000000e+00> : vector<512x1024xf32>
    %22 = tpu.matmul %20, %21, %cst_16 {dimension_numbers = #tpu.dot_dimension_numbers<[1], [0], [0], [1], [0, 0, 1, 1], [], []>} : vector<512x128xbf16>, vector<128x1024xbf16>, vector<512x1024xf32> -> vector<512x1024xf32>
    %c0_17 = arith.constant 0 : index
    %c0_18 = arith.constant 0 : index
    %23 = vector.load %arg9[%c0_17, %c0_18] : memref<1x1024xf32, #tpu.memory_space<vmem>>, vector<1x1024xf32>
    %24 = vector.broadcast %23 : vector<1x1024xf32> to vector<512x1024xf32>
    %25 = arith.addf %22, %24 : vector<512x1024xf32>
    %c0_19 = arith.constant 0 : index
    %c0_20 = arith.constant 0 : index
    %26 = vector.load %arg11[%c0_19, %c0_20] : memref<1x1024xf32, #tpu.memory_space<vmem>>, vector<1x1024xf32>
    %cst_21 = arith.constant dense<0xFF800000> : vector<1024xf32>
    %27 = vector.multi_reduction <maximumf>, %25, %cst_21 [0] : vector<512x1024xf32> to vector<1024xf32>
    %28 = vector.shape_cast %27 : vector<1024xf32> to vector<1x1024xf32>
    %29 = arith.maximumf %26, %28 : vector<1x1024xf32>
    %c0_22 = arith.constant 0 : index
    %c0_23 = arith.constant 0 : index
    %30 = vector.load %arg11[%c0_22, %c0_23] : memref<1x1024xf32, #tpu.memory_space<vmem>>, vector<1x1024xf32>
    tpu.vector_store %arg11[%c0_22, %c0_23], %29 {strides = array<i32>} : memref<1x1024xf32, #tpu.memory_space<vmem>>, vector<1x1024xf32>,
    %c0_i32_24 = arith.constant 0 : i32
    %31 = arith.cmpi eq, %arg2, %c0_i32_24 : i32
    %32 = arith.extui %31 : i1 to i32
    %c0_i32_25 = arith.constant 0 : i32
    %33 = arith.cmpi ne, %32, %c0_i32_25 : i32
    scf.if %33 {
      %c0_26 = arith.constant 0 : index
      %c0_27 = arith.constant 0 : index
      %34 = vector.load %arg11[%c0_26, %c0_27] : memref<1x1024xf32, #tpu.memory_space<vmem>>, vector<1x1024xf32>
      %c0_28 = arith.constant 0 : index
      %c0_29 = arith.constant 0 : index
      %c0_30 = arith.constant 0 : index
      %c0_31 = arith.constant 0 : index
      %35 = vector.load %arg10[%c0_28, %c0_29, %c0_30, %c0_31] : memref<1x1x1x1024xf32, #tpu.memory_space<vmem>>, vector<1x1x1x1024xf32>
      %36 = vector.shape_cast %35 : vector<1x1x1x1024xf32> to vector<1x1024xf32>
      %37 = vector.shape_cast %34 : vector<1x1024xf32> to vector<1x1x1x1024xf32>
      tpu.vector_store %arg10[%c0_28, %c0_29, %c0_30, %c0_31], %37 {strides = array<i32>} : memref<1x1x1x1024xf32, #tpu.memory_space<vmem>>, vector<1x1x1x1024xf32>,
    } else {
    }
    return
  }
  func.func @transform_0(%arg0: i32, %arg1: i32, %arg2: i32) -> (i32, i32, i32) {
    %c1_i32 = arith.constant 1 : i32
    %0 = arith.muli %arg1, %c1_i32 : i32
    %1 = arith.addi %0, %arg2 : i32
    %c0_i32 = arith.constant 0 : i32
    %c0_i32_0 = arith.constant 0 : i32
    return %arg0, %1, %c0_i32 : i32, i32, i32
  }
  func.func @transform_1(%arg0: i32, %arg1: i32, %arg2: i32) -> (i32, i32) {
    %c0_i32 = arith.constant 0 : i32
    %c0_i32_0 = arith.constant 0 : i32
    %c0_i32_1 = arith.constant 0 : i32
    return %c0_i32, %c0_i32_0 : i32, i32
  }
  func.func @transform_2(%arg0: i32, %arg1: i32, %arg2: i32) -> (i32, i32) {
    %c0_i32 = arith.constant 0 : i32
    %c0_i32_0 = arith.constant 0 : i32
    %c0_i32_1 = arith.constant 0 : i32
    return %c0_i32, %c0_i32_0 : i32, i32
  }
  func.func @transform_3(%arg0: i32, %arg1: i32, %arg2: i32) -> (i32, i32) {
    %c0_i32 = arith.constant 0 : i32
    %c0_i32_0 = arith.constant 0 : i32
    %c0_i32_1 = arith.constant 0 : i32
    return %c0_i32, %c0_i32_0 : i32, i32
  }
  func.func @transform_4(%arg0: i32, %arg1: i32, %arg2: i32) -> (i32, i32) {
    %c0_i32 = arith.constant 0 : i32
    %c0_i32_0 = arith.constant 0 : i32
    %c0_i32_1 = arith.constant 0 : i32
    return %c0_i32, %c0_i32_0 : i32, i32
  }
  func.func @transform_5(%arg0: i32, %arg1: i32, %arg2: i32) -> (i32, i32) {
    %c0_i32 = arith.constant 0 : i32
    %c0_i32_0 = arith.constant 0 : i32
    %c0_i32_1 = arith.constant 0 : i32
    return %c0_i32, %c0_i32_0 : i32, i32
  }
  func.func @transform_6(%arg0: i32, %arg1: i32, %arg2: i32) -> (i32, i32) {
    %c0_i32 = arith.constant 0 : i32
    %c0_i32_0 = arith.constant 0 : i32
    %c0_i32_1 = arith.constant 0 : i32
    return %c0_i32, %c0_i32_0 : i32, i32
  }
  func.func @transform_7(%arg0: i32, %arg1: i32, %arg2: i32) -> (i32, i32, i32, i32) {
    %c0_i32 = arith.constant 0 : i32
    %c0_i32_0 = arith.constant 0 : i32
    %c0_i32_1 = arith.constant 0 : i32
    return %arg0, %arg1, %c0_i32, %c0_i32_0 : i32, i32, i32, i32
  }
}

</mosaic_0001>

<llo_original>
// kernel: tpu_custom_call.1
$region0: #{tpu_custom_call.1}
  #allocation0 [shape = 'u32[]', space=smem, size = 0x4, offset = 0x4, fixed_abs, tag = 'smem constant byte address 0x4 - core index']
  #allocation1 [shape = 'u32[144,128]{1,0:T(1,128)}', space=vmem, size = 0x12000, scoped, tag = 'internal scratch']
  #allocation2 [shape = 'f32[1,1024]{1,0:T(1,128)}', space=vmem, size = 0x1000, scoped, tag = 'scratch operand']
  %s0 = inlined_call_operand.vmem [shape: f32[2,1024,3], index: 0, kind: input, shape index: {}]
  %s1 = inlined_call_operand.vmem [shape: f32[3,64], index: 1, kind: input, shape index: {}]
  %s2 = inlined_call_operand.vmem [shape: f32[1,64], index: 2, kind: input, shape index: {}]
  %s3 = inlined_call_operand.vmem [shape: bf16[64,128], index: 3, kind: input, shape index: {}]
  %s4 = inlined_call_operand.vmem [shape: f32[1,128], index: 4, kind: input, shape index: {}]
  %s5 = inlined_call_operand.vmem [shape: bf16[128,1024], index: 5, kind: input, shape index: {}]
  %s6 = inlined_call_operand.vmem [shape: f32[1,1024], index: 6, kind: input, shape index: {}]
  %s7 = inlined_call_operand.hbm [shape: f32[2,2,1,1024], index: 7, kind: output, shape index: {}]
  %s8 = sld [smem:[#allocation0]]
  $region69: #{tpu_custom_call.1} parent=0
    _
  %s10 = ssub.s32 1, %s8
  %s11 = scalar_select 0, %s10, %s8
  $region1: #{tpu_custom_call.1} parent=0
    #allocation3 [shape = 'u8[8192]{0}', space=vmem, size = 0x2000, scoped, tag = 'output window, operand 0']
    #allocation4 [shape = 's32[2]{0}', space=sflag, size = 0x8, scoped, tag = 'scoped memory for tpu_custom_call.1']
    %12 = vsyncpa [#allocation4], 0
    %s13 = scalar_lea.sflag [#allocation4], 1
    %14 = vsyncpa %s13, 0
    loop: start=0, step=1, limit=6
    $region2: #{tpu_custom_call.1} parent=1 // loop_pre_header
      _
    $region3: #{tpu_custom_call.1} parent=1 // loop_header
      %s16 = sphi 0, %s20
      %p17 = scmp.ge.s32.totalorder %s16, 6
      %s23 = sphi 0, %s42
      %s24 = sphi 0, %s38
      %s25 = sphi 0, %s34
      %s26 = sphi 0, %s23
      %s27 = sphi 0, %s24
      %s28 = sphi 0, %s25
      %s29 = sphi 0, %s26
      %s30 = sphi 0, %s27
      %s31 = sphi 0, %s28
      %s49 = sphi 0, %s51
      %s52 = sphi 0, %s49
      %s53 = sphi 0, %s52
      %s69 = sphi 0, %s53
      %s73 = sphi 0, %s73
      %s75 = sphi 0, %s73
      %s76 = sphi 0, %s75
      %s90 = sphi 0, %s76
      %s94 = sphi 0, %s94
      %s96 = sphi 0, %s94
      %s97 = sphi 0, %s96
      %s111 = sphi 0, %s97
      %s115 = sphi 0, %s115
      %s117 = sphi 0, %s115
      %s118 = sphi 0, %s117
      %s132 = sphi 0, %s118
      %s136 = sphi 0, %s136
      %s138 = sphi 0, %s136
      %s139 = sphi 0, %s138
      %s153 = sphi 0, %s139
      %s157 = sphi 0, %s157
      %s159 = sphi 0, %s157
      %s160 = sphi 0, %s159
      %s174 = sphi 0, %s160
      %s178 = sphi 0, %s178
      %s180 = sphi 0, %s178
      %s181 = sphi 0, %s180
      %s195 = sphi 0, %s181
      %s203 = sphi 0, %s205
      %s206 = sphi 0, %s203
      %s207 = sphi 0, %s206
      %s223 = sphi 0, %s207
    $region4: #{tpu_custom_call.1} parent=1 // loop_header_branch
      %19 = sbr.rel (%p17) target = $region8
    $region5: #{tpu_custom_call.1} parent=1 // loop_body
      %s21 = ssub.s32 %s16, 1
      %s22 = ssub.s32 %s16, 2
      %s32 = sadd.s32 1, %s25
      %p33 = scmp.ge.s32.totalorder %s32, 1
      %s34 = scalar_select %p33, 0, %s32
      %s35 = sadd.s32 1, %s24
      %s36 = scalar_select %p33, %s35, %s24
      %p37 = scmp.ge.s32.totalorder %s36, 2
      %s38 = scalar_select %p37, 0, %s36
      %s39 = sadd.s32 1, %s23
      %s40 = scalar_select %p37, %s39, %s23
      %p41 = scmp.ge.s32.totalorder %s40, 2
      %s42 = scalar_select %p41, 0, %s40
      %s43 = sadd.s32 %s24, %s25
      %s44 = sadd.s32 %s38, %s34
      %s45 = ssub.s32 %s23, %s42
      %s46 = ssub.s32 %s43, %s44
      %s47 = sor.u32 %s45, %s46
      %p48 = scmp.eq.s32.totalorder %s47, 0
      %s50 = sadd.s32 %s49, 1
      %s51 = scalar_select %p48, %s49, %s50
      %p54 = pneg %p48
      %p55 = scmp.eq.s32.totalorder %s16, 3
      %p56 = por %p54, %p55
      %p57 = scmp.ne.s32.totalorder %s49, %s52
      %p58 = scmp.eq.s32.totalorder %s16, 0
      %p59 = por %p57, %p58
      %p60 = scmp.ne.s32.totalorder %s49, %s52
      %p61 = scmp.eq.s32.totalorder %s21, 3
      %p62 = por %p60, %p61
      %p63 = scmp.ne.s32.totalorder %s52, %s53
      %p64 = scmp.eq.s32.totalorder %s21, 0
      %p65 = por %p63, %p64
      %p66 = scmp.ne.s32.totalorder %s52, %s53
      %p67 = scmp.eq.s32.totalorder %s22, 3
      %p68 = por %p66, %p67
      %p70 = scmp.ne.s32.totalorder %s53, %s69
      %p71 = scmp.eq.s32.totalorder %s22, 0
      %p72 = por %p70, %p71
      %s74 = sadd.s32 %s73, 1
      %p77 = scmp.eq.s32.totalorder %s16, 3
      %p78 = scmp.ne.s32.totalorder %s73, %s75
      %p79 = scmp.eq.s32.totalorder %s16, 0
      %p80 = por %p78, %p79
      %p81 = scmp.ne.s32.totalorder %s73, %s75
      %p82 = scmp.eq.s32.totalorder %s21, 3
      %p83 = por %p81, %p82
      %p84 = scmp.ne.s32.totalorder %s75, %s76
      %p85 = scmp.eq.s32.totalorder %s21, 0
      %p86 = por %p84, %p85
      %p87 = scmp.ne.s32.totalorder %s75, %s76
      %p88 = scmp.eq.s32.totalorder %s22, 3
      %p89 = por %p87, %p88
      %p91 = scmp.ne.s32.totalorder %s76, %s90
      %p92 = scmp.eq.s32.totalorder %s22, 0
      %p93 = por %p91, %p92
      %s95 = sadd.s32 %s94, 1
      %p98 = scmp.eq.s32.totalorder %s16, 3
      %p99 = scmp.ne.s32.totalorder %s94, %s96
      %p100 = scmp.eq.s32.totalorder %s16, 0
      %p101 = por %p99, %p100
      %p102 = scmp.ne.s32.totalorder %s94, %s96
      %p103 = scmp.eq.s32.totalorder %s21, 3
      %p104 = por %p102, %p103
      %p105 = scmp.ne.s32.totalorder %s96, %s97
      %p106 = scmp.eq.s32.totalorder %s21, 0
      %p107 = por %p105, %p106
      %p108 = scmp.ne.s32.totalorder %s96, %s97
      %p109 = scmp.eq.s32.totalorder %s22, 3
      %p110 = por %p108, %p109
      %p112 = scmp.ne.s32.totalorder %s97, %s111
      %p113 = scmp.eq.s32.totalorder %s22, 0
      %p114 = por %p112, %p113
      %s116 = sadd.s32 %s115, 1
      %p119 = scmp.eq.s32.totalorder %s16, 3
      %p120 = scmp.ne.s32.totalorder %s115, %s117
      %p121 = scmp.eq.s32.totalorder %s16, 0
      %p122 = por %p120, %p121
      %p123 = scmp.ne.s32.totalorder %s115, %s117
      %p124 = scmp.eq.s32.totalorder %s21, 3
      %p125 = por %p123, %p124
      %p126 = scmp.ne.s32.totalorder %s117, %s118
      %p127 = scmp.eq.s32.totalorder %s21, 0
      %p128 = por %p126, %p127
      %p129 = scmp.ne.s32.totalorder %s117, %s118
      %p130 = scmp.eq.s32.totalorder %s22, 3
      %p131 = por %p129, %p130
      %p133 = scmp.ne.s32.totalorder %s118, %s132
      %p134 = scmp.eq.s32.totalorder %s22, 0
      %p135 = por %p133, %p134
      %s137 = sadd.s32 %s136, 1
      %p140 = scmp.eq.s32.totalorder %s16, 3
      %p141 = scmp.ne.s32.totalorder %s136, %s138
      %p142 = scmp.eq.s32.totalorder %s16, 0
      %p143 = por %p141, %p142
      %p144 = scmp.ne.s32.totalorder %s136, %s138
      %p145 = scmp.eq.s32.totalorder %s21, 3
      %p146 = por %p144, %p145
      %p147 = scmp.ne.s32.totalorder %s138, %s139
      %p148 = scmp.eq.s32.totalorder %s21, 0
      %p149 = por %p147, %p148
      %p150 = scmp.ne.s32.totalorder %s138, %s139
      %p151 = scmp.eq.s32.totalorder %s22, 3
      %p152 = por %p150, %p151
      %p154 = scmp.ne.s32.totalorder %s139, %s153
      %p155 = scmp.eq.s32.totalorder %s22, 0
      %p156 = por %p154, %p155
      %s158 = sadd.s32 %s157, 1
      %p161 = scmp.eq.s32.totalorder %s16, 3
      %p162 = scmp.ne.s32.totalorder %s157, %s159
      %p163 = scmp.eq.s32.totalorder %s16, 0
      %p164 = por %p162, %p163
      %p165 = scmp.ne.s32.totalorder %s157, %s159
      %p166 = scmp.eq.s32.totalorder %s21, 3
      %p167 = por %p165, %p166
      %p168 = scmp.ne.s32.totalorder %s159, %s160
      %p169 = scmp.eq.s32.totalorder %s21, 0
      %p170 = por %p168, %p169
      %p171 = scmp.ne.s32.totalorder %s159, %s160
      %p172 = scmp.eq.s32.totalorder %s22, 3
      %p173 = por %p171, %p172
      %p175 = scmp.ne.s32.totalorder %s160, %s174
      %p176 = scmp.eq.s32.totalorder %s22, 0
      %p177 = por %p175, %p176
      %s179 = sadd.s32 %s178, 1
      %p182 = scmp.eq.s32.totalorder %s16, 3
      %p183 = scmp.ne.s32.totalorder %s178, %s180
      %p184 = scmp.eq.s32.totalorder %s16, 0
      %p185 = por %p183, %p184
      %p186 = scmp.ne.s32.totalorder %s178, %s180
      %p187 = scmp.eq.s32.totalorder %s21, 3
      %p188 = por %p186, %p187
      %p189 = scmp.ne.s32.totalorder %s180, %s181
      %p190 = scmp.eq.s32.totalorder %s21, 0
      %p191 = por %p189, %p190
      %p192 = scmp.ne.s32.totalorder %s180, %s181
      %p193 = scmp.eq.s32.totalorder %s22, 3
      %p194 = por %p192, %p193
      %p196 = scmp.ne.s32.totalorder %s181, %s195
      %p197 = scmp.eq.s32.totalorder %s22, 0
      %p198 = por %p196, %p197
      %s199 = ssub.s32 %s23, %s42
      %s200 = ssub.s32 %s24, %s38
      %s201 = sor.u32 %s199, %s200
      %p202 = scmp.eq.s32.totalorder %s201, 0
      %s204 = sadd.s32 %s203, 1
      %s205 = scalar_select %p202, %s203, %s204
      %p208 = pneg %p202
      %p209 = scmp.eq.s32.totalorder %s16, 3
      %p210 = por %p208, %p209
      %p211 = scmp.ne.s32.totalorder %s203, %s206
      %p212 = scmp.eq.s32.totalorder %s16, 0
      %p213 = por %p211, %p212
      %p214 = scmp.ne.s32.totalorder %s203, %s206
      %p215 = scmp.eq.s32.totalorder %s21, 3
      %p216 = por %p214, %p215
      %p217 = scmp.ne.s32.totalorder %s206, %s207
      %p218 = scmp.eq.s32.totalorder %s21, 0
      %p219 = por %p217, %p218
      %p220 = scmp.ne.s32.totalorder %s206, %s207
      %p221 = scmp.eq.s32.totalorder %s22, 3
      %p222 = por %p220, %p221
      %p224 = scmp.ne.s32.totalorder %s207, %s223
      %p225 = scmp.eq.s32.totalorder %s22, 0
      %p226 = por %p224, %p225
      %p227 = scmp.le.s32.totalorder 1, %s16
      %p228 = scmp.lt.s32.totalorder %s16, 5
      %p229 = pnand %p227, %p228
      %p230 = pneg %p229
      // Predicated region
      $region9: #{tpu_custom_call.1} parent=5 // pred_check
        _
      $region10: #{tpu_custom_call.1} parent=5 // pred_check_branch
        %232 = sbr.rel (%p229) target = $region12
      $region11: #{tpu_custom_call.1} parent=5 // pred_region
        %s233 = ssub.s32 %s16, 1
        // Predicated region
        $region13: #{tpu_custom_call.1} parent=11 // pred_check
          %p234 = pneg %p86
        $region14: #{tpu_custom_call.1} parent=11 // pred_check_branch
          %236 = sbr.rel (%p234) target = $region16
        $region15: #{tpu_custom_call.1} parent=11 // pred_region
          _
        $region16: #{tpu_custom_call.1} parent=11 // pred_fallthru
          _
        // Predicated region
        $region17: #{tpu_custom_call.1} parent=11 // pred_check
          %p237 = pneg %p107
        $region18: #{tpu_custom_call.1} parent=11 // pred_check_branch
          %239 = sbr.rel (%p237) target = $region20
        $region19: #{tpu_custom_call.1} parent=11 // pred_region
          _
        $region20: #{tpu_custom_call.1} parent=11 // pred_fallthru
          _
        // Predicated region
        $region21: #{tpu_custom_call.1} parent=11 // pred_check
          %p240 = pneg %p128
        $region22: #{tpu_custom_call.1} parent=11 // pred_check_branch
          %242 = sbr.rel (%p240) target = $region24
        $region23: #{tpu_custom_call.1} parent=11 // pred_region
          _
        $region24: #{tpu_custom_call.1} parent=11 // pred_fallthru
          _
        // Predicated region
        $region25: #{tpu_custom_call.1} parent=11 // pred_check
          %p243 = pneg %p149
        $region26: #{tpu_custom_call.1} parent=11 // pred_check_branch
          %245 = sbr.rel (%p243) target = $region28
        $region27: #{tpu_custom_call.1} parent=11 // pred_region
          _
        $region28: #{tpu_custom_call.1} parent=11 // pred_fallthru
          _
        // Predicated region
        $region29: #{tpu_custom_call.1} parent=11 // pred_check
          %p246 = pneg %p170
        $region30: #{tpu_custom_call.1} parent=11 // pred_check_branch
          %248 = sbr.rel (%p246) target = $region32
        $region31: #{tpu_custom_call.1} parent=11 // pred_region
          _
        $region32: #{tpu_custom_call.1} parent=11 // pred_fallthru
          _
        // Predicated region
        $region33: #{tpu_custom_call.1} parent=11 // pred_check
          %p249 = pneg %p191
        $region34: #{tpu_custom_call.1} parent=11 // pred_check_branch
          %251 = sbr.rel (%p249) target = $region36
        $region35: #{tpu_custom_call.1} parent=11 // pred_region
          _
        $region36: #{tpu_custom_call.1} parent=11 // pred_fallthru
          _
      $region12: #{tpu_custom_call.1} parent=5 // pred_fallthru
        _
      %p252 = scmp.lt.s32.totalorder %s16, 4
      // Predicated region
      $region37: #{tpu_custom_call.1} parent=5 // pred_check
        %p253 = pneg %p252
      $region38: #{tpu_custom_call.1} parent=5 // pred_check_branch
        %255 = sbr.rel (%p253) target = $region40
      $region39: #{tpu_custom_call.1} parent=5 // pred_region
        // Predicated region
        $region41: #{tpu_custom_call.1} parent=39 // pred_check
          %p256 = pneg %p59
        $region42: #{tpu_custom_call.1} parent=39 // pred_check_branch
          %258 = sbr.rel (%p256) target = $region44
        $region43: #{tpu_custom_call.1} parent=39 // pred_region
          %s259 = sadd.s32 %s24, %s25
          %s260 = smul.u32 64, %s259
          %p261 = scmp.lt.s32.totalorder %s23, 1
          %s262 = scalar_select %p261, %s23, 1
          %p263 = scmp.lt.s32.totalorder %s260, 127
          %s264 = scalar_select %p263, %s260, 127
          %s265 = smul.addr %s262, 128
          %s266 = sadd.s32 %s264, %s265
          %s267 = smul.addr %s266, 8
          %s268 = scalar_lea.vmem %s0, %s267
          %s269 = sadd.s32 %s24, %s25
          %s270 = smul.u32 64, %s269
        $region44: #{tpu_custom_call.1} parent=39 // pred_fallthru
          _
      $region40: #{tpu_custom_call.1} parent=5 // pred_fallthru
        _
      %p271 = scmp.le.s32.totalorder 1, %s16
      %p272 = scmp.lt.s32.totalorder %s16, 5
      %p273 = pnand %p271, %p272
      %p274 = pneg %p273
      // Predicated region
      $region45: #{tpu_custom_call.1} parent=5 // pred_check
        _
      $region46: #{tpu_custom_call.1} parent=5 // pred_check_branch
        %276 = sbr.rel (%p273) target = $region48
      $region47: #{tpu_custom_call.1} parent=5 // pred_region
        %s277 = ssub.s32 %s16, 1
        %s278 = sadd.s32 %s27, %s28
        %s279 = smul.u32 64, %s278
        %p280 = scmp.lt.s32.totalorder %s26, 1
        %s281 = scalar_select %p280, %s26, 1
        %p282 = scmp.lt.s32.totalorder %s279, 127
        %s283 = scalar_select %p282, %s279, 127
        %s284 = smul.addr %s281, 128
        %s285 = sadd.s32 %s283, %s284
        %s286 = smul.addr %s285, 8
        %s287 = scalar_lea.vmem %s0, %s286
        %p288 = pneg %p65
        %p289 = pneg %p62
        %p290 = pneg %p86
        %p291 = pneg %p83
        %p292 = pneg %p107
        %p293 = pneg %p104
        %p294 = pneg %p128
        %p295 = pneg %p125
        %p296 = pneg %p149
        %p297 = pneg %p146
        %p298 = pneg %p170
        %p299 = pneg %p167
        %p300 = pneg %p191
        %p301 = pneg %p188
        %p302 = pneg %p219
        %p303 = pneg %p216
        %s304 = sand.u32 %s206, 1
        %s305 = scalar_lea.sflag [#allocation4], %s304
        %s306 = sand.u32 %s206, 1
        %s307 = smul.addr %s306, 8
        %s308 = scalar_lea.vmem [#allocation3], %s307
        %s309 = sadd.s32 %s27, %s28
        %s310 = smul.u32 64, %s309
        %p311 = scmp.lt.s32.totalorder %s26, 1
        %s312 = scalar_select %p311, %s26, 1
        %p313 = scmp.lt.s32.totalorder %s310, 127
        %s314 = scalar_select %p313, %s310, 127
        %s315 = smul.addr %s312, 128
        %s316 = sadd.s32 %s314, %s315
        %s317 = smul.addr %s316, 8
        %s318 = scalar_lea.vmem %s0, %s317
        %s319 = sadd.s32 %s27, %s28
        %s320 = smul.u32 64, %s319
        %p322 = scmp.eq.s32.totalorder %s28, 0
        // Predicated region
        $region49: #{tpu_custom_call.1} parent=47 // pred_check
          %p323 = pneg %p322
        $region50: #{tpu_custom_call.1} parent=47 // pred_check_branch
          %325 = sbr.rel (%p323) target = $region52
        $region51: #{tpu_custom_call.1} parent=47 // pred_region
          %326 = vst [vmem:[#allocation2] sm:$0xff] -inf
        $region52: #{tpu_custom_call.1} parent=47 // pred_fallthru
          _
        %v327 = vld [vmem:[%s318] sm:$0xff]
        %v328 = vld [vmem:[%s318 + $0x8] sm:$0xff]
        %v329 = vld [vmem:[%s318 + $0x10] sm:$0xff]
        %v330 = vld [vmem:[%s318 + $0x18] sm:$0xff]
        %v331 = vld [vmem:[%s318 + $0x20] sm:$0xff]
        %v332 = vld [vmem:[%s318 + $0x28] sm:$0xff]
        %v333 = vld [vmem:[%s318 + $0x30] sm:$0xff]
        %v334 = vld [vmem:[%s318 + $0x38] sm:$0xff]
        %v335 = vld [vmem:[%s318 + $0x40] sm:$0xff]
        %v336 = vld [vmem:[%s318 + $0x48] sm:$0xff]
        %v337 = vld [vmem:[%s318 + $0x50] sm:$0xff]
        %v338 = vld [vmem:[%s318 + $0x58] sm:$0xff]
        %v339 = vld [vmem:[%s318 + $0x60] sm:$0xff]
        %v340 = vld [vmem:[%s318 + $0x68] sm:$0xff]
        %v341 = vld [vmem:[%s318 + $0x70] sm:$0xff]
        %v342 = vld [vmem:[%s318 + $0x78] sm:$0xff]
        %v343 = vld [vmem:[%s318 + $0x80] sm:$0xff]
        %v344 = vld [vmem:[%s318 + $0x88] sm:$0xff]
        %v345 = vld [vmem:[%s318 + $0x90] sm:$0xff]
        %v346 = vld [vmem:[%s318 + $0x98] sm:$0xff]
        %v347 = vld [vmem:[%s318 + $0xa0] sm:$0xff]
        %v348 = vld [vmem:[%s318 + $0xa8] sm:$0xff]
        %v349 = vld [vmem:[%s318 + $0xb0] sm:$0xff]
        %v350 = vld [vmem:[%s318 + $0xb8] sm:$0xff]
        %v351 = vld [vmem:[%s318 + $0xc0] sm:$0xff]
        %v352 = vld [vmem:[%s318 + $0xc8] sm:$0xff]
        %v353 = vld [vmem:[%s318 + $0xd0] sm:$0xff]
        %v354 = vld [vmem:[%s318 + $0xd8] sm:$0xff]
        %v355 = vld [vmem:[%s318 + $0xe0] sm:$0xff]
        %v356 = vld [vmem:[%s318 + $0xe8] sm:$0xff]
        %v357 = vld [vmem:[%s318 + $0xf0] sm:$0xff]
        %v358 = vld [vmem:[%s318 + $0xf8] sm:$0xff]
        %v359 = vld [vmem:[%s318 + $0x100] sm:$0xff]
        %v360 = vld [vmem:[%s318 + $0x108] sm:$0xff]
        %v361 = vld [vmem:[%s318 + $0x110] sm:$0xff]
        %v362 = vld [vmem:[%s318 + $0x118] sm:$0xff]
        %v363 = vld [vmem:[%s318 + $0x120] sm:$0xff]
        %v364 = vld [vmem:[%s318 + $0x128] sm:$0xff]
        %v365 = vld [vmem:[%s318 + $0x130] sm:$0xff]
        %v366 = vld [vmem:[%s318 + $0x138] sm:$0xff]
        %v367 = vld [vmem:[%s318 + $0x140] sm:$0xff]
        %v368 = vld [vmem:[%s318 + $0x148] sm:$0xff]
        %v369 = vld [vmem:[%s318 + $0x150] sm:$0xff]
        %v370 = vld [vmem:[%s318 + $0x158] sm:$0xff]
        %v371 = vld [vmem:[%s318 + $0x160] sm:$0xff]
        %v372 = vld [vmem:[%s318 + $0x168] sm:$0xff]
        %v373 = vld [vmem:[%s318 + $0x170] sm:$0xff]
        %v374 = vld [vmem:[%s318 + $0x178] sm:$0xff]
        %v375 = vld [vmem:[%s318 + $0x180] sm:$0xff]
        %v376 = vld [vmem:[%s318 + $0x188] sm:$0xff]
        %v377 = vld [vmem:[%s318 + $0x190] sm:$0xff]
        %v378 = vld [vmem:[%s318 + $0x198] sm:$0xff]
        %v379 = vld [vmem:[%s318 + $0x1a0] sm:$0xff]
        %v380 = vld [vmem:[%s318 + $0x1a8] sm:$0xff]
        %v381 = vld [vmem:[%s318 + $0x1b0] sm:$0xff]
        %v382 = vld [vmem:[%s318 + $0x1b8] sm:$0xff]
        %v383 = vld [vmem:[%s318 + $0x1c0] sm:$0xff]
        %v384 = vld [vmem:[%s318 + $0x1c8] sm:$0xff]
        %v385 = vld [vmem:[%s318 + $0x1d0] sm:$0xff]
        %v386 = vld [vmem:[%s318 + $0x1d8] sm:$0xff]
        %v387 = vld [vmem:[%s318 + $0x1e0] sm:$0xff]
        %v388 = vld [vmem:[%s318 + $0x1e8] sm:$0xff]
        %v389 = vld [vmem:[%s318 + $0x1f0] sm:$0xff]
        %v390 = vld [vmem:[%s318 + $0x1f8] sm:$0xff]
        %v391 = vld [vmem:[%s1] sm:$0x7]
        %v392 = vld [vmem:[%s2] sm:$0x1]
        %v394 = vlaneseq
        %v395 = vshrl.u32 %v394, 7
        %v396 = vsub.s32 0, %v395
        %v397 = vrot.slane %v392, %v396
        %vm399 = vcmask 23552
        %v401 = vsel %vm399, %v327, 0
        %v404 = vsel %vm399, %v328, 0
        %v407 = vsel %vm399, %v329, 0
        %v410 = vsel %vm399, %v330, 0
        %v413 = vsel %vm399, %v331, 0
        %v416 = vsel %vm399, %v332, 0
        %v419 = vsel %vm399, %v333, 0
        %v422 = vsel %vm399, %v334, 0
        %v425 = vsel %vm399, %v335, 0
        %v428 = vsel %vm399, %v336, 0
        %v431 = vsel %vm399, %v337, 0
        %v434 = vsel %vm399, %v338, 0
        %v437 = vsel %vm399, %v339, 0
        %v440 = vsel %vm399, %v340, 0
        %v443 = vsel %vm399, %v341, 0
        %v446 = vsel %vm399, %v342, 0
        %v449 = vsel %vm399, %v343, 0
        %v452 = vsel %vm399, %v344, 0
        %v455 = vsel %vm399, %v345, 0
        %v458 = vsel %vm399, %v346, 0
        %v461 = vsel %vm399, %v347, 0
        %v464 = vsel %vm399, %v348, 0
        %v467 = vsel %vm399, %v349, 0
        %v470 = vsel %vm399, %v350, 0
        %v473 = vsel %vm399, %v351, 0
        %v476 = vsel %vm399, %v352, 0
        %v479 = vsel %vm399, %v353, 0
        %v482 = vsel %vm399, %v354, 0
        %v485 = vsel %vm399, %v355, 0
        %v488 = vsel %vm399, %v356, 0
        %v491 = vsel %vm399, %v357, 0
        %v494 = vsel %vm399, %v358, 0
        %v497 = vsel %vm399, %v359, 0
        %v500 = vsel %vm399, %v360, 0
        %v503 = vsel %vm399, %v361, 0
        %v506 = vsel %vm399, %v362, 0
        %v509 = vsel %vm399, %v363, 0
        %v512 = vsel %vm399, %v364, 0
        %v515 = vsel %vm399, %v365, 0
        %v518 = vsel %vm399, %v366, 0
        %v521 = vsel %vm399, %v367, 0
        %v524 = vsel %vm399, %v368, 0
        %v527 = vsel %vm399, %v369, 0
        %v530 = vsel %vm399, %v370, 0
        %v533 = vsel %vm399, %v371, 0
        %v536 = vsel %vm399, %v372, 0
        %v539 = vsel %vm399, %v373, 0
        %v542 = vsel %vm399, %v374, 0
        %v545 = vsel %vm399, %v375, 0
        %v548 = vsel %vm399, %v376, 0
        %v551 = vsel %vm399, %v377, 0
        %v554 = vsel %vm399, %v378, 0
        %v557 = vsel %vm399, %v379, 0
        %v560 = vsel %vm399, %v380, 0
        %v563 = vsel %vm399, %v381, 0
        %v566 = vsel %vm399, %v382, 0
        %v569 = vsel %vm399, %v383, 0
        %v572 = vsel %vm399, %v384, 0
        %v575 = vsel %vm399, %v385, 0
        %v578 = vsel %vm399, %v386, 0
        %v581 = vsel %vm399, %v387, 0
        %v584 = vsel %vm399, %v388, 0
        %v587 = vsel %vm399, %v389, 0
        %v590 = vsel %vm399, %v390, 0
        %vm592 = vcmask 1042432
        %v594 = vsel %vm592, %v391, 0
        %596 = vmatprep.subr.mxu0 0.0
        %597 = vmatpush1.msra.mxu0 %v594
        %598 = vmatprep.subr.mxu0 0.0
        %599 = vmatpush1.msra.mxu0 0.0
        %600 = vmatprep.subr.mxu0 0.0
        %601 = vmatpush1.msra.mxu0 0.0
        %602 = vmatprep.subr.mxu0 0.0
        %603 = vmatpush1.msra.mxu0 0.0
        %604 = vmatprep.subr.mxu0 0.0
        %605 = vmatpush1.msra.mxu0 0.0
        %606 = vmatprep.subr.mxu0 0.0
        %607 = vmatpush1.msra.mxu0 0.0
        %608 = vmatprep.subr.mxu0 0.0
        %609 = vmatpush1.msra.mxu0 0.0
        %610 = vmatprep.subr.mxu0 0.0
        %611 = vmatpush1.msra.mxu0 0.0
        %612 = vmatprep.subr.mxu0 0.0
        %613 = vmatpush1.msra.mxu0 0.0
        %614 = vmatprep.subr.mxu0 0.0
        %615 = vmatpush1.msra.mxu0 0.0
        %616 = vmatprep.subr.mxu0 0.0
        %617 = vmatpush1.msra.mxu0 0.0
        %618 = vmatprep.subr.mxu0 0.0
        %619 = vmatpush1.msra.mxu0 0.0
        %620 = vmatprep.subr.mxu0 0.0
        %621 = vmatpush1.msra.mxu0 0.0
        %622 = vmatprep.subr.mxu0 0.0
        %623 = vmatpush1.msra.mxu0 0.0
        %624 = vmatprep.subr.mxu0 0.0
        %625 = vmatpush1.msra.mxu0 0.0
        %626 = vmatprep.subr.mxu0 0.0
        %627 = vmatpush1.msra.mxu0 0.0
        %628 = vmatprep.subr.mxu0 0.0
        %629 = vmatpush1.msra.mxu0 0.0
        %630 = vmatprep.subr.mxu0 0.0
        %631 = vmatpush1.msra.mxu0 0.0
        %632 = vmatprep.subr.mxu0 0.0
        %633 = vmatpush1.msra.mxu0 0.0
        %634 = vmatprep.subr.mxu0 0.0
        %635 = vmatpush1.msra.mxu0 0.0
        %636 = vmatprep.subr.mxu0 0.0
        %637 = vmatpush1.msra.mxu0 0.0
        %638 = vmatprep.subr.mxu0 0.0
        %639 = vmatpush1.msra.mxu0 0.0
        %640 = vmatprep.subr.mxu0 0.0
        %641 = vmatpush1.msra.mxu0 0.0
        %642 = vmatprep.subr.mxu0 0.0
        %643 = vmatpush1.msra.mxu0 0.0
        %644 = vmatprep.subr.mxu0 0.0
        %645 = vmatpush1.msra.mxu0 0.0
        %646 = vmatprep.subr.mxu0 0.0
        %647 = vmatpush1.msra.mxu0 0.0
        %648 = vmatprep.subr.mxu0 0.0
        %649 = vmatpush1.msra.mxu0 0.0
        %650 = vmatprep.subr.mxu0 0.0
        %651 = vmatpush1.msra.mxu0 0.0
        %652 = vmatprep.subr.mxu0 0.0
        %653 = vmatpush1.msra.mxu0 0.0
        %654 = vmatprep.subr.mxu0 0.0
        %655 = vmatpush1.msra.mxu0 0.0
        %656 = vmatprep.subr.mxu0 0.0
        %657 = vmatpush1.msra.mxu0 0.0
        %658 = vmatprep.subr.mxu0 0.0
        %659 = vmatpush1.msra.mxu0 0.0
        %660 = vmatprep.mubr.f32.mxu0 0.0
        %661 = vmatmul.mubr.f32.gmra.mrb[0].mxu0 %v401
        %v662 = vpop.f32.mrb[0].mxu0
        %v663 = vadd.f32 %v397, %v662
        %v664 = vpop.f32.mrb[0].mxu0
        %665 = vmatprep.mubr.f32.mxu0 0.0
        %666 = vmatmul.mubr.f32.gmra.mrb[0].mxu0 %v404
        %v667 = vpop.f32.mrb[0].mxu0
        %v668 = vadd.f32 %v397, %v667
        %v669 = vpop.f32.mrb[0].mxu0
        %670 = vmatprep.mubr.f32.mxu0 0.0
        %671 = vmatmul.mubr.f32.gmra.mrb[0].mxu0 %v407
        %v672 = vpop.f32.mrb[0].mxu0
        %v673 = vadd.f32 %v397, %v672
        %v674 = vpop.f32.mrb[0].mxu0
        %675 = vmatprep.mubr.f32.mxu0 0.0
        %676 = vmatmul.mubr.f32.gmra.mrb[0].mxu0 %v410
        %v677 = vpop.f32.mrb[0].mxu0
        %v678 = vadd.f32 %v397, %v677
        %v679 = vpop.f32.mrb[0].mxu0
        %680 = vmatprep.mubr.f32.mxu0 0.0
        %681 = vmatmul.mubr.f32.gmra.mrb[0].mxu0 %v413
        %v682 = vpop.f32.mrb[0].mxu0
        %v683 = vadd.f32 %v397, %v682
        %v684 = vpop.f32.mrb[0].mxu0
        %685 = vmatprep.mubr.f32.mxu0 0.0
        %686 = vmatmul.mubr.f32.gmra.mrb[0].mxu0 %v416
        %v687 = vpop.f32.mrb[0].mxu0
        %v688 = vadd.f32 %v397, %v687
        %v689 = vpop.f32.mrb[0].mxu0
        %690 = vmatprep.mubr.f32.mxu0 0.0
        %691 = vmatmul.mubr.f32.gmra.mrb[0].mxu0 %v419
        %v692 = vpop.f32.mrb[0].mxu0
        %v693 = vadd.f32 %v397, %v692
        %v694 = vpop.f32.mrb[0].mxu0
        %695 = vmatprep.mubr.f32.mxu0 0.0
        %696 = vmatmul.mubr.f32.gmra.mrb[0].mxu0 %v422
        %v697 = vpop.f32.mrb[0].mxu0
        %v698 = vadd.f32 %v397, %v697
        %v699 = vpop.f32.mrb[0].mxu0
        %700 = vmatprep.mubr.f32.mxu0 0.0
        %701 = vmatmul.mubr.f32.gmra.mrb[0].mxu0 %v425
        %v702 = vpop.f32.mrb[0].mxu0
        %v703 = vadd.f32 %v397, %v702
        %v704 = vpop.f32.mrb[0].mxu0
        %705 = vmatprep.mubr.f32.mxu0 0.0
        %706 = vmatmul.mubr.f32.gmra.mrb[0].mxu0 %v428
        %v707 = vpop.f32.mrb[0].mxu0
        %v708 = vadd.f32 %v397, %v707
        %v709 = vpop.f32.mrb[0].mxu0
        %710 = vmatprep.mubr.f32.mxu0 0.0
        %711 = vmatmul.mubr.f32.gmra.mrb[0].mxu0 %v431
        %v712 = vpop.f32.mrb[0].mxu0
        %v713 = vadd.f32 %v397, %v712
        %v714 = vpop.f32.mrb[0].mxu0
        %715 = vmatprep.mubr.f32.mxu0 0.0
        %716 = vmatmul.mubr.f32.gmra.mrb[0].mxu0 %v434
        %v717 = vpop.f32.mrb[0].mxu0
        %v718 = vadd.f32 %v397, %v717
        %v719 = vpop.f32.mrb[0].mxu0
        %720 = vmatprep.mubr.f32.mxu0 0.0
        %721 = vmatmul.mubr.f32.gmra.mrb[0].mxu0 %v437
        %v722 = vpop.f32.mrb[0].mxu0
        %v723 = vadd.f32 %v397, %v722
        %v724 = vpop.f32.mrb[0].mxu0
        %725 = vmatprep.mubr.f32.mxu0 0.0
        %726 = vmatmul.mubr.f32.gmra.mrb[0].mxu0 %v440
        %v727 = vpop.f32.mrb[0].mxu0
        %v728 = vadd.f32 %v397, %v727
        %v729 = vpop.f32.mrb[0].mxu0
        %730 = vmatprep.mubr.f32.mxu0 0.0
        %731 = vmatmul.mubr.f32.gmra.mrb[0].mxu0 %v443
        %v732 = vpop.f32.mrb[0].mxu0
        %v733 = vadd.f32 %v397, %v732
        %v734 = vpop.f32.mrb[0].mxu0
        %735 = vmatprep.mubr.f32.mxu0 0.0
        %736 = vmatmul.mubr.f32.gmra.mrb[0].mxu0 %v446
        %v737 = vpop.f32.mrb[0].mxu0
        %v738 = vadd.f32 %v397, %v737
        %v739 = vpop.f32.mrb[0].mxu0
        %740 = vmatprep.mubr.f32.mxu0 0.0
        %741 = vmatmul.mubr.f32.gmra.mrb[0].mxu0 %v449
        %v742 = vpop.f32.mrb[0].mxu0
        %v743 = vadd.f32 %v397, %v742
        %v744 = vpop.f32.mrb[0].mxu0
        %745 = vmatprep.mubr.f32.mxu0 0.0
        %746 = vmatmul.mubr.f32.gmra.mrb[0].mxu0 %v452
        %v747 = vpop.f32.mrb[0].mxu0
        %v748 = vadd.f32 %v397, %v747
        %v749 = vpop.f32.mrb[0].mxu0
        %750 = vmatprep.mubr.f32.mxu0 0.0
        %751 = vmatmul.mubr.f32.gmra.mrb[0].mxu0 %v455
        %v752 = vpop.f32.mrb[0].mxu0
        %v753 = vadd.f32 %v397, %v752
        %v754 = vpop.f32.mrb[0].mxu0
        %755 = vmatprep.mubr.f32.mxu0 0.0
        %756 = vmatmul.mubr.f32.gmra.mrb[0].mxu0 %v458
        %v757 = vpop.f32.mrb[0].mxu0
        %v758 = vadd.f32 %v397, %v757
        %v759 = vpop.f32.mrb[0].mxu0
        %760 = vmatprep.mubr.f32.mxu0 0.0
        %761 = vmatmul.mubr.f32.gmra.mrb[0].mxu0 %v461
        %v762 = vpop.f32.mrb[0].mxu0
        %v763 = vadd.f32 %v397, %v762
        %v764 = vpop.f32.mrb[0].mxu0
        %765 = vmatprep.mubr.f32.mxu0 0.0
        %766 = vmatmul.mubr.f32.gmra.mrb[0].mxu0 %v464
        %v767 = vpop.f32.mrb[0].mxu0
        %v768 = vadd.f32 %v397, %v767
        %v769 = vpop.f32.mrb[0].mxu0
        %770 = vmatprep.mubr.f32.mxu0 0.0
        %771 = vmatmul.mubr.f32.gmra.mrb[0].mxu0 %v467
        %v772 = vpop.f32.mrb[0].mxu0
        %v773 = vadd.f32 %v397, %v772
        %v774 = vpop.f32.mrb[0].mxu0
        %775 = vmatprep.mubr.f32.mxu0 0.0
        %776 = vmatmul.mubr.f32.gmra.mrb[0].mxu0 %v470
        %v777 = vpop.f32.mrb[0].mxu0
        %v778 = vadd.f32 %v397, %v777
        %v779 = vpop.f32.mrb[0].mxu0
        %780 = vmatprep.mubr.f32.mxu0 0.0
        %781 = vmatmul.mubr.f32.gmra.mrb[0].mxu0 %v473
        %v782 = vpop.f32.mrb[0].mxu0
        %v783 = vadd.f32 %v397, %v782
        %v784 = vpop.f32.mrb[0].mxu0
        %785 = vmatprep.mubr.f32.mxu0 0.0
        %786 = vmatmul.mubr.f32.gmra.mrb[0].mxu0 %v476
        %v787 = vpop.f32.mrb[0].mxu0
        %v788 = vadd.f32 %v397, %v787
        %v789 = vpop.f32.mrb[0].mxu0
        %790 = vmatprep.mubr.f32.mxu0 0.0
        %791 = vmatmul.mubr.f32.gmra.mrb[0].mxu0 %v479
        %v792 = vpop.f32.mrb[0].mxu0
        %v793 = vadd.f32 %v397, %v792
        %v794 = vpop.f32.mrb[0].mxu0
        %795 = vmatprep.mubr.f32.mxu0 0.0
        %796 = vmatmul.mubr.f32.gmra.mrb[0].mxu0 %v482
        %v797 = vpop.f32.mrb[0].mxu0
        %v798 = vadd.f32 %v397, %v797
        %v799 = vpop.f32.mrb[0].mxu0
        %800 = vmatprep.mubr.f32.mxu0 0.0
        %801 = vmatmul.mubr.f32.gmra.mrb[0].mxu0 %v485
        %v802 = vpop.f32.mrb[0].mxu0
        %v803 = vadd.f32 %v397, %v802
        %v804 = vpop.f32.mrb[0].mxu0
        %805 = vmatprep.mubr.f32.mxu0 0.0
        %806 = vmatmul.mubr.f32.gmra.mrb[0].mxu0 %v488
        %v807 = vpop.f32.mrb[0].mxu0
        %v808 = vadd.f32 %v397, %v807
        %v809 = vpop.f32.mrb[0].mxu0
        %810 = vmatprep.mubr.f32.mxu0 0.0
        %811 = vmatmul.mubr.f32.gmra.mrb[0].mxu0 %v491
        %v812 = vpop.f32.mrb[0].mxu0
        %v813 = vadd.f32 %v397, %v812
        %v814 = vpop.f32.mrb[0].mxu0
        %815 = vmatprep.mubr.f32.mxu0 0.0
        %816 = vmatmul.mubr.f32.gmra.mrb[0].mxu0 %v494
        %v817 = vpop.f32.mrb[0].mxu0
        %v818 = vadd.f32 %v397, %v817
        %v819 = vpop.f32.mrb[0].mxu0
        %820 = vmatprep.mubr.f32.mxu0 0.0
        %821 = vmatmul.mubr.f32.gmra.mrb[0].mxu0 %v497
        %v822 = vpop.f32.mrb[0].mxu0
        %v823 = vadd.f32 %v397, %v822
        %v824 = vpop.f32.mrb[0].mxu0
        %825 = vmatprep.mubr.f32.mxu0 0.0
        %826 = vmatmul.mubr.f32.gmra.mrb[0].mxu0 %v500
        %v827 = vpop.f32.mrb[0].mxu0
        %v828 = vadd.f32 %v397, %v827
        %v829 = vpop.f32.mrb[0].mxu0
        %830 = vmatprep.mubr.f32.mxu0 0.0
        %831 = vmatmul.mubr.f32.gmra.mrb[0].mxu0 %v503
        %v832 = vpop.f32.mrb[0].mxu0
        %v833 = vadd.f32 %v397, %v832
        %v834 = vpop.f32.mrb[0].mxu0
        %835 = vmatprep.mubr.f32.mxu0 0.0
        %836 = vmatmul.mubr.f32.gmra.mrb[0].mxu0 %v506
        %v837 = vpop.f32.mrb[0].mxu0
        %v838 = vadd.f32 %v397, %v837
        %v839 = vpop.f32.mrb[0].mxu0
        %840 = vmatprep.mubr.f32.mxu0 0.0
        %841 = vmatmul.mubr.f32.gmra.mrb[0].mxu0 %v509
        %v842 = vpop.f32.mrb[0].mxu0
        %v843 = vadd.f32 %v397, %v842
        %v844 = vpop.f32.mrb[0].mxu0
        %845 = vmatprep.mubr.f32.mxu0 0.0
        %846 = vmatmul.mubr.f32.gmra.mrb[0].mxu0 %v512
        %v847 = vpop.f32.mrb[0].mxu0
        %v848 = vadd.f32 %v397, %v847
        %v849 = vpop.f32.mrb[0].mxu0
        %850 = vmatprep.mubr.f32.mxu0 0.0
        %851 = vmatmul.mubr.f32.gmra.mrb[0].mxu0 %v515
        %v852 = vpop.f32.mrb[0].mxu0
        %v853 = vadd.f32 %v397, %v852
        %v854 = vpop.f32.mrb[0].mxu0
        %855 = vmatprep.mubr.f32.mxu0 0.0
        %856 = vmatmul.mubr.f32.gmra.mrb[0].mxu0 %v518
        %v857 = vpop.f32.mrb[0].mxu0
        %v858 = vadd.f32 %v397, %v857
        %v859 = vpop.f32.mrb[0].mxu0
        %860 = vmatprep.mubr.f32.mxu0 0.0
        %861 = vmatmul.mubr.f32.gmra.mrb[0].mxu0 %v521
        %v862 = vpop.f32.mrb[0].mxu0
        %v863 = vadd.f32 %v397, %v862
        %v864 = vpop.f32.mrb[0].mxu0
        %865 = vmatprep.mubr.f32.mxu0 0.0
        %866 = vmatmul.mubr.f32.gmra.mrb[0].mxu0 %v524
        %v867 = vpop.f32.mrb[0].mxu0
        %v868 = vadd.f32 %v397, %v867
        %v869 = vpop.f32.mrb[0].mxu0
        %870 = vmatprep.mubr.f32.mxu0 0.0
        %871 = vmatmul.mubr.f32.gmra.mrb[0].mxu0 %v527
        %v872 = vpop.f32.mrb[0].mxu0
        %v873 = vadd.f32 %v397, %v872
        %v874 = vpop.f32.mrb[0].mxu0
        %875 = vmatprep.mubr.f32.mxu0 0.0
        %876 = vmatmul.mubr.f32.gmra.mrb[0].mxu0 %v530
        %v877 = vpop.f32.mrb[0].mxu0
        %v878 = vadd.f32 %v397, %v877
        %v879 = vpop.f32.mrb[0].mxu0
        %880 = vmatprep.mubr.f32.mxu0 0.0
        %881 = vmatmul.mubr.f32.gmra.mrb[0].mxu0 %v533
        %v882 = vpop.f32.mrb[0].mxu0
        %v883 = vadd.f32 %v397, %v882
        %v884 = vpop.f32.mrb[0].mxu0
        %885 = vmatprep.mubr.f32.mxu0 0.0
        %886 = vmatmul.mubr.f32.gmra.mrb[0].mxu0 %v536
        %v887 = vpop.f32.mrb[0].mxu0
        %v888 = vadd.f32 %v397, %v887
        %v889 = vpop.f32.mrb[0].mxu0
        %890 = vmatprep.mubr.f32.mxu0 0.0
        %891 = vmatmul.mubr.f32.gmra.mrb[0].mxu0 %v539
        %v892 = vpop.f32.mrb[0].mxu0
        %v893 = vadd.f32 %v397, %v892
        %v894 = vpop.f32.mrb[0].mxu0
        %895 = vmatprep.mubr.f32.mxu0 0.0
        %896 = vmatmul.mubr.f32.gmra.mrb[0].mxu0 %v542
        %v897 = vpop.f32.mrb[0].mxu0
        %v898 = vadd.f32 %v397, %v897
        %v899 = vpop.f32.mrb[0].mxu0
        %900 = vmatprep.mubr.f32.mxu0 0.0
        %901 = vmatmul.mubr.f32.gmra.mrb[0].mxu0 %v545
        %v902 = vpop.f32.mrb[0].mxu0
        %v903 = vadd.f32 %v397, %v902
        %v904 = vpop.f32.mrb[0].mxu0
        %905 = vmatprep.mubr.f32.mxu0 0.0
        %906 = vmatmul.mubr.f32.gmra.mrb[0].mxu0 %v548
        %v907 = vpop.f32.mrb[0].mxu0
        %v908 = vadd.f32 %v397, %v907
        %v909 = vpop.f32.mrb[0].mxu0
        %910 = vmatprep.mubr.f32.mxu0 0.0
        %911 = vmatmul.mubr.f32.gmra.mrb[0].mxu0 %v551
        %v912 = vpop.f32.mrb[0].mxu0
        %v913 = vadd.f32 %v397, %v912
        %v914 = vpop.f32.mrb[0].mxu0
        %915 = vmatprep.mubr.f32.mxu0 0.0
        %916 = vmatmul.mubr.f32.gmra.mrb[0].mxu0 %v554
        %v917 = vpop.f32.mrb[0].mxu0
        %v918 = vadd.f32 %v397, %v917
        %v919 = vpop.f32.mrb[0].mxu0
        %920 = vmatprep.mubr.f32.mxu0 0.0
        %921 = vmatmul.mubr.f32.gmra.mrb[0].mxu0 %v557
        %v922 = vpop.f32.mrb[0].mxu0
        %v923 = vadd.f32 %v397, %v922
        %v924 = vpop.f32.mrb[0].mxu0
        %925 = vmatprep.mubr.f32.mxu0 0.0
        %926 = vmatmul.mubr.f32.gmra.mrb[0].mxu0 %v560
        %v927 = vpop.f32.mrb[0].mxu0
        %v928 = vadd.f32 %v397, %v927
        %v929 = vpop.f32.mrb[0].mxu0
        %930 = vmatprep.mubr.f32.mxu0 0.0
        %931 = vmatmul.mubr.f32.gmra.mrb[0].mxu0 %v563
        %v932 = vpop.f32.mrb[0].mxu0
        %v933 = vadd.f32 %v397, %v932
        %v934 = vpop.f32.mrb[0].mxu0
        %935 = vmatprep.mubr.f32.mxu0 0.0
        %936 = vmatmul.mubr.f32.gmra.mrb[0].mxu0 %v566
        %v937 = vpop.f32.mrb[0].mxu0
        %v938 = vadd.f32 %v397, %v937
        %v939 = vpop.f32.mrb[0].mxu0
        %940 = vmatprep.mubr.f32.mxu0 0.0
        %941 = vmatmul.mubr.f32.gmra.mrb[0].mxu0 %v569
        %v942 = vpop.f32.mrb[0].mxu0
        %v943 = vadd.f32 %v397, %v942
        %v944 = vpop.f32.mrb[0].mxu0
        %945 = vmatprep.mubr.f32.mxu0 0.0
        %946 = vmatmul.mubr.f32.gmra.mrb[0].mxu0 %v572
        %v947 = vpop.f32.mrb[0].mxu0
        %v948 = vadd.f32 %v397, %v947
        %v949 = vpop.f32.mrb[0].mxu0
        %950 = vmatprep.mubr.f32.mxu0 0.0
        %951 = vmatmul.mubr.f32.gmra.mrb[0].mxu0 %v575
        %v952 = vpop.f32.mrb[0].mxu0
        %v953 = vadd.f32 %v397, %v952
        %v954 = vpop.f32.mrb[0].mxu0
        %955 = vmatprep.mubr.f32.mxu0 0.0
        %956 = vmatmul.mubr.f32.gmra.mrb[0].mxu0 %v578
        %v957 = vpop.f32.mrb[0].mxu0
        %v958 = vadd.f32 %v397, %v957
        %v959 = vpop.f32.mrb[0].mxu0
        %960 = vmatprep.mubr.f32.mxu0 0.0
        %961 = vmatmul.mubr.f32.gmra.mrb[0].mxu0 %v581
        %v962 = vpop.f32.mrb[0].mxu0
        %v963 = vadd.f32 %v397, %v962
        %v964 = vpop.f32.mrb[0].mxu0
        %965 = vmatprep.mubr.f32.mxu0 0.0
        %966 = vmatmul.mubr.f32.gmra.mrb[0].mxu0 %v584
        %v967 = vpop.f32.mrb[0].mxu0
        %v968 = vadd.f32 %v397, %v967
        %v969 = vpop.f32.mrb[0].mxu0
        %970 = vmatprep.mubr.f32.mxu0 0.0
        %971 = vmatmul.mubr.f32.gmra.mrb[0].mxu0 %v587
        %v972 = vpop.f32.mrb[0].mxu0
        %v973 = vadd.f32 %v397, %v972
        %v974 = vpop.f32.mrb[0].mxu0
        %975 = vmatprep.mubr.f32.mxu0 0.0
        %976 = vmatmul.mubr.f32.gmra.mrb[0].mxu0 %v590
        %v977 = vpop.f32.mrb[0].mxu0
        %v978 = vadd.f32 %v397, %v977
        %v979 = vpop.f32.mrb[0].mxu0
        %980 = vdwg.mxu0
        %v981 = vmax.f32 %v663, 0.0
        %v982 = vmax.f32 %v668, 0.0
        %v983 = vmax.f32 %v673, 0.0
        %v984 = vmax.f32 %v678, 0.0
        %v985 = vmax.f32 %v683, 0.0
        %v986 = vmax.f32 %v688, 0.0
        %v987 = vmax.f32 %v693, 0.0
        %v988 = vmax.f32 %v698, 0.0
        %v989 = vmax.f32 %v703, 0.0
        %v990 = vmax.f32 %v708, 0.0
        %v991 = vmax.f32 %v713, 0.0
        %v992 = vmax.f32 %v718, 0.0
        %v993 = vmax.f32 %v723, 0.0
        %v994 = vmax.f32 %v728, 0.0
        %v995 = vmax.f32 %v733, 0.0
        %v996 = vmax.f32 %v738, 0.0
        %v997 = vmax.f32 %v743, 0.0
        %v998 = vmax.f32 %v748, 0.0
        %v999 = vmax.f32 %v753, 0.0
        %v1000 = vmax.f32 %v758, 0.0
        %v1001 = vmax.f32 %v763, 0.0
        %v1002 = vmax.f32 %v768, 0.0
        %v1003 = vmax.f32 %v773, 0.0
        %v1004 = vmax.f32 %v778, 0.0
        %v1005 = vmax.f32 %v783, 0.0
        %v1006 = vmax.f32 %v788, 0.0
        %v1007 = vmax.f32 %v793, 0.0
        %v1008 = vmax.f32 %v798, 0.0
        %v1009 = vmax.f32 %v803, 0.0
        %v1010 = vmax.f32 %v808, 0.0
        %v1011 = vmax.f32 %v813, 0.0
        %v1012 = vmax.f32 %v818, 0.0
        %v1013 = vmax.f32 %v823, 0.0
        %v1014 = vmax.f32 %v828, 0.0
        %v1015 = vmax.f32 %v833, 0.0
        %v1016 = vmax.f32 %v838, 0.0
        %v1017 = vmax.f32 %v843, 0.0
        %v1018 = vmax.f32 %v848, 0.0
        %v1019 = vmax.f32 %v853, 0.0
        %v1020 = vmax.f32 %v858, 0.0
        %v1021 = vmax.f32 %v863, 0.0
        %v1022 = vmax.f32 %v868, 0.0
        %v1023 = vmax.f32 %v873, 0.0
        %v1024 = vmax.f32 %v878, 0.0
        %v1025 = vmax.f32 %v883, 0.0
        %v1026 = vmax.f32 %v888, 0.0
        %v1027 = vmax.f32 %v893, 0.0
        %v1028 = vmax.f32 %v898, 0.0
        %v1029 = vmax.f32 %v903, 0.0
        %v1030 = vmax.f32 %v908, 0.0
        %v1031 = vmax.f32 %v913, 0.0
        %v1032 = vmax.f32 %v918, 0.0
        %v1033 = vmax.f32 %v923, 0.0
        %v1034 = vmax.f32 %v928, 0.0
        %v1035 = vmax.f32 %v933, 0.0
        %v1036 = vmax.f32 %v938, 0.0
        %v1037 = vmax.f32 %v943, 0.0
        %v1038 = vmax.f32 %v948, 0.0
        %v1039 = vmax.f32 %v953, 0.0
        %v1040 = vmax.f32 %v958, 0.0
        %v1041 = vmax.f32 %v963, 0.0
        %v1042 = vmax.f32 %v968, 0.0
        %v1043 = vmax.f32 %v973, 0.0
        %v1044 = vmax.f32 %v978, 0.0
        %v1045 = vpack.c.bf16 %v982, %v981
        %v1046 = vpack.c.bf16 %v984, %v983
        %v1047 = vpack.c.bf16 %v986, %v985
        %v1048 = vpack.c.bf16 %v988, %v987
        %v1049 = vpack.c.bf16 %v990, %v989
        %v1050 = vpack.c.bf16 %v992, %v991
        %v1051 = vpack.c.bf16 %v994, %v993
        %v1052 = vpack.c.bf16 %v996, %v995
        %v1053 = vpack.c.bf16 %v998, %v997
        %v1054 = vpack.c.bf16 %v1000, %v999
        %v1055 = vpack.c.bf16 %v1002, %v1001
        %v1056 = vpack.c.bf16 %v1004, %v1003
        %v1057 = vpack.c.bf16 %v1006, %v1005
        %v1058 = vpack.c.bf16 %v1008, %v1007
        %v1059 = vpack.c.bf16 %v1010, %v1009
        %v1060 = vpack.c.bf16 %v1012, %v1011
        %v1061 = vpack.c.bf16 %v1014, %v1013
        %v1062 = vpack.c.bf16 %v1016, %v1015
        %v1063 = vpack.c.bf16 %v1018, %v1017
        %v1064 = vpack.c.bf16 %v1020, %v1019
        %v1065 = vpack.c.bf16 %v1022, %v1021
        %v1066 = vpack.c.bf16 %v1024, %v1023
        %v1067 = vpack.c.bf16 %v1026, %v1025
        %v1068 = vpack.c.bf16 %v1028, %v1027
        %v1069 = vpack.c.bf16 %v1030, %v1029
        %v1070 = vpack.c.bf16 %v1032, %v1031
        %v1071 = vpack.c.bf16 %v1034, %v1033
        %v1072 = vpack.c.bf16 %v1036, %v1035
        %v1073 = vpack.c.bf16 %v1038, %v1037
        %v1074 = vpack.c.bf16 %v1040, %v1039
        %v1075 = vpack.c.bf16 %v1042, %v1041
        %v1076 = vpack.c.bf16 %v1044, %v1043
        %v1077 = vld [vmem:[%s3] sm:$0xf]
        %v1078 = vld [vmem:[%s3 + $0x4] sm:$0xf]
        %v1079 = vld [vmem:[%s3 + $0x8] sm:$0xf]
        %v1080 = vld [vmem:[%s3 + $0xc] sm:$0xf]
        %v1081 = vld [vmem:[%s3 + $0x10] sm:$0xf]
        %v1082 = vld [vmem:[%s3 + $0x14] sm:$0xf]
        %v1083 = vld [vmem:[%s3 + $0x18] sm:$0xf]
        %v1084 = vld [vmem:[%s3 + $0x1c] sm:$0xf]
        %v1085 = vld [vmem:[%s4] sm:$0x1]
        %v1087 = vlaneseq
        %v1088 = vshrl.u32 %v1087, 7
        %v1089 = vsub.s32 0, %v1088
        %v1090 = vrot.slane %v1085, %v1089
        %v1100 = vunpack.c.l.b16 %v1077
        %v1101 = vunpack.c.l.b16 %v1078
        %v1102 = vunpack.c.l.b16 %v1079
        %v1103 = vunpack.c.l.b16 %v1080
        %v1104 = vunpack.c.l.b16 %v1081
        %v1105 = vunpack.c.l.b16 %v1082
        %v1106 = vunpack.c.l.b16 %v1083
        %v1107 = vunpack.c.l.b16 %v1084
        %v1108 = vpack.c.b16 %v1101, %v1100
        %v1109 = vpack.c.b16 %v1103, %v1102
        %v1110 = vpack.c.b16 %v1105, %v1104
        %v1111 = vpack.c.b16 %v1107, %v1106
        %vm1116 = vcmask 523264
        %v1118 = vsel %vm1116, %v1045, 0
        %v1121 = vsel %vm1116, %v1046, 0
        %v1124 = vsel %vm1116, %v1047, 0
        %v1127 = vsel %vm1116, %v1048, 0
        %v1130 = vsel %vm1116, %v1049, 0
        %v1133 = vsel %vm1116, %v1050, 0
        %v1136 = vsel %vm1116, %v1051, 0
        %v1139 = vsel %vm1116, %v1052, 0
        %v1142 = vsel %vm1116, %v1053, 0
        %v1145 = vsel %vm1116, %v1054, 0
        %v1148 = vsel %vm1116, %v1055, 0
        %v1151 = vsel %vm1116, %v1056, 0
        %v1154 = vsel %vm1116, %v1057, 0
        %v1157 = vsel %vm1116, %v1058, 0
        %v1160 = vsel %vm1116, %v1059, 0
        %v1163 = vsel %vm1116, %v1060, 0
        %v1166 = vsel %vm1116, %v1061, 0
        %v1169 = vsel %vm1116, %v1062, 0
        %v1172 = vsel %vm1116, %v1063, 0
        %v1175 = vsel %vm1116, %v1064, 0
        %v1178 = vsel %vm1116, %v1065, 0
        %v1181 = vsel %vm1116, %v1066, 0
        %v1184 = vsel %vm1116, %v1067, 0
        %v1187 = vsel %vm1116, %v1068, 0
        %v1190 = vsel %vm1116, %v1069, 0
        %v1193 = vsel %vm1116, %v1070, 0
        %v1196 = vsel %vm1116, %v1071, 0
        %v1199 = vsel %vm1116, %v1072, 0
        %v1202 = vsel %vm1116, %v1073, 0
        %v1205 = vsel %vm1116, %v1074, 0
        %v1208 = vsel %vm1116, %v1075, 0
        %v1211 = vsel %vm1116, %v1076, 0
        %1213 = vmatprep.subr.bf16.mxu0 0
        %1214 = vmatpush1.bf16.msra.mxu0 %v1108
        %1215 = vmatprep.subr.bf16.mxu0 0
        %1216 = vmatpush1.bf16.msra.mxu0 %v1109
        %1217 = vmatprep.subr.bf16.mxu0 0
        %1218 = vmatpush1.bf16.msra.mxu0 %v1110
        %1219 = vmatprep.subr.bf16.mxu0 0
        %1220 = vmatpush1.bf16.msra.mxu0 %v1111
        %1221 = vmatprep.subr.bf16.mxu0 0
        %1222 = vmatpush1.bf16.msra.mxu0 0
        %1223 = vmatprep.subr.bf16.mxu0 0
        %1224 = vmatpush1.bf16.msra.mxu0 0
        %1225 = vmatprep.subr.bf16.mxu0 0
        %1226 = vmatpush1.bf16.msra.mxu0 0
        %1227 = vmatprep.subr.bf16.mxu0 0
        %1228 = vmatpush1.bf16.msra.mxu0 0
        %1229 = vmatprep.subr.bf16.mxu0 0
        %1230 = vmatpush1.bf16.msra.mxu0 0
        %1231 = vmatprep.subr.bf16.mxu0 0
        %1232 = vmatpush1.bf16.msra.mxu0 0
        %1233 = vmatprep.subr.bf16.mxu0 0
        %1234 = vmatpush1.bf16.msra.mxu0 0
        %1235 = vmatprep.subr.bf16.mxu0 0
        %1236 = vmatpush1.bf16.msra.mxu0 0
        %1237 = vmatprep.subr.bf16.mxu0 0
        %1238 = vmatpush1.bf16.msra.mxu0 0
        %1239 = vmatprep.subr.bf16.mxu0 0
        %1240 = vmatpush1.bf16.msra.mxu0 0
        %1241 = vmatprep.subr.bf16.mxu0 0
        %1242 = vmatpush1.bf16.msra.mxu0 0
        %1243 = vmatprep.subr.bf16.mxu0 0
        %1244 = vmatpush1.bf16.msra.mxu0 0
        %1245 = vmatprep.mubr.bf16.mxu0 0
        %1246 = vmatmul.mubr.bf16.gmra.mrb[0].mxu0 %v1118
        %v1247 = vpop.f32.mrb[0].mxu0
        %v1248 = vadd.f32 %v1090, %v1247
        %v1249 = vpop.f32.mrb[0].mxu0
        %v1250 = vpop.f32.mrb[0].mxu0
        %v1251 = vadd.f32 %v1090, %v1250
        %v1252 = vpop.f32.mrb[0].mxu0
        %1253 = vmatprep.mubr.bf16.mxu0 0
        %1254 = vmatmul.mubr.bf16.gmra.mrb[0].mxu0 %v1121
        %v1255 = vpop.f32.mrb[0].mxu0
        %v1256 = vadd.f32 %v1090, %v1255
        %v1257 = vpop.f32.mrb[0].mxu0
        %v1258 = vpop.f32.mrb[0].mxu0
        %v1259 = vadd.f32 %v1090, %v1258
        %v1260 = vpop.f32.mrb[0].mxu0
        %1261 = vmatprep.mubr.bf16.mxu0 0
        %1262 = vmatmul.mubr.bf16.gmra.mrb[0].mxu0 %v1124
        %v1263 = vpop.f32.mrb[0].mxu0
        %v1264 = vadd.f32 %v1090, %v1263
        %v1265 = vpop.f32.mrb[0].mxu0
        %v1266 = vpop.f32.mrb[0].mxu0
        %v1267 = vadd.f32 %v1090, %v1266
        %v1268 = vpop.f32.mrb[0].mxu0
        %1269 = vmatprep.mubr.bf16.mxu0 0
        %1270 = vmatmul.mubr.bf16.gmra.mrb[0].mxu0 %v1127
        %v1271 = vpop.f32.mrb[0].mxu0
        %v1272 = vadd.f32 %v1090, %v1271
        %v1273 = vpop.f32.mrb[0].mxu0
        %v1274 = vpop.f32.mrb[0].mxu0
        %v1275 = vadd.f32 %v1090, %v1274
        %v1276 = vpop.f32.mrb[0].mxu0
        %1277 = vmatprep.mubr.bf16.mxu0 0
        %1278 = vmatmul.mubr.bf16.gmra.mrb[0].mxu0 %v1130
        %v1279 = vpop.f32.mrb[0].mxu0
        %v1280 = vadd.f32 %v1090, %v1279
        %v1281 = vpop.f32.mrb[0].mxu0
        %v1282 = vpop.f32.mrb[0].mxu0
        %v1283 = vadd.f32 %v1090, %v1282
        %v1284 = vpop.f32.mrb[0].mxu0
        %1285 = vmatprep.mubr.bf16.mxu0 0
        %1286 = vmatmul.mubr.bf16.gmra.mrb[0].mxu0 %v1133
        %v1287 = vpop.f32.mrb[0].mxu0
        %v1288 = vadd.f32 %v1090, %v1287
        %v1289 = vpop.f32.mrb[0].mxu0
        %v1290 = vpop.f32.mrb[0].mxu0
        %v1291 = vadd.f32 %v1090, %v1290
        %v1292 = vpop.f32.mrb[0].mxu0
        %1293 = vmatprep.mubr.bf16.mxu0 0
        %1294 = vmatmul.mubr.bf16.gmra.mrb[0].mxu0 %v1136
        %v1295 = vpop.f32.mrb[0].mxu0
        %v1296 = vadd.f32 %v1090, %v1295
        %v1297 = vpop.f32.mrb[0].mxu0
        %v1298 = vpop.f32.mrb[0].mxu0
        %v1299 = vadd.f32 %v1090, %v1298
        %v1300 = vpop.f32.mrb[0].mxu0
        %1301 = vmatprep.mubr.bf16.mxu0 0
        %1302 = vmatmul.mubr.bf16.gmra.mrb[0].mxu0 %v1139
        %v1303 = vpop.f32.mrb[0].mxu0
        %v1304 = vadd.f32 %v1090, %v1303
        %v1305 = vpop.f32.mrb[0].mxu0
        %v1306 = vpop.f32.mrb[0].mxu0
        %v1307 = vadd.f32 %v1090, %v1306
        %v1308 = vpop.f32.mrb[0].mxu0
        %1309 = vmatprep.mubr.bf16.mxu0 0
        %1310 = vmatmul.mubr.bf16.gmra.mrb[0].mxu0 %v1142
        %v1311 = vpop.f32.mrb[0].mxu0
        %v1312 = vadd.f32 %v1090, %v1311
        %v1313 = vpop.f32.mrb[0].mxu0
        %v1314 = vpop.f32.mrb[0].mxu0
        %v1315 = vadd.f32 %v1090, %v1314
        %v1316 = vpop.f32.mrb[0].mxu0
        %1317 = vmatprep.mubr.bf16.mxu0 0
        %1318 = vmatmul.mubr.bf16.gmra.mrb[0].mxu0 %v1145
        %v1319 = vpop.f32.mrb[0].mxu0
        %v1320 = vadd.f32 %v1090, %v1319
        %v1321 = vpop.f32.mrb[0].mxu0
        %v1322 = vpop.f32.mrb[0].mxu0
        %v1323 = vadd.f32 %v1090, %v1322
        %v1324 = vpop.f32.mrb[0].mxu0
        %1325 = vmatprep.mubr.bf16.mxu0 0
        %1326 = vmatmul.mubr.bf16.gmra.mrb[0].mxu0 %v1148
        %v1327 = vpop.f32.mrb[0].mxu0
        %v1328 = vadd.f32 %v1090, %v1327
        %v1329 = vpop.f32.mrb[0].mxu0
        %v1330 = vpop.f32.mrb[0].mxu0
        %v1331 = vadd.f32 %v1090, %v1330
        %v1332 = vpop.f32.mrb[0].mxu0
        %1333 = vmatprep.mubr.bf16.mxu0 0
        %1334 = vmatmul.mubr.bf16.gmra.mrb[0].mxu0 %v1151
        %v1335 = vpop.f32.mrb[0].mxu0
        %v1336 = vadd.f32 %v1090, %v1335
        %v1337 = vpop.f32.mrb[0].mxu0
        %v1338 = vpop.f32.mrb[0].mxu0
        %v1339 = vadd.f32 %v1090, %v1338
        %v1340 = vpop.f32.mrb[0].mxu0
        %1341 = vmatprep.mubr.bf16.mxu0 0
        %1342 = vmatmul.mubr.bf16.gmra.mrb[0].mxu0 %v1154
        %v1343 = vpop.f32.mrb[0].mxu0
        %v1344 = vadd.f32 %v1090, %v1343
        %v1345 = vpop.f32.mrb[0].mxu0
        %v1346 = vpop.f32.mrb[0].mxu0
        %v1347 = vadd.f32 %v1090, %v1346
        %v1348 = vpop.f32.mrb[0].mxu0
        %1349 = vmatprep.mubr.bf16.mxu0 0
        %1350 = vmatmul.mubr.bf16.gmra.mrb[0].mxu0 %v1157
        %v1351 = vpop.f32.mrb[0].mxu0
        %v1352 = vadd.f32 %v1090, %v1351
        %v1353 = vpop.f32.mrb[0].mxu0
        %v1354 = vpop.f32.mrb[0].mxu0
        %v1355 = vadd.f32 %v1090, %v1354
        %v1356 = vpop.f32.mrb[0].mxu0
        %1357 = vmatprep.mubr.bf16.mxu0 0
        %1358 = vmatmul.mubr.bf16.gmra.mrb[0].mxu0 %v1160
        %v1359 = vpop.f32.mrb[0].mxu0
        %v1360 = vadd.f32 %v1090, %v1359
        %v1361 = vpop.f32.mrb[0].mxu0
        %v1362 = vpop.f32.mrb[0].mxu0
        %v1363 = vadd.f32 %v1090, %v1362
        %v1364 = vpop.f32.mrb[0].mxu0
        %1365 = vmatprep.mubr.bf16.mxu0 0
        %1366 = vmatmul.mubr.bf16.gmra.mrb[0].mxu0 %v1163
        %v1367 = vpop.f32.mrb[0].mxu0
        %v1368 = vadd.f32 %v1090, %v1367
        %v1369 = vpop.f32.mrb[0].mxu0
        %v1370 = vpop.f32.mrb[0].mxu0
        %v1371 = vadd.f32 %v1090, %v1370
        %v1372 = vpop.f32.mrb[0].mxu0
        %1373 = vmatprep.mubr.bf16.mxu0 0
        %1374 = vmatmul.mubr.bf16.gmra.mrb[0].mxu0 %v1166
        %v1375 = vpop.f32.mrb[0].mxu0
        %v1376 = vadd.f32 %v1090, %v1375
        %v1377 = vpop.f32.mrb[0].mxu0
        %v1378 = vpop.f32.mrb[0].mxu0
        %v1379 = vadd.f32 %v1090, %v1378
        %v1380 = vpop.f32.mrb[0].mxu0
        %1381 = vmatprep.mubr.bf16.mxu0 0
        %1382 = vmatmul.mubr.bf16.gmra.mrb[0].mxu0 %v1169
        %v1383 = vpop.f32.mrb[0].mxu0
        %v1384 = vadd.f32 %v1090, %v1383
        %v1385 = vpop.f32.mrb[0].mxu0
        %v1386 = vpop.f32.mrb[0].mxu0
        %v1387 = vadd.f32 %v1090, %v1386
        %v1388 = vpop.f32.mrb[0].mxu0
        %1389 = vmatprep.mubr.bf16.mxu0 0
        %1390 = vmatmul.mubr.bf16.gmra.mrb[0].mxu0 %v1172
        %v1391 = vpop.f32.mrb[0].mxu0
        %v1392 = vadd.f32 %v1090, %v1391
        %v1393 = vpop.f32.mrb[0].mxu0
        %v1394 = vpop.f32.mrb[0].mxu0
        %v1395 = vadd.f32 %v1090, %v1394
        %v1396 = vpop.f32.mrb[0].mxu0
        %1397 = vmatprep.mubr.bf16.mxu0 0
        %1398 = vmatmul.mubr.bf16.gmra.mrb[0].mxu0 %v1175
        %v1399 = vpop.f32.mrb[0].mxu0
        %v1400 = vadd.f32 %v1090, %v1399
        %v1401 = vpop.f32.mrb[0].mxu0
        %v1402 = vpop.f32.mrb[0].mxu0
        %v1403 = vadd.f32 %v1090, %v1402
        %v1404 = vpop.f32.mrb[0].mxu0
        %1405 = vmatprep.mubr.bf16.mxu0 0
        %1406 = vmatmul.mubr.bf16.gmra.mrb[0].mxu0 %v1178
        %v1407 = vpop.f32.mrb[0].mxu0
        %v1408 = vadd.f32 %v1090, %v1407
        %v1409 = vpop.f32.mrb[0].mxu0
        %v1410 = vpop.f32.mrb[0].mxu0
        %v1411 = vadd.f32 %v1090, %v1410
        %v1412 = vpop.f32.mrb[0].mxu0
        %1413 = vmatprep.mubr.bf16.mxu0 0
        %1414 = vmatmul.mubr.bf16.gmra.mrb[0].mxu0 %v1181
        %v1415 = vpop.f32.mrb[0].mxu0
        %v1416 = vadd.f32 %v1090, %v1415
        %v1417 = vpop.f32.mrb[0].mxu0
        %v1418 = vpop.f32.mrb[0].mxu0
        %v1419 = vadd.f32 %v1090, %v1418
        %v1420 = vpop.f32.mrb[0].mxu0
        %1421 = vmatprep.mubr.bf16.mxu0 0
        %1422 = vmatmul.mubr.bf16.gmra.mrb[0].mxu0 %v1184
        %v1423 = vpop.f32.mrb[0].mxu0
        %v1424 = vadd.f32 %v1090, %v1423
        %v1425 = vpop.f32.mrb[0].mxu0
        %v1426 = vpop.f32.mrb[0].mxu0
        %v1427 = vadd.f32 %v1090, %v1426
        %v1428 = vpop.f32.mrb[0].mxu0
        %1429 = vmatprep.mubr.bf16.mxu0 0
        %1430 = vmatmul.mubr.bf16.gmra.mrb[0].mxu0 %v1187
        %v1431 = vpop.f32.mrb[0].mxu0
        %v1432 = vadd.f32 %v1090, %v1431
        %v1433 = vpop.f32.mrb[0].mxu0
        %v1434 = vpop.f32.mrb[0].mxu0
        %v1435 = vadd.f32 %v1090, %v1434
        %v1436 = vpop.f32.mrb[0].mxu0
        %1437 = vmatprep.mubr.bf16.mxu0 0
        %1438 = vmatmul.mubr.bf16.gmra.mrb[0].mxu0 %v1190
        %v1439 = vpop.f32.mrb[0].mxu0
        %v1440 = vadd.f32 %v1090, %v1439
        %v1441 = vpop.f32.mrb[0].mxu0
        %v1442 = vpop.f32.mrb[0].mxu0
        %v1443 = vadd.f32 %v1090, %v1442
        %v1444 = vpop.f32.mrb[0].mxu0
        %1445 = vmatprep.mubr.bf16.mxu0 0
        %1446 = vmatmul.mubr.bf16.gmra.mrb[0].mxu0 %v1193
        %v1447 = vpop.f32.mrb[0].mxu0
        %v1448 = vadd.f32 %v1090, %v1447
        %v1449 = vpop.f32.mrb[0].mxu0
        %v1450 = vpop.f32.mrb[0].mxu0
        %v1451 = vadd.f32 %v1090, %v1450
        %v1452 = vpop.f32.mrb[0].mxu0
        %1453 = vmatprep.mubr.bf16.mxu0 0
        %1454 = vmatmul.mubr.bf16.gmra.mrb[0].mxu0 %v1196
        %v1455 = vpop.f32.mrb[0].mxu0
        %v1456 = vadd.f32 %v1090, %v1455
        %v1457 = vpop.f32.mrb[0].mxu0
        %v1458 = vpop.f32.mrb[0].mxu0
        %v1459 = vadd.f32 %v1090, %v1458
        %v1460 = vpop.f32.mrb[0].mxu0
        %1461 = vmatprep.mubr.bf16.mxu0 0
        %1462 = vmatmul.mubr.bf16.gmra.mrb[0].mxu0 %v1199
        %v1463 = vpop.f32.mrb[0].mxu0
        %v1464 = vadd.f32 %v1090, %v1463
        %v1465 = vpop.f32.mrb[0].mxu0
        %v1466 = vpop.f32.mrb[0].mxu0
        %v1467 = vadd.f32 %v1090, %v1466
        %v1468 = vpop.f32.mrb[0].mxu0
        %1469 = vmatprep.mubr.bf16.mxu0 0
        %1470 = vmatmul.mubr.bf16.gmra.mrb[0].mxu0 %v1202
        %v1471 = vpop.f32.mrb[0].mxu0
        %v1472 = vadd.f32 %v1090, %v1471
        %v1473 = vpop.f32.mrb[0].mxu0
        %v1474 = vpop.f32.mrb[0].mxu0
        %v1475 = vadd.f32 %v1090, %v1474
        %v1476 = vpop.f32.mrb[0].mxu0
        %1477 = vmatprep.mubr.bf16.mxu0 0
        %1478 = vmatmul.mubr.bf16.gmra.mrb[0].mxu0 %v1205
        %v1479 = vpop.f32.mrb[0].mxu0
        %v1480 = vadd.f32 %v1090, %v1479
        %v1481 = vpop.f32.mrb[0].mxu0
        %v1482 = vpop.f32.mrb[0].mxu0
        %v1483 = vadd.f32 %v1090, %v1482
        %v1484 = vpop.f32.mrb[0].mxu0
        %1485 = vmatprep.mubr.bf16.mxu0 0
        %1486 = vmatmul.mubr.bf16.gmra.mrb[0].mxu0 %v1208
        %v1487 = vpop.f32.mrb[0].mxu0
        %v1488 = vadd.f32 %v1090, %v1487
        %v1489 = vpop.f32.mrb[0].mxu0
        %v1490 = vpop.f32.mrb[0].mxu0
        %v1491 = vadd.f32 %v1090, %v1490
        %v1492 = vpop.f32.mrb[0].mxu0
        %1493 = vmatprep.mubr.bf16.mxu0 0
        %1494 = vmatmul.mubr.bf16.gmra.mrb[0].mxu0 %v1211
        %v1495 = vpop.f32.mrb[0].mxu0
        %v1496 = vadd.f32 %v1090, %v1495
        %v1497 = vpop.f32.mrb[0].mxu0
        %v1498 = vpop.f32.mrb[0].mxu0
        %v1499 = vadd.f32 %v1090, %v1498
        %v1500 = vpop.f32.mrb[0].mxu0
        %1501 = vdwg.mxu0
        %v1502 = vmax.f32 %v1248, 0.0
        %v1503 = vmax.f32 %v1251, 0.0
        %v1504 = vmax.f32 %v1256, 0.0
        %v1505 = vmax.f32 %v1259, 0.0
        %v1506 = vmax.f32 %v1264, 0.0
        %v1507 = vmax.f32 %v1267, 0.0
        %v1508 = vmax.f32 %v1272, 0.0
        %v1509 = vmax.f32 %v1275, 0.0
        %v1510 = vmax.f32 %v1280, 0.0
        %v1511 = vmax.f32 %v1283, 0.0
        %v1512 = vmax.f32 %v1288, 0.0
        %v1513 = vmax.f32 %v1291, 0.0
        %v1514 = vmax.f32 %v1296, 0.0
        %v1515 = vmax.f32 %v1299, 0.0
        %v1516 = vmax.f32 %v1304, 0.0
        %v1517 = vmax.f32 %v1307, 0.0
        %v1518 = vmax.f32 %v1312, 0.0
        %v1519 = vmax.f32 %v1315, 0.0
        %v1520 = vmax.f32 %v1320, 0.0
        %v1521 = vmax.f32 %v1323, 0.0
        %v1522 = vmax.f32 %v1328, 0.0
        %v1523 = vmax.f32 %v1331, 0.0
        %v1524 = vmax.f32 %v1336, 0.0
        %v1525 = vmax.f32 %v1339, 0.0
        %v1526 = vmax.f32 %v1344, 0.0
        %v1527 = vmax.f32 %v1347, 0.0
        %v1528 = vmax.f32 %v1352, 0.0
        %v1529 = vmax.f32 %v1355, 0.0
        %v1530 = vmax.f32 %v1360, 0.0
        %v1531 = vmax.f32 %v1363, 0.0
        %v1532 = vmax.f32 %v1368, 0.0
        %v1533 = vmax.f32 %v1371, 0.0
        %v1534 = vmax.f32 %v1376, 0.0
        %v1535 = vmax.f32 %v1379, 0.0
        %v1536 = vmax.f32 %v1384, 0.0
        %v1537 = vmax.f32 %v1387, 0.0
        %v1538 = vmax.f32 %v1392, 0.0
        %v1539 = vmax.f32 %v1395, 0.0
        %v1540 = vmax.f32 %v1400, 0.0
        %v1541 = vmax.f32 %v1403, 0.0
        %v1542 = vmax.f32 %v1408, 0.0
        %v1543 = vmax.f32 %v1411, 0.0
        %v1544 = vmax.f32 %v1416, 0.0
        %v1545 = vmax.f32 %v1419, 0.0
        %v1546 = vmax.f32 %v1424, 0.0
        %v1547 = vmax.f32 %v1427, 0.0
        %v1548 = vmax.f32 %v1432, 0.0
        %v1549 = vmax.f32 %v1435, 0.0
        %v1550 = vmax.f32 %v1440, 0.0
        %v1551 = vmax.f32 %v1443, 0.0
        %v1552 = vmax.f32 %v1448, 0.0
        %v1553 = vmax.f32 %v1451, 0.0
        %v1554 = vmax.f32 %v1456, 0.0
        %v1555 = vmax.f32 %v1459, 0.0
        %v1556 = vmax.f32 %v1464, 0.0
        %v1557 = vmax.f32 %v1467, 0.0
        %v1558 = vmax.f32 %v1472, 0.0
        %v1559 = vmax.f32 %v1475, 0.0
        %v1560 = vmax.f32 %v1480, 0.0
        %v1561 = vmax.f32 %v1483, 0.0
        %v1562 = vmax.f32 %v1488, 0.0
        %v1563 = vmax.f32 %v1491, 0.0
        %v1564 = vmax.f32 %v1496, 0.0
        %v1565 = vmax.f32 %v1499, 0.0
        %v1566 = vpack.c.bf16 %v1503, %v1502
        %v1567 = vpack.c.bf16 %v1505, %v1504
        %v1568 = vpack.c.bf16 %v1507, %v1506
        %v1569 = vpack.c.bf16 %v1509, %v1508
        %v1570 = vpack.c.bf16 %v1511, %v1510
        %v1571 = vpack.c.bf16 %v1513, %v1512
        %v1572 = vpack.c.bf16 %v1515, %v1514
        %v1573 = vpack.c.bf16 %v1517, %v1516
        %v1574 = vpack.c.bf16 %v1519, %v1518
        %v1575 = vpack.c.bf16 %v1521, %v1520
        %v1576 = vpack.c.bf16 %v1523, %v1522
        %v1577 = vpack.c.bf16 %v1525, %v1524
        %v1578 = vpack.c.bf16 %v1527, %v1526
        %v1579 = vpack.c.bf16 %v1529, %v1528
        %v1580 = vpack.c.bf16 %v1531, %v1530
        %v1581 = vpack.c.bf16 %v1533, %v1532
        %v1582 = vpack.c.bf16 %v1535, %v1534
        %v1583 = vpack.c.bf16 %v1537, %v1536
        %v1584 = vpack.c.bf16 %v1539, %v1538
        %v1585 = vpack.c.bf16 %v1541, %v1540
        %v1586 = vpack.c.bf16 %v1543, %v1542
        %v1587 = vpack.c.bf16 %v1545, %v1544
        %v1588 = vpack.c.bf16 %v1547, %v1546
        %v1589 = vpack.c.bf16 %v1549, %v1548
        %v1590 = vpack.c.bf16 %v1551, %v1550
        %v1591 = vpack.c.bf16 %v1553, %v1552
        %v1592 = vpack.c.bf16 %v1555, %v1554
        %v1593 = vpack.c.bf16 %v1557, %v1556
        %v1594 = vpack.c.bf16 %v1559, %v1558
        %v1595 = vpack.c.bf16 %v1561, %v1560
        %v1596 = vpack.c.bf16 %v1563, %v1562
        %v1597 = vpack.c.bf16 %v1565, %v1564
        %v1598 = vld [vmem:[%s5] sm:$0xff]
        %v1599 = vld [vmem:[%s5 + $0x8] sm:$0xff]
        %v1600 = vld [vmem:[%s5 + $0x10] sm:$0xff]
        %v1601 = vld [vmem:[%s5 + $0x18] sm:$0xff]
        %v1602 = vld [vmem:[%s5 + $0x20] sm:$0xff]
        %v1603 = vld [vmem:[%s5 + $0x28] sm:$0xff]
        %v1604 = vld [vmem:[%s5 + $0x30] sm:$0xff]
        %v1605 = vld [vmem:[%s5 + $0x38] sm:$0xff]
        %v1606 = vld [vmem:[%s5 + $0x40] sm:$0xff]
        %v1607 = vld [vmem:[%s5 + $0x48] sm:$0xff]
        %v1608 = vld [vmem:[%s5 + $0x50] sm:$0xff]
        %v1609 = vld [vmem:[%s5 + $0x58] sm:$0xff]
        %v1610 = vld [vmem:[%s5 + $0x60] sm:$0xff]
        %v1611 = vld [vmem:[%s5 + $0x68] sm:$0xff]
        %v1612 = vld [vmem:[%s5 + $0x70] sm:$0xff]
        %v1613 = vld [vmem:[%s5 + $0x78] sm:$0xff]
        %v1614 = vld [vmem:[%s5 + $0x80] sm:$0xff]
        %v1615 = vld [vmem:[%s5 + $0x88] sm:$0xff]
        %v1616 = vld [vmem:[%s5 + $0x90] sm:$0xff]
        %v1617 = vld [vmem:[%s5 + $0x98] sm:$0xff]
        %v1618 = vld [vmem:[%s5 + $0xa0] sm:$0xff]
        %v1619 = vld [vmem:[%s5 + $0xa8] sm:$0xff]
        %v1620 = vld [vmem:[%s5 + $0xb0] sm:$0xff]
        %v1621 = vld [vmem:[%s5 + $0xb8] sm:$0xff]
        %v1622 = vld [vmem:[%s5 + $0xc0] sm:$0xff]
        %v1623 = vld [vmem:[%s5 + $0xc8] sm:$0xff]
        %v1624 = vld [vmem:[%s5 + $0xd0] sm:$0xff]
        %v1625 = vld [vmem:[%s5 + $0xd8] sm:$0xff]
        %v1626 = vld [vmem:[%s5 + $0xe0] sm:$0xff]
        %v1627 = vld [vmem:[%s5 + $0xe8] sm:$0xff]
        %v1628 = vld [vmem:[%s5 + $0xf0] sm:$0xff]
        %v1629 = vld [vmem:[%s5 + $0xf8] sm:$0xff]
        %v1630 = vld [vmem:[%s5 + $0x100] sm:$0xff]
        %v1631 = vld [vmem:[%s5 + $0x108] sm:$0xff]
        %v1632 = vld [vmem:[%s5 + $0x110] sm:$0xff]
        %v1633 = vld [vmem:[%s5 + $0x118] sm:$0xff]
        %v1634 = vld [vmem:[%s5 + $0x120] sm:$0xff]
        %v1635 = vld [vmem:[%s5 + $0x128] sm:$0xff]
        %v1636 = vld [vmem:[%s5 + $0x130] sm:$0xff]
        %v1637 = vld [vmem:[%s5 + $0x138] sm:$0xff]
        %v1638 = vld [vmem:[%s5 + $0x140] sm:$0xff]
        %v1639 = vld [vmem:[%s5 + $0x148] sm:$0xff]
        %v1640 = vld [vmem:[%s5 + $0x150] sm:$0xff]
        %v1641 = vld [vmem:[%s5 + $0x158] sm:$0xff]
        %v1642 = vld [vmem:[%s5 + $0x160] sm:$0xff]
        %v1643 = vld [vmem:[%s5 + $0x168] sm:$0xff]
        %v1644 = vld [vmem:[%s5 + $0x170] sm:$0xff]
        %v1645 = vld [vmem:[%s5 + $0x178] sm:$0xff]
        %v1646 = vld [vmem:[%s5 + $0x180] sm:$0xff]
        %v1647 = vld [vmem:[%s5 + $0x188] sm:$0xff]
        %v1648 = vld [vmem:[%s5 + $0x190] sm:$0xff]
        %v1649 = vld [vmem:[%s5 + $0x198] sm:$0xff]
        %v1650 = vld [vmem:[%s5 + $0x1a0] sm:$0xff]
        %v1651 = vld [vmem:[%s5 + $0x1a8] sm:$0xff]
        %v1652 = vld [vmem:[%s5 + $0x1b0] sm:$0xff]
        %v1653 = vld [vmem:[%s5 + $0x1b8] sm:$0xff]
        %v1654 = vld [vmem:[%s5 + $0x1c0] sm:$0xff]
        %v1655 = vld [vmem:[%s5 + $0x1c8] sm:$0xff]
        %v1656 = vld [vmem:[%s5 + $0x1d0] sm:$0xff]
        %v1657 = vld [vmem:[%s5 + $0x1d8] sm:$0xff]
        %v1658 = vld [vmem:[%s5 + $0x1e0] sm:$0xff]
        %v1659 = vld [vmem:[%s5 + $0x1e8] sm:$0xff]
        %v1660 = vld [vmem:[%s5 + $0x1f0] sm:$0xff]
        %v1661 = vld [vmem:[%s5 + $0x1f8] sm:$0xff]
        %v1662 = vld [vmem:[%s6] sm:$0xff]
        %v1664 = vlaneseq
        %v1665 = vshrl.u32 %v1664, 7
        %v1666 = vsub.s32 0, %v1665
        %v1667 = vrot.slane %v1662, %v1666
        %v1668 = vlaneseq
        %v1669 = vshrl.u32 %v1668, 7
        %v1670 = vsub.s32 1, %v1669
        %v1671 = vrot.slane %v1662, %v1670
        %v1672 = vlaneseq
        %v1673 = vshrl.u32 %v1672, 7
        %v1674 = vsub.s32 2, %v1673
        %v1675 = vrot.slane %v1662, %v1674
        %v1676 = vlaneseq
        %v1677 = vshrl.u32 %v1676, 7
        %v1678 = vsub.s32 3, %v1677
        %v1679 = vrot.slane %v1662, %v1678
        %v1680 = vlaneseq
        %v1681 = vshrl.u32 %v1680, 7
        %v1682 = vsub.s32 4, %v1681
        %v1683 = vrot.slane %v1662, %v1682
        %v1684 = vlaneseq
        %v1685 = vshrl.u32 %v1684, 7
        %v1686 = vsub.s32 5, %v1685
        %v1687 = vrot.slane %v1662, %v1686
        %v1688 = vlaneseq
        %v1689 = vshrl.u32 %v1688, 7
        %v1690 = vsub.s32 6, %v1689
        %v1691 = vrot.slane %v1662, %v1690
        %v1692 = vlaneseq
        %v1693 = vshrl.u32 %v1692, 7
        %v1694 = vsub.s32 7, %v1693
        %v1695 = vrot.slane %v1662, %v1694
        %v1768 = vunpack.c.l.b16 %v1598
        %v1769 = vunpack.c.h.b16 %v1598
        %v1770 = vunpack.c.l.b16 %v1599
        %v1771 = vunpack.c.h.b16 %v1599
        %v1772 = vunpack.c.l.b16 %v1600
        %v1773 = vunpack.c.h.b16 %v1600
        %v1774 = vunpack.c.l.b16 %v1601
        %v1775 = vunpack.c.h.b16 %v1601
        %v1776 = vunpack.c.l.b16 %v1602
        %v1777 = vunpack.c.h.b16 %v1602
        %v1778 = vunpack.c.l.b16 %v1603
        %v1779 = vunpack.c.h.b16 %v1603
        %v1780 = vunpack.c.l.b16 %v1604
        %v1781 = vunpack.c.h.b16 %v1604
        %v1782 = vunpack.c.l.b16 %v1605
        %v1783 = vunpack.c.h.b16 %v1605
        %v1784 = vunpack.c.l.b16 %v1606
        %v1785 = vunpack.c.h.b16 %v1606
        %v1786 = vunpack.c.l.b16 %v1607
        %v1787 = vunpack.c.h.b16 %v1607
        %v1788 = vunpack.c.l.b16 %v1608
        %v1789 = vunpack.c.h.b16 %v1608
        %v1790 = vunpack.c.l.b16 %v1609
        %v1791 = vunpack.c.h.b16 %v1609
        %v1792 = vunpack.c.l.b16 %v1610
        %v1793 = vunpack.c.h.b16 %v1610
        %v1794 = vunpack.c.l.b16 %v1611
        %v1795 = vunpack.c.h.b16 %v1611
        %v1796 = vunpack.c.l.b16 %v1612
        %v1797 = vunpack.c.h.b16 %v1612
        %v1798 = vunpack.c.l.b16 %v1613
        %v1799 = vunpack.c.h.b16 %v1613
        %v1800 = vunpack.c.l.b16 %v1614
        %v1801 = vunpack.c.h.b16 %v1614
        %v1802 = vunpack.c.l.b16 %v1615
        %v1803 = vunpack.c.h.b16 %v1615
        %v1804 = vunpack.c.l.b16 %v1616
        %v1805 = vunpack.c.h.b16 %v1616
        %v1806 = vunpack.c.l.b16 %v1617
        %v1807 = vunpack.c.h.b16 %v1617
        %v1808 = vunpack.c.l.b16 %v1618
        %v1809 = vunpack.c.h.b16 %v1618
        %v1810 = vunpack.c.l.b16 %v1619
        %v1811 = vunpack.c.h.b16 %v1619
        %v1812 = vunpack.c.l.b16 %v1620
        %v1813 = vunpack.c.h.b16 %v1620
        %v1814 = vunpack.c.l.b16 %v1621
        %v1815 = vunpack.c.h.b16 %v1621
        %v1816 = vunpack.c.l.b16 %v1622
        %v1817 = vunpack.c.h.b16 %v1622
        %v1818 = vunpack.c.l.b16 %v1623
        %v1819 = vunpack.c.h.b16 %v1623
        %v1820 = vunpack.c.l.b16 %v1624
        %v1821 = vunpack.c.h.b16 %v1624
        %v1822 = vunpack.c.l.b16 %v1625
        %v1823 = vunpack.c.h.b16 %v1625
        %v1824 = vunpack.c.l.b16 %v1626
        %v1825 = vunpack.c.h.b16 %v1626
        %v1826 = vunpack.c.l.b16 %v1627
        %v1827 = vunpack.c.h.b16 %v1627
        %v1828 = vunpack.c.l.b16 %v1628
        %v1829 = vunpack.c.h.b16 %v1628
        %v1830 = vunpack.c.l.b16 %v1629
        %v1831 = vunpack.c.h.b16 %v1629
        %v1832 = vunpack.c.l.b16 %v1630
        %v1833 = vunpack.c.h.b16 %v1630
        %v1834 = vunpack.c.l.b16 %v1631
        %v1835 = vunpack.c.h.b16 %v1631
        %v1836 = vunpack.c.l.b16 %v1632
        %v1837 = vunpack.c.h.b16 %v1632
        %v1838 = vunpack.c.l.b16 %v1633
        %v1839 = vunpack.c.h.b16 %v1633
        %v1840 = vunpack.c.l.b16 %v1634
        %v1841 = vunpack.c.h.b16 %v1634
        %v1842 = vunpack.c.l.b16 %v1635
        %v1843 = vunpack.c.h.b16 %v1635
        %v1844 = vunpack.c.l.b16 %v1636
        %v1845 = vunpack.c.h.b16 %v1636
        %v1846 = vunpack.c.l.b16 %v1637
        %v1847 = vunpack.c.h.b16 %v1637
        %v1848 = vunpack.c.l.b16 %v1638
        %v1849 = vunpack.c.h.b16 %v1638
        %v1850 = vunpack.c.l.b16 %v1639
        %v1851 = vunpack.c.h.b16 %v1639
        %v1852 = vunpack.c.l.b16 %v1640
        %v1853 = vunpack.c.h.b16 %v1640
        %v1854 = vunpack.c.l.b16 %v1641
        %v1855 = vunpack.c.h.b16 %v1641
        %v1856 = vunpack.c.l.b16 %v1642
        %v1857 = vunpack.c.h.b16 %v1642
        %v1858 = vunpack.c.l.b16 %v1643
        %v1859 = vunpack.c.h.b16 %v1643
        %v1860 = vunpack.c.l.b16 %v1644
        %v1861 = vunpack.c.h.b16 %v1644
        %v1862 = vunpack.c.l.b16 %v1645
        %v1863 = vunpack.c.h.b16 %v1645
        %v1864 = vunpack.c.l.b16 %v1646
        %v1865 = vunpack.c.h.b16 %v1646
        %v1866 = vunpack.c.l.b16 %v1647
        %v1867 = vunpack.c.h.b16 %v1647
        %v1868 = vunpack.c.l.b16 %v1648
        %v1869 = vunpack.c.h.b16 %v1648
        %v1870 = vunpack.c.l.b16 %v1649
        %v1871 = vunpack.c.h.b16 %v1649
        %v1872 = vunpack.c.l.b16 %v1650
        %v1873 = vunpack.c.h.b16 %v1650
        %v1874 = vunpack.c.l.b16 %v1651
        %v1875 = vunpack.c.h.b16 %v1651
        %v1876 = vunpack.c.l.b16 %v1652
        %v1877 = vunpack.c.h.b16 %v1652
        %v1878 = vunpack.c.l.b16 %v1653
        %v1879 = vunpack.c.h.b16 %v1653
        %v1880 = vunpack.c.l.b16 %v1654
        %v1881 = vunpack.c.h.b16 %v1654
        %v1882 = vunpack.c.l.b16 %v1655
        %v1883 = vunpack.c.h.b16 %v1655
        %v1884 = vunpack.c.l.b16 %v1656
        %v1885 = vunpack.c.h.b16 %v1656
        %v1886 = vunpack.c.l.b16 %v1657
        %v1887 = vunpack.c.h.b16 %v1657
        %v1888 = vunpack.c.l.b16 %v1658
        %v1889 = vunpack.c.h.b16 %v1658
        %v1890 = vunpack.c.l.b16 %v1659
        %v1891 = vunpack.c.h.b16 %v1659
        %v1892 = vunpack.c.l.b16 %v1660
        %v1893 = vunpack.c.h.b16 %v1660
        %v1894 = vunpack.c.l.b16 %v1661
        %v1895 = vunpack.c.h.b16 %v1661
        %v1896 = vpack.c.b16 %v1776, %v1768
        %v1897 = vpack.c.b16 %v1777, %v1769
        %v1898 = vpack.c.b16 %v1778, %v1770
        %v1899 = vpack.c.b16 %v1779, %v1771
        %v1900 = vpack.c.b16 %v1780, %v1772
        %v1901 = vpack.c.b16 %v1781, %v1773
        %v1902 = vpack.c.b16 %v1782, %v1774
        %v1903 = vpack.c.b16 %v1783, %v1775
        %v1904 = vpack.c.b16 %v1792, %v1784
        %v1905 = vpack.c.b16 %v1793, %v1785
        %v1906 = vpack.c.b16 %v1794, %v1786
        %v1907 = vpack.c.b16 %v1795, %v1787
        %v1908 = vpack.c.b16 %v1796, %v1788
        %v1909 = vpack.c.b16 %v1797, %v1789
        %v1910 = vpack.c.b16 %v1798, %v1790
        %v1911 = vpack.c.b16 %v1799, %v1791
        %v1912 = vpack.c.b16 %v1808, %v1800
        %v1913 = vpack.c.b16 %v1809, %v1801
        %v1914 = vpack.c.b16 %v1810, %v1802
        %v1915 = vpack.c.b16 %v1811, %v1803
        %v1916 = vpack.c.b16 %v1812, %v1804
        %v1917 = vpack.c.b16 %v1813, %v1805
        %v1918 = vpack.c.b16 %v1814, %v1806
        %v1919 = vpack.c.b16 %v1815, %v1807
        %v1920 = vpack.c.b16 %v1824, %v1816
        %v1921 = vpack.c.b16 %v1825, %v1817
        %v1922 = vpack.c.b16 %v1826, %v1818
        %v1923 = vpack.c.b16 %v1827, %v1819
        %v1924 = vpack.c.b16 %v1828, %v1820
        %v1925 = vpack.c.b16 %v1829, %v1821
        %v1926 = vpack.c.b16 %v1830, %v1822
        %v1927 = vpack.c.b16 %v1831, %v1823
        %v1928 = vpack.c.b16 %v1840, %v1832
        %v1929 = vpack.c.b16 %v1841, %v1833
        %v1930 = vpack.c.b16 %v1842, %v1834
        %v1931 = vpack.c.b16 %v1843, %v1835
        %v1932 = vpack.c.b16 %v1844, %v1836
        %v1933 = vpack.c.b16 %v1845, %v1837
        %v1934 = vpack.c.b16 %v1846, %v1838
        %v1935 = vpack.c.b16 %v1847, %v1839
        %v1936 = vpack.c.b16 %v1856, %v1848
        %v1937 = vpack.c.b16 %v1857, %v1849
        %v1938 = vpack.c.b16 %v1858, %v1850
        %v1939 = vpack.c.b16 %v1859, %v1851
        %v1940 = vpack.c.b16 %v1860, %v1852
        %v1941 = vpack.c.b16 %v1861, %v1853
        %v1942 = vpack.c.b16 %v1862, %v1854
        %v1943 = vpack.c.b16 %v1863, %v1855
        %v1944 = vpack.c.b16 %v1872, %v1864
        %v1945 = vpack.c.b16 %v1873, %v1865
        %v1946 = vpack.c.b16 %v1874, %v1866
        %v1947 = vpack.c.b16 %v1875, %v1867
        %v1948 = vpack.c.b16 %v1876, %v1868
        %v1949 = vpack.c.b16 %v1877, %v1869
        %v1950 = vpack.c.b16 %v1878, %v1870
        %v1951 = vpack.c.b16 %v1879, %v1871
        %v1952 = vpack.c.b16 %v1888, %v1880
        %v1953 = vpack.c.b16 %v1889, %v1881
        %v1954 = vpack.c.b16 %v1890, %v1882
        %v1955 = vpack.c.b16 %v1891, %v1883
        %v1956 = vpack.c.b16 %v1892, %v1884
        %v1957 = vpack.c.b16 %v1893, %v1885
        %v1958 = vpack.c.b16 %v1894, %v1886
        %v1959 = vpack.c.b16 %v1895, %v1887
        %2024 = vmatprep.subr.bf16.mxu0 %v1897
        %2025 = vmatpush1.bf16.msra.mxu0 %v1896
        %2026 = vmatprep.subr.bf16.mxu0 %v1905
        %2027 = vmatpush1.bf16.msra.mxu0 %v1904
        %2028 = vmatprep.subr.bf16.mxu0 %v1913
        %2029 = vmatpush1.bf16.msra.mxu0 %v1912
        %2030 = vmatprep.subr.bf16.mxu0 %v1921
        %2031 = vmatpush1.bf16.msra.mxu0 %v1920
        %2032 = vmatprep.subr.bf16.mxu0 %v1929
        %2033 = vmatpush1.bf16.msra.mxu0 %v1928
        %2034 = vmatprep.subr.bf16.mxu0 %v1937
        %2035 = vmatpush1.bf16.msra.mxu0 %v1936
        %2036 = vmatprep.subr.bf16.mxu0 %v1945
        %2037 = vmatpush1.bf16.msra.mxu0 %v1944
        %2038 = vmatprep.subr.bf16.mxu0 %v1953
        %2039 = vmatpush1.bf16.msra.mxu0 %v1952
        %2040 = vmatprep.subr.bf16.mxu0 0
        %2041 = vmatpush1.bf16.msra.mxu0 0
        %2042 = vmatprep.subr.bf16.mxu0 0
        %2043 = vmatpush1.bf16.msra.mxu0 0
        %2044 = vmatprep.subr.bf16.mxu0 0
        %2045 = vmatpush1.bf16.msra.mxu0 0
        %2046 = vmatprep.subr.bf16.mxu0 0
        %2047 = vmatpush1.bf16.msra.mxu0 0
        %2048 = vmatprep.subr.bf16.mxu0 0
        %2049 = vmatpush1.bf16.msra.mxu0 0
        %2050 = vmatprep.subr.bf16.mxu0 0
        %2051 = vmatpush1.bf16.msra.mxu0 0
        %2052 = vmatprep.subr.bf16.mxu0 0
        %2053 = vmatpush1.bf16.msra.mxu0 0
        %2054 = vmatprep.subr.bf16.mxu0 0
        %2055 = vmatpush1.bf16.msra.mxu0 0
        %2056 = vmatprep.mubr.bf16.mxu0 0
        %2057 = vmatmul.mubr.bf16.gmra.mrb[0].mxu0 %v1566
        %v2058 = vpop.f32.mrb[0].mxu0
        %v2059 = vadd.f32 %v1667, %v2058
        %v2060 = vpop.f32.mrb[0].mxu0
        %v2061 = vadd.f32 %v1671, %v2060
        %v2062 = vpop.f32.mrb[0].mxu0
        %v2063 = vadd.f32 %v1667, %v2062
        %v2064 = vpop.f32.mrb[0].mxu0
        %v2065 = vadd.f32 %v1671, %v2064
        %2066 = vmatprep.mubr.bf16.mxu0 0
        %2067 = vmatmul.mubr.bf16.gmra.mrb[0].mxu0 %v1567
        %v2068 = vpop.f32.mrb[0].mxu0
        %v2069 = vadd.f32 %v1667, %v2068
        %v2070 = vpop.f32.mrb[0].mxu0
        %v2071 = vadd.f32 %v1671, %v2070
        %v2072 = vpop.f32.mrb[0].mxu0
        %v2073 = vadd.f32 %v1667, %v2072
        %v2074 = vpop.f32.mrb[0].mxu0
        %v2075 = vadd.f32 %v1671, %v2074
        %2076 = vmatprep.mubr.bf16.mxu0 0
        %2077 = vmatmul.mubr.bf16.gmra.mrb[0].mxu0 %v1568
        %v2078 = vpop.f32.mrb[0].mxu0
        %v2079 = vadd.f32 %v1667, %v2078
        %v2080 = vpop.f32.mrb[0].mxu0
        %v2081 = vadd.f32 %v1671, %v2080
        %v2082 = vpop.f32.mrb[0].mxu0
        %v2083 = vadd.f32 %v1667, %v2082
        %v2084 = vpop.f32.mrb[0].mxu0
        %v2085 = vadd.f32 %v1671, %v2084
        %2086 = vmatprep.mubr.bf16.mxu0 0
        %2087 = vmatmul.mubr.bf16.gmra.mrb[0].mxu0 %v1569
        %v2088 = vpop.f32.mrb[0].mxu0
        %v2089 = vadd.f32 %v1667, %v2088
        %v2090 = vpop.f32.mrb[0].mxu0
        %v2091 = vadd.f32 %v1671, %v2090
        %v2092 = vpop.f32.mrb[0].mxu0
        %v2093 = vadd.f32 %v1667, %v2092
        %v2094 = vpop.f32.mrb[0].mxu0
        %v2095 = vadd.f32 %v1671, %v2094
        %2096 = vmatprep.mubr.bf16.mxu0 0
        %2097 = vmatmul.mubr.bf16.gmra.mrb[0].mxu0 %v1570
        %v2098 = vpop.f32.mrb[0].mxu0
        %v2099 = vadd.f32 %v1667, %v2098
        %v2100 = vpop.f32.mrb[0].mxu0
        %v2101 = vadd.f32 %v1671, %v2100
        %v2102 = vpop.f32.mrb[0].mxu0
        %v2103 = vadd.f32 %v1667, %v2102
        %v2104 = vpop.f32.mrb[0].mxu0
        %v2105 = vadd.f32 %v1671, %v2104
        %2106 = vmatprep.mubr.bf16.mxu0 0
        %2107 = vmatmul.mubr.bf16.gmra.mrb[0].mxu0 %v1571
        %v2108 = vpop.f32.mrb[0].mxu0
        %v2109 = vadd.f32 %v1667, %v2108
        %v2110 = vpop.f32.mrb[0].mxu0
        %v2111 = vadd.f32 %v1671, %v2110
        %v2112 = vpop.f32.mrb[0].mxu0
        %v2113 = vadd.f32 %v1667, %v2112
        %v2114 = vpop.f32.mrb[0].mxu0
        %v2115 = vadd.f32 %v1671, %v2114
        %2116 = vmatprep.mubr.bf16.mxu0 0
        %2117 = vmatmul.mubr.bf16.gmra.mrb[0].mxu0 %v1572
        %v2118 = vpop.f32.mrb[0].mxu0
        %v2119 = vadd.f32 %v1667, %v2118
        %v2120 = vpop.f32.mrb[0].mxu0
        %v2121 = vadd.f32 %v1671, %v2120
        %v2122 = vpop.f32.mrb[0].mxu0
        %v2123 = vadd.f32 %v1667, %v2122
        %v2124 = vpop.f32.mrb[0].mxu0
        %v2125 = vadd.f32 %v1671, %v2124
        %2126 = vmatprep.mubr.bf16.mxu0 0
        %2127 = vmatmul.mubr.bf16.gmra.mrb[0].mxu0 %v1573
        %v2128 = vpop.f32.mrb[0].mxu0
        %v2129 = vadd.f32 %v1667, %v2128
        %v2130 = vpop.f32.mrb[0].mxu0
        %v2131 = vadd.f32 %v1671, %v2130
        %v2132 = vpop.f32.mrb[0].mxu0
        %v2133 = vadd.f32 %v1667, %v2132
        %v2134 = vpop.f32.mrb[0].mxu0
        %v2135 = vadd.f32 %v1671, %v2134
        %2136 = vmatprep.mubr.bf16.mxu0 0
        %2137 = vmatmul.mubr.bf16.gmra.mrb[0].mxu0 %v1574
        %v2138 = vpop.f32.mrb[0].mxu0
        %v2139 = vadd.f32 %v1667, %v2138
        %v2140 = vpop.f32.mrb[0].mxu0
        %v2141 = vadd.f32 %v1671, %v2140
        %v2142 = vpop.f32.mrb[0].mxu0
        %v2143 = vadd.f32 %v1667, %v2142
        %v2144 = vpop.f32.mrb[0].mxu0
        %v2145 = vadd.f32 %v1671, %v2144
        %2146 = vmatprep.mubr.bf16.mxu0 0
        %2147 = vmatmul.mubr.bf16.gmra.mrb[0].mxu0 %v1575
        %v2148 = vpop.f32.mrb[0].mxu0
        %v2149 = vadd.f32 %v1667, %v2148
        %v2150 = vpop.f32.mrb[0].mxu0
        %v2151 = vadd.f32 %v1671, %v2150
        %v2152 = vpop.f32.mrb[0].mxu0
        %v2153 = vadd.f32 %v1667, %v2152
        %v2154 = vpop.f32.mrb[0].mxu0
        %v2155 = vadd.f32 %v1671, %v2154
        %2156 = vmatprep.mubr.bf16.mxu0 0
        %2157 = vmatmul.mubr.bf16.gmra.mrb[0].mxu0 %v1576
        %v2158 = vpop.f32.mrb[0].mxu0
        %v2159 = vadd.f32 %v1667, %v2158
        %v2160 = vpop.f32.mrb[0].mxu0
        %v2161 = vadd.f32 %v1671, %v2160
        %v2162 = vpop.f32.mrb[0].mxu0
        %v2163 = vadd.f32 %v1667, %v2162
        %v2164 = vpop.f32.mrb[0].mxu0
        %v2165 = vadd.f32 %v1671, %v2164
        %2166 = vmatprep.mubr.bf16.mxu0 0
        %2167 = vmatmul.mubr.bf16.gmra.mrb[0].mxu0 %v1577
        %v2168 = vpop.f32.mrb[0].mxu0
        %v2169 = vadd.f32 %v1667, %v2168
        %v2170 = vpop.f32.mrb[0].mxu0
        %v2171 = vadd.f32 %v1671, %v2170
        %v2172 = vpop.f32.mrb[0].mxu0
        %v2173 = vadd.f32 %v1667, %v2172
        %v2174 = vpop.f32.mrb[0].mxu0
        %v2175 = vadd.f32 %v1671, %v2174
        %2176 = vmatprep.mubr.bf16.mxu0 0
        %2177 = vmatmul.mubr.bf16.gmra.mrb[0].mxu0 %v1578
        %v2178 = vpop.f32.mrb[0].mxu0
        %v2179 = vadd.f32 %v1667, %v2178
        %v2180 = vpop.f32.mrb[0].mxu0
        %v2181 = vadd.f32 %v1671, %v2180
        %v2182 = vpop.f32.mrb[0].mxu0
        %v2183 = vadd.f32 %v1667, %v2182
        %v2184 = vpop.f32.mrb[0].mxu0
        %v2185 = vadd.f32 %v1671, %v2184
        %2186 = vmatprep.mubr.bf16.mxu0 0
        %2187 = vmatmul.mubr.bf16.gmra.mrb[0].mxu0 %v1579
        %v2188 = vpop.f32.mrb[0].mxu0
        %v2189 = vadd.f32 %v1667, %v2188
        %v2190 = vpop.f32.mrb[0].mxu0
        %v2191 = vadd.f32 %v1671, %v2190
        %v2192 = vpop.f32.mrb[0].mxu0
        %v2193 = vadd.f32 %v1667, %v2192
        %v2194 = vpop.f32.mrb[0].mxu0
        %v2195 = vadd.f32 %v1671, %v2194
        %2196 = vmatprep.mubr.bf16.mxu0 0
        %2197 = vmatmul.mubr.bf16.gmra.mrb[0].mxu0 %v1580
        %v2198 = vpop.f32.mrb[0].mxu0
        %v2199 = vadd.f32 %v1667, %v2198
        %v2200 = vpop.f32.mrb[0].mxu0
        %v2201 = vadd.f32 %v1671, %v2200
        %v2202 = vpop.f32.mrb[0].mxu0
        %v2203 = vadd.f32 %v1667, %v2202
        %v2204 = vpop.f32.mrb[0].mxu0
        %v2205 = vadd.f32 %v1671, %v2204
        %2206 = vmatprep.mubr.bf16.mxu0 0
        %2207 = vmatmul.mubr.bf16.gmra.mrb[0].mxu0 %v1581
        %v2208 = vpop.f32.mrb[0].mxu0
        %v2209 = vadd.f32 %v1667, %v2208
        %v2210 = vpop.f32.mrb[0].mxu0
        %v2211 = vadd.f32 %v1671, %v2210
        %v2212 = vpop.f32.mrb[0].mxu0
        %v2213 = vadd.f32 %v1667, %v2212
        %v2214 = vpop.f32.mrb[0].mxu0
        %v2215 = vadd.f32 %v1671, %v2214
        %2216 = vmatprep.mubr.bf16.mxu0 0
        %2217 = vmatmul.mubr.bf16.gmra.mrb[0].mxu0 %v1582
        %v2218 = vpop.f32.mrb[0].mxu0
        %v2219 = vadd.f32 %v1667, %v2218
        %v2220 = vpop.f32.mrb[0].mxu0
        %v2221 = vadd.f32 %v1671, %v2220
        %v2222 = vpop.f32.mrb[0].mxu0
        %v2223 = vadd.f32 %v1667, %v2222
        %v2224 = vpop.f32.mrb[0].mxu0
        %v2225 = vadd.f32 %v1671, %v2224
        %2226 = vmatprep.mubr.bf16.mxu0 0
        %2227 = vmatmul.mubr.bf16.gmra.mrb[0].mxu0 %v1583
        %v2228 = vpop.f32.mrb[0].mxu0
        %v2229 = vadd.f32 %v1667, %v2228
        %v2230 = vpop.f32.mrb[0].mxu0
        %v2231 = vadd.f32 %v1671, %v2230
        %v2232 = vpop.f32.mrb[0].mxu0
        %v2233 = vadd.f32 %v1667, %v2232
        %v2234 = vpop.f32.mrb[0].mxu0
        %v2235 = vadd.f32 %v1671, %v2234
        %2236 = vmatprep.mubr.bf16.mxu0 0
        %2237 = vmatmul.mubr.bf16.gmra.mrb[0].mxu0 %v1584
        %v2238 = vpop.f32.mrb[0].mxu0
        %v2239 = vadd.f32 %v1667, %v2238
        %v2240 = vpop.f32.mrb[0].mxu0
        %v2241 = vadd.f32 %v1671, %v2240
        %v2242 = vpop.f32.mrb[0].mxu0
        %v2243 = vadd.f32 %v1667, %v2242
        %v2244 = vpop.f32.mrb[0].mxu0
        %v2245 = vadd.f32 %v1671, %v2244
        %2246 = vmatprep.mubr.bf16.mxu0 0
        %2247 = vmatmul.mubr.bf16.gmra.mrb[0].mxu0 %v1585
        %v2248 = vpop.f32.mrb[0].mxu0
        %v2249 = vadd.f32 %v1667, %v2248
        %v2250 = vpop.f32.mrb[0].mxu0
        %v2251 = vadd.f32 %v1671, %v2250
        %v2252 = vpop.f32.mrb[0].mxu0
        %v2253 = vadd.f32 %v1667, %v2252
        %v2254 = vpop.f32.mrb[0].mxu0
        %v2255 = vadd.f32 %v1671, %v2254
        %2256 = vmatprep.mubr.bf16.mxu0 0
        %2257 = vmatmul.mubr.bf16.gmra.mrb[0].mxu0 %v1586
        %v2258 = vpop.f32.mrb[0].mxu0
        %v2259 = vadd.f32 %v1667, %v2258
        %v2260 = vpop.f32.mrb[0].mxu0
        %v2261 = vadd.f32 %v1671, %v2260
        %v2262 = vpop.f32.mrb[0].mxu0
        %v2263 = vadd.f32 %v1667, %v2262
        %v2264 = vpop.f32.mrb[0].mxu0
        %v2265 = vadd.f32 %v1671, %v2264
        %2266 = vmatprep.mubr.bf16.mxu0 0
        %2267 = vmatmul.mubr.bf16.gmra.mrb[0].mxu0 %v1587
        %v2268 = vpop.f32.mrb[0].mxu0
        %v2269 = vadd.f32 %v1667, %v2268
        %v2270 = vpop.f32.mrb[0].mxu0
        %v2271 = vadd.f32 %v1671, %v2270
        %v2272 = vpop.f32.mrb[0].mxu0
        %v2273 = vadd.f32 %v1667, %v2272
        %v2274 = vpop.f32.mrb[0].mxu0
        %v2275 = vadd.f32 %v1671, %v2274
        %2276 = vmatprep.mubr.bf16.mxu0 0
        %2277 = vmatmul.mubr.bf16.gmra.mrb[0].mxu0 %v1588
        %v2278 = vpop.f32.mrb[0].mxu0
        %v2279 = vadd.f32 %v1667, %v2278
        %v2280 = vpop.f32.mrb[0].mxu0
        %v2281 = vadd.f32 %v1671, %v2280
        %v2282 = vpop.f32.mrb[0].mxu0
        %v2283 = vadd.f32 %v1667, %v2282
        %v2284 = vpop.f32.mrb[0].mxu0
        %v2285 = vadd.f32 %v1671, %v2284
        %2286 = vmatprep.mubr.bf16.mxu0 0
        %2287 = vmatmul.mubr.bf16.gmra.mrb[0].mxu0 %v1589
        %v2288 = vpop.f32.mrb[0].mxu0
        %v2289 = vadd.f32 %v1667, %v2288
        %v2290 = vpop.f32.mrb[0].mxu0
        %v2291 = vadd.f32 %v1671, %v2290
        %v2292 = vpop.f32.mrb[0].mxu0
        %v2293 = vadd.f32 %v1667, %v2292
        %v2294 = vpop.f32.mrb[0].mxu0
        %v2295 = vadd.f32 %v1671, %v2294
        %2296 = vmatprep.mubr.bf16.mxu0 0
        %2297 = vmatmul.mubr.bf16.gmra.mrb[0].mxu0 %v1590
        %v2298 = vpop.f32.mrb[0].mxu0
        %v2299 = vadd.f32 %v1667, %v2298
        %v2300 = vpop.f32.mrb[0].mxu0
        %v2301 = vadd.f32 %v1671, %v2300
        %v2302 = vpop.f32.mrb[0].mxu0
        %v2303 = vadd.f32 %v1667, %v2302
        %v2304 = vpop.f32.mrb[0].mxu0
        %v2305 = vadd.f32 %v1671, %v2304
        %2306 = vmatprep.mubr.bf16.mxu0 0
        %2307 = vmatmul.mubr.bf16.gmra.mrb[0].mxu0 %v1591
        %v2308 = vpop.f32.mrb[0].mxu0
        %v2309 = vadd.f32 %v1667, %v2308
        %v2310 = vpop.f32.mrb[0].mxu0
        %v2311 = vadd.f32 %v1671, %v2310
        %v2312 = vpop.f32.mrb[0].mxu0
        %v2313 = vadd.f32 %v1667, %v2312
        %v2314 = vpop.f32.mrb[0].mxu0
        %v2315 = vadd.f32 %v1671, %v2314
        %2316 = vmatprep.mubr.bf16.mxu0 0
        %2317 = vmatmul.mubr.bf16.gmra.mrb[0].mxu0 %v1592
        %v2318 = vpop.f32.mrb[0].mxu0
        %v2319 = vadd.f32 %v1667, %v2318
        %v2320 = vpop.f32.mrb[0].mxu0
        %v2321 = vadd.f32 %v1671, %v2320
        %v2322 = vpop.f32.mrb[0].mxu0
        %v2323 = vadd.f32 %v1667, %v2322
        %v2324 = vpop.f32.mrb[0].mxu0
        %v2325 = vadd.f32 %v1671, %v2324
        %2326 = vmatprep.mubr.bf16.mxu0 0
        %2327 = vmatmul.mubr.bf16.gmra.mrb[0].mxu0 %v1593
        %v2328 = vpop.f32.mrb[0].mxu0
        %v2329 = vadd.f32 %v1667, %v2328
        %v2330 = vpop.f32.mrb[0].mxu0
        %v2331 = vadd.f32 %v1671, %v2330
        %v2332 = vpop.f32.mrb[0].mxu0
        %v2333 = vadd.f32 %v1667, %v2332
        %v2334 = vpop.f32.mrb[0].mxu0
        %v2335 = vadd.f32 %v1671, %v2334
        %2336 = vmatprep.mubr.bf16.mxu0 0
        %2337 = vmatmul.mubr.bf16.gmra.mrb[0].mxu0 %v1594
        %v2338 = vpop.f32.mrb[0].mxu0
        %v2339 = vadd.f32 %v1667, %v2338
        %v2340 = vpop.f32.mrb[0].mxu0
        %v2341 = vadd.f32 %v1671, %v2340
        %v2342 = vpop.f32.mrb[0].mxu0
        %v2343 = vadd.f32 %v1667, %v2342
        %v2344 = vpop.f32.mrb[0].mxu0
        %v2345 = vadd.f32 %v1671, %v2344
        %2346 = vmatprep.mubr.bf16.mxu0 0
        %2347 = vmatmul.mubr.bf16.gmra.mrb[0].mxu0 %v1595
        %v2348 = vpop.f32.mrb[0].mxu0
        %v2349 = vadd.f32 %v1667, %v2348
        %v2350 = vpop.f32.mrb[0].mxu0
        %v2351 = vadd.f32 %v1671, %v2350
        %v2352 = vpop.f32.mrb[0].mxu0
        %v2353 = vadd.f32 %v1667, %v2352
        %v2354 = vpop.f32.mrb[0].mxu0
        %v2355 = vadd.f32 %v1671, %v2354
        %2356 = vmatprep.mubr.bf16.mxu0 0
        %2357 = vmatmul.mubr.bf16.gmra.mrb[0].mxu0 %v1596
        %v2358 = vpop.f32.mrb[0].mxu0
        %v2359 = vadd.f32 %v1667, %v2358
        %v2360 = vpop.f32.mrb[0].mxu0
        %v2361 = vadd.f32 %v1671, %v2360
        %v2362 = vpop.f32.mrb[0].mxu0
        %v2363 = vadd.f32 %v1667, %v2362
        %v2364 = vpop.f32.mrb[0].mxu0
        %v2365 = vadd.f32 %v1671, %v2364
        %2366 = vmatprep.mubr.bf16.mxu0 0
        %2367 = vmatmul.mubr.bf16.gmra.mrb[0].mxu0 %v1597
        %v2368 = vpop.f32.mrb[0].mxu0
        %v2369 = vadd.f32 %v1667, %v2368
        %v2370 = vpop.f32.mrb[0].mxu0
        %v2371 = vadd.f32 %v1671, %v2370
        %v2372 = vpop.f32.mrb[0].mxu0
        %v2373 = vadd.f32 %v1667, %v2372
        %v2374 = vpop.f32.mrb[0].mxu0
        %v2375 = vadd.f32 %v1671, %v2374
        %2376 = vdwg.mxu0
        %2377 = vmatprep.subr.bf16.mxu0 %v1899
        %2378 = vmatpush1.bf16.msra.mxu0 %v1898
        %2379 = vmatprep.subr.bf16.mxu0 %v1907
        %2380 = vmatpush1.bf16.msra.mxu0 %v1906
        %2381 = vmatprep.subr.bf16.mxu0 %v1915
        %2382 = vmatpush1.bf16.msra.mxu0 %v1914
        %2383 = vmatprep.subr.bf16.mxu0 %v1923
        %2384 = vmatpush1.bf16.msra.mxu0 %v1922
        %2385 = vmatprep.subr.bf16.mxu0 %v1931
        %2386 = vmatpush1.bf16.msra.mxu0 %v1930
        %2387 = vmatprep.subr.bf16.mxu0 %v1939
        %2388 = vmatpush1.bf16.msra.mxu0 %v1938
        %2389 = vmatprep.subr.bf16.mxu0 %v1947
        %2390 = vmatpush1.bf16.msra.mxu0 %v1946
        %2391 = vmatprep.subr.bf16.mxu0 %v1955
        %2392 = vmatpush1.bf16.msra.mxu0 %v1954
        %2393 = vmatprep.subr.bf16.mxu0 0
        %2394 = vmatpush1.bf16.msra.mxu0 0
        %2395 = vmatprep.subr.bf16.mxu0 0
        %2396 = vmatpush1.bf16.msra.mxu0 0
        %2397 = vmatprep.subr.bf16.mxu0 0
        %2398 = vmatpush1.bf16.msra.mxu0 0
        %2399 = vmatprep.subr.bf16.mxu0 0
        %2400 = vmatpush1.bf16.msra.mxu0 0
        %2401 = vmatprep.subr.bf16.mxu0 0
        %2402 = vmatpush1.bf16.msra.mxu0 0
        %2403 = vmatprep.subr.bf16.mxu0 0
        %2404 = vmatpush1.bf16.msra.mxu0 0
        %2405 = vmatprep.subr.bf16.mxu0 0
        %2406 = vmatpush1.bf16.msra.mxu0 0
        %2407 = vmatprep.subr.bf16.mxu0 0
        %2408 = vmatpush1.bf16.msra.mxu0 0
        %2409 = vmatprep.mubr.bf16.mxu0 0
        %2410 = vmatmul.mubr.bf16.gmra.mrb[0].mxu0 %v1566
        %v2411 = vpop.f32.mrb[0].mxu0
        %v2412 = vadd.f32 %v1675, %v2411
        %v2413 = vpop.f32.mrb[0].mxu0
        %v2414 = vadd.f32 %v1679, %v2413
        %v2415 = vpop.f32.mrb[0].mxu0
        %v2416 = vadd.f32 %v1675, %v2415
        %v2417 = vpop.f32.mrb[0].mxu0
        %v2418 = vadd.f32 %v1679, %v2417
        %2419 = vmatprep.mubr.bf16.mxu0 0
        %2420 = vmatmul.mubr.bf16.gmra.mrb[0].mxu0 %v1567
        %v2421 = vpop.f32.mrb[0].mxu0
        %v2422 = vadd.f32 %v1675, %v2421
        %v2423 = vpop.f32.mrb[0].mxu0
        %v2424 = vadd.f32 %v1679, %v2423
        %v2425 = vpop.f32.mrb[0].mxu0
        %v2426 = vadd.f32 %v1675, %v2425
        %v2427 = vpop.f32.mrb[0].mxu0
        %v2428 = vadd.f32 %v1679, %v2427
        %2429 = vmatprep.mubr.bf16.mxu0 0
        %2430 = vmatmul.mubr.bf16.gmra.mrb[0].mxu0 %v1568
        %v2431 = vpop.f32.mrb[0].mxu0
        %v2432 = vadd.f32 %v1675, %v2431
        %v2433 = vpop.f32.mrb[0].mxu0
        %v2434 = vadd.f32 %v1679, %v2433
        %v2435 = vpop.f32.mrb[0].mxu0
        %v2436 = vadd.f32 %v1675, %v2435
        %v2437 = vpop.f32.mrb[0].mxu0
        %v2438 = vadd.f32 %v1679, %v2437
        %2439 = vmatprep.mubr.bf16.mxu0 0
        %2440 = vmatmul.mubr.bf16.gmra.mrb[0].mxu0 %v1569
        %v2441 = vpop.f32.mrb[0].mxu0
        %v2442 = vadd.f32 %v1675, %v2441
        %v2443 = vpop.f32.mrb[0].mxu0
        %v2444 = vadd.f32 %v1679, %v2443
        %v2445 = vpop.f32.mrb[0].mxu0
        %v2446 = vadd.f32 %v1675, %v2445
        %v2447 = vpop.f32.mrb[0].mxu0
        %v2448 = vadd.f32 %v1679, %v2447
        %2449 = vmatprep.mubr.bf16.mxu0 0
        %2450 = vmatmul.mubr.bf16.gmra.mrb[0].mxu0 %v1570
        %v2451 = vpop.f32.mrb[0].mxu0
        %v2452 = vadd.f32 %v1675, %v2451
        %v2453 = vpop.f32.mrb[0].mxu0
        %v2454 = vadd.f32 %v1679, %v2453
        %v2455 = vpop.f32.mrb[0].mxu0
        %v2456 = vadd.f32 %v1675, %v2455
        %v2457 = vpop.f32.mrb[0].mxu0
        %v2458 = vadd.f32 %v1679, %v2457
        %2459 = vmatprep.mubr.bf16.mxu0 0
        %2460 = vmatmul.mubr.bf16.gmra.mrb[0].mxu0 %v1571
        %v2461 = vpop.f32.mrb[0].mxu0
        %v2462 = vadd.f32 %v1675, %v2461
        %v2463 = vpop.f32.mrb[0].mxu0
        %v2464 = vadd.f32 %v1679, %v2463
        %v2465 = vpop.f32.mrb[0].mxu0
        %v2466 = vadd.f32 %v1675, %v2465
        %v2467 = vpop.f32.mrb[0].mxu0
        %v2468 = vadd.f32 %v1679, %v2467
        %2469 = vmatprep.mubr.bf16.mxu0 0
        %2470 = vmatmul.mubr.bf16.gmra.mrb[0].mxu0 %v1572
        %v2471 = vpop.f32.mrb[0].mxu0
        %v2472 = vadd.f32 %v1675, %v2471
        %v2473 = vpop.f32.mrb[0].mxu0
        %v2474 = vadd.f32 %v1679, %v2473
        %v2475 = vpop.f32.mrb[0].mxu0
        %v2476 = vadd.f32 %v1675, %v2475
        %v2477 = vpop.f32.mrb[0].mxu0
        %v2478 = vadd.f32 %v1679, %v2477
        %2479 = vmatprep.mubr.bf16.mxu0 0
        %2480 = vmatmul.mubr.bf16.gmra.mrb[0].mxu0 %v1573
        %v2481 = vpop.f32.mrb[0].mxu0
        %v2482 = vadd.f32 %v1675, %v2481
        %v2483 = vpop.f32.mrb[0].mxu0
        %v2484 = vadd.f32 %v1679, %v2483
        %v2485 = vpop.f32.mrb[0].mxu0
        %v2486 = vadd.f32 %v1675, %v2485
        %v2487 = vpop.f32.mrb[0].mxu0
        %v2488 = vadd.f32 %v1679, %v2487
        %2489 = vmatprep.mubr.bf16.mxu0 0
        %2490 = vmatmul.mubr.bf16.gmra.mrb[0].mxu0 %v1574
        %v2491 = vpop.f32.mrb[0].mxu0
        %v2492 = vadd.f32 %v1675, %v2491
        %v2493 = vpop.f32.mrb[0].mxu0
        %v2494 = vadd.f32 %v1679, %v2493
        %v2495 = vpop.f32.mrb[0].mxu0
        %v2496 = vadd.f32 %v1675, %v2495
        %v2497 = vpop.f32.mrb[0].mxu0
        %v2498 = vadd.f32 %v1679, %v2497
        %2499 = vmatprep.mubr.bf16.mxu0 0
        %2500 = vmatmul.mubr.bf16.gmra.mrb[0].mxu0 %v1575
        %v2501 = vpop.f32.mrb[0].mxu0
        %v2502 = vadd.f32 %v1675, %v2501
        %v2503 = vpop.f32.mrb[0].mxu0
        %v2504 = vadd.f32 %v1679, %v2503
        %v2505 = vpop.f32.mrb[0].mxu0
        %v2506 = vadd.f32 %v1675, %v2505
        %v2507 = vpop.f32.mrb[0].mxu0
        %v2508 = vadd.f32 %v1679, %v2507
        %2509 = vmatprep.mubr.bf16.mxu0 0
        %2510 = vmatmul.mubr.bf16.gmra.mrb[0].mxu0 %v1576
        %v2511 = vpop.f32.mrb[0].mxu0
        %v2512 = vadd.f32 %v1675, %v2511
        %v2513 = vpop.f32.mrb[0].mxu0
        %v2514 = vadd.f32 %v1679, %v2513
        %v2515 = vpop.f32.mrb[0].mxu0
        %v2516 = vadd.f32 %v1675, %v2515
        %v2517 = vpop.f32.mrb[0].mxu0
        %v2518 = vadd.f32 %v1679, %v2517
        %2519 = vmatprep.mubr.bf16.mxu0 0
        %2520 = vmatmul.mubr.bf16.gmra.mrb[0].mxu0 %v1577
        %v2521 = vpop.f32.mrb[0].mxu0
        %v2522 = vadd.f32 %v1675, %v2521
        %v2523 = vpop.f32.mrb[0].mxu0
        %v2524 = vadd.f32 %v1679, %v2523
        %v2525 = vpop.f32.mrb[0].mxu0
        %v2526 = vadd.f32 %v1675, %v2525
        %v2527 = vpop.f32.mrb[0].mxu0
        %v2528 = vadd.f32 %v1679, %v2527
        %2529 = vmatprep.mubr.bf16.mxu0 0
        %2530 = vmatmul.mubr.bf16.gmra.mrb[0].mxu0 %v1578
        %v2531 = vpop.f32.mrb[0].mxu0
        %v2532 = vadd.f32 %v1675, %v2531
        %v2533 = vpop.f32.mrb[0].mxu0
        %v2534 = vadd.f32 %v1679, %v2533
        %v2535 = vpop.f32.mrb[0].mxu0
        %v2536 = vadd.f32 %v1675, %v2535
        %v2537 = vpop.f32.mrb[0].mxu0
        %v2538 = vadd.f32 %v1679, %v2537
        %2539 = vmatprep.mubr.bf16.mxu0 0
        %2540 = vmatmul.mubr.bf16.gmra.mrb[0].mxu0 %v1579
        %v2541 = vpop.f32.mrb[0].mxu0
        %v2542 = vadd.f32 %v1675, %v2541
        %v2543 = vpop.f32.mrb[0].mxu0
        %v2544 = vadd.f32 %v1679, %v2543
        %v2545 = vpop.f32.mrb[0].mxu0
        %v2546 = vadd.f32 %v1675, %v2545
        %v2547 = vpop.f32.mrb[0].mxu0
        %v2548 = vadd.f32 %v1679, %v2547
        %2549 = vmatprep.mubr.bf16.mxu0 0
        %2550 = vmatmul.mubr.bf16.gmra.mrb[0].mxu0 %v1580
        %v2551 = vpop.f32.mrb[0].mxu0
        %v2552 = vadd.f32 %v1675, %v2551
        %v2553 = vpop.f32.mrb[0].mxu0
        %v2554 = vadd.f32 %v1679, %v2553
        %v2555 = vpop.f32.mrb[0].mxu0
        %v2556 = vadd.f32 %v1675, %v2555
        %v2557 = vpop.f32.mrb[0].mxu0
        %v2558 = vadd.f32 %v1679, %v2557
        %2559 = vmatprep.mubr.bf16.mxu0 0
        %2560 = vmatmul.mubr.bf16.gmra.mrb[0].mxu0 %v1581
        %v2561 = vpop.f32.mrb[0].mxu0
        %v2562 = vadd.f32 %v1675, %v2561
        %v2563 = vpop.f32.mrb[0].mxu0
        %v2564 = vadd.f32 %v1679, %v2563
        %v2565 = vpop.f32.mrb[0].mxu0
        %v2566 = vadd.f32 %v1675, %v2565
        %v2567 = vpop.f32.mrb[0].mxu0
        %v2568 = vadd.f32 %v1679, %v2567
        %2569 = vmatprep.mubr.bf16.mxu0 0
        %2570 = vmatmul.mubr.bf16.gmra.mrb[0].mxu0 %v1582
        %v2571 = vpop.f32.mrb[0].mxu0
        %v2572 = vadd.f32 %v1675, %v2571
        %v2573 = vpop.f32.mrb[0].mxu0
        %v2574 = vadd.f32 %v1679, %v2573
        %v2575 = vpop.f32.mrb[0].mxu0
        %v2576 = vadd.f32 %v1675, %v2575
        %v2577 = vpop.f32.mrb[0].mxu0
        %v2578 = vadd.f32 %v1679, %v2577
        %2579 = vmatprep.mubr.bf16.mxu0 0
        %2580 = vmatmul.mubr.bf16.gmra.mrb[0].mxu0 %v1583
        %v2581 = vpop.f32.mrb[0].mxu0
        %v2582 = vadd.f32 %v1675, %v2581
        %v2583 = vpop.f32.mrb[0].mxu0
        %v2584 = vadd.f32 %v1679, %v2583
        %v2585 = vpop.f32.mrb[0].mxu0
        %v2586 = vadd.f32 %v1675, %v2585
        %v2587 = vpop.f32.mrb[0].mxu0
        %v2588 = vadd.f32 %v1679, %v2587
        %2589 = vmatprep.mubr.bf16.mxu0 0
        %2590 = vmatmul.mubr.bf16.gmra.mrb[0].mxu0 %v1584
        %v2591 = vpop.f32.mrb[0].mxu0
        %v2592 = vadd.f32 %v1675, %v2591
        %v2593 = vpop.f32.mrb[0].mxu0
        %v2594 = vadd.f32 %v1679, %v2593
        %v2595 = vpop.f32.mrb[0].mxu0
        %v2596 = vadd.f32 %v1675, %v2595
        %v2597 = vpop.f32.mrb[0].mxu0
        %v2598 = vadd.f32 %v1679, %v2597
        %2599 = vmatprep.mubr.bf16.mxu0 0
        %2600 = vmatmul.mubr.bf16.gmra.mrb[0].mxu0 %v1585
        %v2601 = vpop.f32.mrb[0].mxu0
        %v2602 = vadd.f32 %v1675, %v2601
        %v2603 = vpop.f32.mrb[0].mxu0
        %v2604 = vadd.f32 %v1679, %v2603
        %v2605 = vpop.f32.mrb[0].mxu0
        %v2606 = vadd.f32 %v1675, %v2605
        %v2607 = vpop.f32.mrb[0].mxu0
        %v2608 = vadd.f32 %v1679, %v2607
        %2609 = vmatprep.mubr.bf16.mxu0 0
        %2610 = vmatmul.mubr.bf16.gmra.mrb[0].mxu0 %v1586
        %v2611 = vpop.f32.mrb[0].mxu0
        %v2612 = vadd.f32 %v1675, %v2611
        %v2613 = vpop.f32.mrb[0].mxu0
        %v2614 = vadd.f32 %v1679, %v2613
        %v2615 = vpop.f32.mrb[0].mxu0
        %v2616 = vadd.f32 %v1675, %v2615
        %v2617 = vpop.f32.mrb[0].mxu0
        %v2618 = vadd.f32 %v1679, %v2617
        %2619 = vmatprep.mubr.bf16.mxu0 0
        %2620 = vmatmul.mubr.bf16.gmra.mrb[0].mxu0 %v1587
        %v2621 = vpop.f32.mrb[0].mxu0
        %v2622 = vadd.f32 %v1675, %v2621
        %v2623 = vpop.f32.mrb[0].mxu0
        %v2624 = vadd.f32 %v1679, %v2623
        %v2625 = vpop.f32.mrb[0].mxu0
        %v2626 = vadd.f32 %v1675, %v2625
        %v2627 = vpop.f32.mrb[0].mxu0
        %v2628 = vadd.f32 %v1679, %v2627
        %2629 = vmatprep.mubr.bf16.mxu0 0
        %2630 = vmatmul.mubr.bf16.gmra.mrb[0].mxu0 %v1588
        %v2631 = vpop.f32.mrb[0].mxu0
        %v2632 = vadd.f32 %v1675, %v2631
        %v2633 = vpop.f32.mrb[0].mxu0
        %v2634 = vadd.f32 %v1679, %v2633
        %v2635 = vpop.f32.mrb[0].mxu0
        %v2636 = vadd.f32 %v1675, %v2635
        %v2637 = vpop.f32.mrb[0].mxu0
        %v2638 = vadd.f32 %v1679, %v2637
        %2639 = vmatprep.mubr.bf16.mxu0 0
        %2640 = vmatmul.mubr.bf16.gmra.mrb[0].mxu0 %v1589
        %v2641 = vpop.f32.mrb[0].mxu0
        %v2642 = vadd.f32 %v1675, %v2641
        %v2643 = vpop.f32.mrb[0].mxu0
        %v2644 = vadd.f32 %v1679, %v2643
        %v2645 = vpop.f32.mrb[0].mxu0
        %v2646 = vadd.f32 %v1675, %v2645
        %v2647 = vpop.f32.mrb[0].mxu0
        %v2648 = vadd.f32 %v1679, %v2647
        %2649 = vmatprep.mubr.bf16.mxu0 0
        %2650 = vmatmul.mubr.bf16.gmra.mrb[0].mxu0 %v1590
        %v2651 = vpop.f32.mrb[0].mxu0
        %v2652 = vadd.f32 %v1675, %v2651
        %v2653 = vpop.f32.mrb[0].mxu0
        %v2654 = vadd.f32 %v1679, %v2653
        %v2655 = vpop.f32.mrb[0].mxu0
        %v2656 = vadd.f32 %v1675, %v2655
        %v2657 = vpop.f32.mrb[0].mxu0
        %v2658 = vadd.f32 %v1679, %v2657
        %2659 = vmatprep.mubr.bf16.mxu0 0
        %2660 = vmatmul.mubr.bf16.gmra.mrb[0].mxu0 %v1591
        %v2661 = vpop.f32.mrb[0].mxu0
        %v2662 = vadd.f32 %v1675, %v2661
        %v2663 = vpop.f32.mrb[0].mxu0
        %v2664 = vadd.f32 %v1679, %v2663
        %v2665 = vpop.f32.mrb[0].mxu0
        %v2666 = vadd.f32 %v1675, %v2665
        %v2667 = vpop.f32.mrb[0].mxu0
        %v2668 = vadd.f32 %v1679, %v2667
        %2669 = vmatprep.mubr.bf16.mxu0 0
        %2670 = vmatmul.mubr.bf16.gmra.mrb[0].mxu0 %v1592
        %v2671 = vpop.f32.mrb[0].mxu0
        %v2672 = vadd.f32 %v1675, %v2671
        %v2673 = vpop.f32.mrb[0].mxu0
        %v2674 = vadd.f32 %v1679, %v2673
        %v2675 = vpop.f32.mrb[0].mxu0
        %v2676 = vadd.f32 %v1675, %v2675
        %v2677 = vpop.f32.mrb[0].mxu0
        %v2678 = vadd.f32 %v1679, %v2677
        %2679 = vmatprep.mubr.bf16.mxu0 0
        %2680 = vmatmul.mubr.bf16.gmra.mrb[0].mxu0 %v1593
        %v2681 = vpop.f32.mrb[0].mxu0
        %v2682 = vadd.f32 %v1675, %v2681
        %v2683 = vpop.f32.mrb[0].mxu0
        %v2684 = vadd.f32 %v1679, %v2683
        %v2685 = vpop.f32.mrb[0].mxu0
        %v2686 = vadd.f32 %v1675, %v2685
        %v2687 = vpop.f32.mrb[0].mxu0
        %v2688 = vadd.f32 %v1679, %v2687
        %2689 = vmatprep.mubr.bf16.mxu0 0
        %2690 = vmatmul.mubr.bf16.gmra.mrb[0].mxu0 %v1594
        %v2691 = vpop.f32.mrb[0].mxu0
        %v2692 = vadd.f32 %v1675, %v2691
        %v2693 = vpop.f32.mrb[0].mxu0
        %v2694 = vadd.f32 %v1679, %v2693
        %v2695 = vpop.f32.mrb[0].mxu0
        %v2696 = vadd.f32 %v1675, %v2695
        %v2697 = vpop.f32.mrb[0].mxu0
        %v2698 = vadd.f32 %v1679, %v2697
        %2699 = vmatprep.mubr.bf16.mxu0 0
        %2700 = vmatmul.mubr.bf16.gmra.mrb[0].mxu0 %v1595
        %v2701 = vpop.f32.mrb[0].mxu0
        %v2702 = vadd.f32 %v1675, %v2701
        %v2703 = vpop.f32.mrb[0].mxu0
        %v2704 = vadd.f32 %v1679, %v2703
        %v2705 = vpop.f32.mrb[0].mxu0
        %v2706 = vadd.f32 %v1675, %v2705
        %v2707 = vpop.f32.mrb[0].mxu0
        %v2708 = vadd.f32 %v1679, %v2707
        %2709 = vmatprep.mubr.bf16.mxu0 0
        %2710 = vmatmul.mubr.bf16.gmra.mrb[0].mxu0 %v1596
        %v2711 = vpop.f32.mrb[0].mxu0
        %v2712 = vadd.f32 %v1675, %v2711
        %v2713 = vpop.f32.mrb[0].mxu0
        %v2714 = vadd.f32 %v1679, %v2713
        %v2715 = vpop.f32.mrb[0].mxu0
        %v2716 = vadd.f32 %v1675, %v2715
        %v2717 = vpop.f32.mrb[0].mxu0
        %v2718 = vadd.f32 %v1679, %v2717
        %2719 = vmatprep.mubr.bf16.mxu0 0
        %2720 = vmatmul.mubr.bf16.gmra.mrb[0].mxu0 %v1597
        %v2721 = vpop.f32.mrb[0].mxu0
        %v2722 = vadd.f32 %v1675, %v2721
        %v2723 = vpop.f32.mrb[0].mxu0
        %v2724 = vadd.f32 %v1679, %v2723
        %v2725 = vpop.f32.mrb[0].mxu0
        %v2726 = vadd.f32 %v1675, %v2725
        %v2727 = vpop.f32.mrb[0].mxu0
        %v2728 = vadd.f32 %v1679, %v2727
        %2729 = vdwg.mxu0
        %2730 = vmatprep.subr.bf16.mxu0 %v1901
        %2731 = vmatpush1.bf16.msra.mxu0 %v1900
        %2732 = vmatprep.subr.bf16.mxu0 %v1909
        %2733 = vmatpush1.bf16.msra.mxu0 %v1908
        %2734 = vmatprep.subr.bf16.mxu0 %v1917
        %2735 = vmatpush1.bf16.msra.mxu0 %v1916
        %2736 = vmatprep.subr.bf16.mxu0 %v1925
        %2737 = vmatpush1.bf16.msra.mxu0 %v1924
        %2738 = vmatprep.subr.bf16.mxu0 %v1933
        %2739 = vmatpush1.bf16.msra.mxu0 %v1932
        %2740 = vmatprep.subr.bf16.mxu0 %v1941
        %2741 = vmatpush1.bf16.msra.mxu0 %v1940
        %2742 = vmatprep.subr.bf16.mxu0 %v1949
        %2743 = vmatpush1.bf16.msra.mxu0 %v1948
        %2744 = vmatprep.subr.bf16.mxu0 %v1957
        %2745 = vmatpush1.bf16.msra.mxu0 %v1956
        %2746 = vmatprep.subr.bf16.mxu0 0
        %2747 = vmatpush1.bf16.msra.mxu0 0
        %2748 = vmatprep.subr.bf16.mxu0 0
        %2749 = vmatpush1.bf16.msra.mxu0 0
        %2750 = vmatprep.subr.bf16.mxu0 0
        %2751 = vmatpush1.bf16.msra.mxu0 0
        %2752 = vmatprep.subr.bf16.mxu0 0
        %2753 = vmatpush1.bf16.msra.mxu0 0
        %2754 = vmatprep.subr.bf16.mxu0 0
        %2755 = vmatpush1.bf16.msra.mxu0 0
        %2756 = vmatprep.subr.bf16.mxu0 0
        %2757 = vmatpush1.bf16.msra.mxu0 0
        %2758 = vmatprep.subr.bf16.mxu0 0
        %2759 = vmatpush1.bf16.msra.mxu0 0
        %2760 = vmatprep.subr.bf16.mxu0 0
        %2761 = vmatpush1.bf16.msra.mxu0 0
        %2762 = vmatprep.mubr.bf16.mxu0 0
        %2763 = vmatmul.mubr.bf16.gmra.mrb[0].mxu0 %v1566
        %v2764 = vpop.f32.mrb[0].mxu0
        %v2765 = vadd.f32 %v1683, %v2764
        %v2766 = vpop.f32.mrb[0].mxu0
        %v2767 = vadd.f32 %v1687, %v2766
        %v2768 = vpop.f32.mrb[0].mxu0
        %v2769 = vadd.f32 %v1683, %v2768
        %v2770 = vpop.f32.mrb[0].mxu0
        %v2771 = vadd.f32 %v1687, %v2770
        %2772 = vmatprep.mubr.bf16.mxu0 0
        %2773 = vmatmul.mubr.bf16.gmra.mrb[0].mxu0 %v1567
        %v2774 = vpop.f32.mrb[0].mxu0
        %v2775 = vadd.f32 %v1683, %v2774
        %v2776 = vpop.f32.mrb[0].mxu0
        %v2777 = vadd.f32 %v1687, %v2776
        %v2778 = vpop.f32.mrb[0].mxu0
        %v2779 = vadd.f32 %v1683, %v2778
        %v2780 = vpop.f32.mrb[0].mxu0
        %v2781 = vadd.f32 %v1687, %v2780
        %2782 = vmatprep.mubr.bf16.mxu0 0
        %2783 = vmatmul.mubr.bf16.gmra.mrb[0].mxu0 %v1568
        %v2784 = vpop.f32.mrb[0].mxu0
        %v2785 = vadd.f32 %v1683, %v2784
        %v2786 = vpop.f32.mrb[0].mxu0
        %v2787 = vadd.f32 %v1687, %v2786
        %v2788 = vpop.f32.mrb[0].mxu0
        %v2789 = vadd.f32 %v1683, %v2788
        %v2790 = vpop.f32.mrb[0].mxu0
        %v2791 = vadd.f32 %v1687, %v2790
        %2792 = vmatprep.mubr.bf16.mxu0 0
        %2793 = vmatmul.mubr.bf16.gmra.mrb[0].mxu0 %v1569
        %v2794 = vpop.f32.mrb[0].mxu0
        %v2795 = vadd.f32 %v1683, %v2794
        %v2796 = vpop.f32.mrb[0].mxu0
        %v2797 = vadd.f32 %v1687, %v2796
        %v2798 = vpop.f32.mrb[0].mxu0
        %v2799 = vadd.f32 %v1683, %v2798
        %v2800 = vpop.f32.mrb[0].mxu0
        %v2801 = vadd.f32 %v1687, %v2800
        %2802 = vmatprep.mubr.bf16.mxu0 0
        %2803 = vmatmul.mubr.bf16.gmra.mrb[0].mxu0 %v1570
        %v2804 = vpop.f32.mrb[0].mxu0
        %v2805 = vadd.f32 %v1683, %v2804
        %v2806 = vpop.f32.mrb[0].mxu0
        %v2807 = vadd.f32 %v1687, %v2806
        %v2808 = vpop.f32.mrb[0].mxu0
        %v2809 = vadd.f32 %v1683, %v2808
        %v2810 = vpop.f32.mrb[0].mxu0
        %v2811 = vadd.f32 %v1687, %v2810
        %2812 = vmatprep.mubr.bf16.mxu0 0
        %2813 = vmatmul.mubr.bf16.gmra.mrb[0].mxu0 %v1571
        %v2814 = vpop.f32.mrb[0].mxu0
        %v2815 = vadd.f32 %v1683, %v2814
        %v2816 = vpop.f32.mrb[0].mxu0
        %v2817 = vadd.f32 %v1687, %v2816
        %v2818 = vpop.f32.mrb[0].mxu0
        %v2819 = vadd.f32 %v1683, %v2818
        %v2820 = vpop.f32.mrb[0].mxu0
        %v2821 = vadd.f32 %v1687, %v2820
        %2822 = vmatprep.mubr.bf16.mxu0 0
        %2823 = vmatmul.mubr.bf16.gmra.mrb[0].mxu0 %v1572
        %v2824 = vpop.f32.mrb[0].mxu0
        %v2825 = vadd.f32 %v1683, %v2824
        %v2826 = vpop.f32.mrb[0].mxu0
        %v2827 = vadd.f32 %v1687, %v2826
        %v2828 = vpop.f32.mrb[0].mxu0
        %v2829 = vadd.f32 %v1683, %v2828
        %v2830 = vpop.f32.mrb[0].mxu0
        %v2831 = vadd.f32 %v1687, %v2830
        %2832 = vmatprep.mubr.bf16.mxu0 0
        %2833 = vmatmul.mubr.bf16.gmra.mrb[0].mxu0 %v1573
        %v2834 = vpop.f32.mrb[0].mxu0
        %v2835 = vadd.f32 %v1683, %v2834
        %v2836 = vpop.f32.mrb[0].mxu0
        %v2837 = vadd.f32 %v1687, %v2836
        %v2838 = vpop.f32.mrb[0].mxu0
        %v2839 = vadd.f32 %v1683, %v2838
        %v2840 = vpop.f32.mrb[0].mxu0
        %v2841 = vadd.f32 %v1687, %v2840
        %2842 = vmatprep.mubr.bf16.mxu0 0
        %2843 = vmatmul.mubr.bf16.gmra.mrb[0].mxu0 %v1574
        %v2844 = vpop.f32.mrb[0].mxu0
        %v2845 = vadd.f32 %v1683, %v2844
        %v2846 = vpop.f32.mrb[0].mxu0
        %v2847 = vadd.f32 %v1687, %v2846
        %v2848 = vpop.f32.mrb[0].mxu0
        %v2849 = vadd.f32 %v1683, %v2848
        %v2850 = vpop.f32.mrb[0].mxu0
        %v2851 = vadd.f32 %v1687, %v2850
        %2852 = vmatprep.mubr.bf16.mxu0 0
        %2853 = vmatmul.mubr.bf16.gmra.mrb[0].mxu0 %v1575
        %v2854 = vpop.f32.mrb[0].mxu0
        %v2855 = vadd.f32 %v1683, %v2854
        %v2856 = vpop.f32.mrb[0].mxu0
        %v2857 = vadd.f32 %v1687, %v2856
        %v2858 = vpop.f32.mrb[0].mxu0
        %v2859 = vadd.f32 %v1683, %v2858
        %v2860 = vpop.f32.mrb[0].mxu0
        %v2861 = vadd.f32 %v1687, %v2860
        %2862 = vmatprep.mubr.bf16.mxu0 0
        %2863 = vmatmul.mubr.bf16.gmra.mrb[0].mxu0 %v1576
        %v2864 = vpop.f32.mrb[0].mxu0
        %v2865 = vadd.f32 %v1683, %v2864
        %v2866 = vpop.f32.mrb[0].mxu0
        %v2867 = vadd.f32 %v1687, %v2866
        %v2868 = vpop.f32.mrb[0].mxu0
        %v2869 = vadd.f32 %v1683, %v2868
        %v2870 = vpop.f32.mrb[0].mxu0
        %v2871 = vadd.f32 %v1687, %v2870
        %2872 = vmatprep.mubr.bf16.mxu0 0
        %2873 = vmatmul.mubr.bf16.gmra.mrb[0].mxu0 %v1577
        %v2874 = vpop.f32.mrb[0].mxu0
        %v2875 = vadd.f32 %v1683, %v2874
        %v2876 = vpop.f32.mrb[0].mxu0
        %v2877 = vadd.f32 %v1687, %v2876
        %v2878 = vpop.f32.mrb[0].mxu0
        %v2879 = vadd.f32 %v1683, %v2878
        %v2880 = vpop.f32.mrb[0].mxu0
        %v2881 = vadd.f32 %v1687, %v2880
        %2882 = vmatprep.mubr.bf16.mxu0 0
        %2883 = vmatmul.mubr.bf16.gmra.mrb[0].mxu0 %v1578
        %v2884 = vpop.f32.mrb[0].mxu0
        %v2885 = vadd.f32 %v1683, %v2884
        %v2886 = vpop.f32.mrb[0].mxu0
        %v2887 = vadd.f32 %v1687, %v2886
        %v2888 = vpop.f32.mrb[0].mxu0
        %v2889 = vadd.f32 %v1683, %v2888
        %v2890 = vpop.f32.mrb[0].mxu0
        %v2891 = vadd.f32 %v1687, %v2890
        %2892 = vmatprep.mubr.bf16.mxu0 0
        %2893 = vmatmul.mubr.bf16.gmra.mrb[0].mxu0 %v1579
        %v2894 = vpop.f32.mrb[0].mxu0
        %v2895 = vadd.f32 %v1683, %v2894
        %v2896 = vpop.f32.mrb[0].mxu0
        %v2897 = vadd.f32 %v1687, %v2896
        %v2898 = vpop.f32.mrb[0].mxu0
        %v2899 = vadd.f32 %v1683, %v2898
        %v2900 = vpop.f32.mrb[0].mxu0
        %v2901 = vadd.f32 %v1687, %v2900
        %2902 = vmatprep.mubr.bf16.mxu0 0
        %2903 = vmatmul.mubr.bf16.gmra.mrb[0].mxu0 %v1580
        %v2904 = vpop.f32.mrb[0].mxu0
        %v2905 = vadd.f32 %v1683, %v2904
        %v2906 = vpop.f32.mrb[0].mxu0
        %v2907 = vadd.f32 %v1687, %v2906
        %v2908 = vpop.f32.mrb[0].mxu0
        %v2909 = vadd.f32 %v1683, %v2908
        %v2910 = vpop.f32.mrb[0].mxu0
        %v2911 = vadd.f32 %v1687, %v2910
        %2912 = vmatprep.mubr.bf16.mxu0 0
        %2913 = vmatmul.mubr.bf16.gmra.mrb[0].mxu0 %v1581
        %v2914 = vpop.f32.mrb[0].mxu0
        %v2915 = vadd.f32 %v1683, %v2914
        %v2916 = vpop.f32.mrb[0].mxu0
        %v2917 = vadd.f32 %v1687, %v2916
        %v2918 = vpop.f32.mrb[0].mxu0
        %v2919 = vadd.f32 %v1683, %v2918
        %v2920 = vpop.f32.mrb[0].mxu0
        %v2921 = vadd.f32 %v1687, %v2920
        %2922 = vmatprep.mubr.bf16.mxu0 0
        %2923 = vmatmul.mubr.bf16.gmra.mrb[0].mxu0 %v1582
        %v2924 = vpop.f32.mrb[0].mxu0
        %v2925 = vadd.f32 %v1683, %v2924
        %v2926 = vpop.f32.mrb[0].mxu0
        %v2927 = vadd.f32 %v1687, %v2926
        %v2928 = vpop.f32.mrb[0].mxu0
        %v2929 = vadd.f32 %v1683, %v2928
        %v2930 = vpop.f32.mrb[0].mxu0
        %v2931 = vadd.f32 %v1687, %v2930
        %2932 = vmatprep.mubr.bf16.mxu0 0
        %2933 = vmatmul.mubr.bf16.gmra.mrb[0].mxu0 %v1583
        %v2934 = vpop.f32.mrb[0].mxu0
        %v2935 = vadd.f32 %v1683, %v2934
        %v2936 = vpop.f32.mrb[0].mxu0
        %v2937 = vadd.f32 %v1687, %v2936
        %v2938 = vpop.f32.mrb[0].mxu0
        %v2939 = vadd.f32 %v1683, %v2938
        %v2940 = vpop.f32.mrb[0].mxu0
        %v2941 = vadd.f32 %v1687, %v2940
        %2942 = vmatprep.mubr.bf16.mxu0 0
        %2943 = vmatmul.mubr.bf16.gmra.mrb[0].mxu0 %v1584
        %v2944 = vpop.f32.mrb[0].mxu0
        %v2945 = vadd.f32 %v1683, %v2944
        %v2946 = vpop.f32.mrb[0].mxu0
        %v2947 = vadd.f32 %v1687, %v2946
        %v2948 = vpop.f32.mrb[0].mxu0
        %v2949 = vadd.f32 %v1683, %v2948
        %v2950 = vpop.f32.mrb[0].mxu0
        %v2951 = vadd.f32 %v1687, %v2950
        %2952 = vmatprep.mubr.bf16.mxu0 0
        %2953 = vmatmul.mubr.bf16.gmra.mrb[0].mxu0 %v1585
        %v2954 = vpop.f32.mrb[0].mxu0
        %v2955 = vadd.f32 %v1683, %v2954
        %v2956 = vpop.f32.mrb[0].mxu0
        %v2957 = vadd.f32 %v1687, %v2956
        %v2958 = vpop.f32.mrb[0].mxu0
        %v2959 = vadd.f32 %v1683, %v2958
        %v2960 = vpop.f32.mrb[0].mxu0
        %v2961 = vadd.f32 %v1687, %v2960
        %2962 = vmatprep.mubr.bf16.mxu0 0
        %2963 = vmatmul.mubr.bf16.gmra.mrb[0].mxu0 %v1586
        %v2964 = vpop.f32.mrb[0].mxu0
        %v2965 = vadd.f32 %v1683, %v2964
        %v2966 = vpop.f32.mrb[0].mxu0
        %v2967 = vadd.f32 %v1687, %v2966
        %v2968 = vpop.f32.mrb[0].mxu0
        %v2969 = vadd.f32 %v1683, %v2968
        %v2970 = vpop.f32.mrb[0].mxu0
        %v2971 = vadd.f32 %v1687, %v2970
        %2972 = vmatprep.mubr.bf16.mxu0 0
        %2973 = vmatmul.mubr.bf16.gmra.mrb[0].mxu0 %v1587
        %v2974 = vpop.f32.mrb[0].mxu0
        %v2975 = vadd.f32 %v1683, %v2974
        %v2976 = vpop.f32.mrb[0].mxu0
        %v2977 = vadd.f32 %v1687, %v2976
        %v2978 = vpop.f32.mrb[0].mxu0
        %v2979 = vadd.f32 %v1683, %v2978
        %v2980 = vpop.f32.mrb[0].mxu0
        %v2981 = vadd.f32 %v1687, %v2980
        %2982 = vmatprep.mubr.bf16.mxu0 0
        %2983 = vmatmul.mubr.bf16.gmra.mrb[0].mxu0 %v1588
        %v2984 = vpop.f32.mrb[0].mxu0
        %v2985 = vadd.f32 %v1683, %v2984
        %v2986 = vpop.f32.mrb[0].mxu0
        %v2987 = vadd.f32 %v1687, %v2986
        %v2988 = vpop.f32.mrb[0].mxu0
        %v2989 = vadd.f32 %v1683, %v2988
        %v2990 = vpop.f32.mrb[0].mxu0
        %v2991 = vadd.f32 %v1687, %v2990
        %2992 = vmatprep.mubr.bf16.mxu0 0
        %2993 = vmatmul.mubr.bf16.gmra.mrb[0].mxu0 %v1589
        %v2994 = vpop.f32.mrb[0].mxu0
        %v2995 = vadd.f32 %v1683, %v2994
        %v2996 = vpop.f32.mrb[0].mxu0
        %v2997 = vadd.f32 %v1687, %v2996
        %v2998 = vpop.f32.mrb[0].mxu0
        %v2999 = vadd.f32 %v1683, %v2998
        %v3000 = vpop.f32.mrb[0].mxu0
        %v3001 = vadd.f32 %v1687, %v3000
        %3002 = vmatprep.mubr.bf16.mxu0 0
        %3003 = vmatmul.mubr.bf16.gmra.mrb[0].mxu0 %v1590
        %v3004 = vpop.f32.mrb[0].mxu0
        %v3005 = vadd.f32 %v1683, %v3004
        %v3006 = vpop.f32.mrb[0].mxu0
        %v3007 = vadd.f32 %v1687, %v3006
        %v3008 = vpop.f32.mrb[0].mxu0
        %v3009 = vadd.f32 %v1683, %v3008
        %v3010 = vpop.f32.mrb[0].mxu0
        %v3011 = vadd.f32 %v1687, %v3010
        %3012 = vmatprep.mubr.bf16.mxu0 0
        %3013 = vmatmul.mubr.bf16.gmra.mrb[0].mxu0 %v1591
        %v3014 = vpop.f32.mrb[0].mxu0
        %v3015 = vadd.f32 %v1683, %v3014
        %v3016 = vpop.f32.mrb[0].mxu0
        %v3017 = vadd.f32 %v1687, %v3016
        %v3018 = vpop.f32.mrb[0].mxu0
        %v3019 = vadd.f32 %v1683, %v3018
        %v3020 = vpop.f32.mrb[0].mxu0
        %v3021 = vadd.f32 %v1687, %v3020
        %3022 = vmatprep.mubr.bf16.mxu0 0
        %3023 = vmatmul.mubr.bf16.gmra.mrb[0].mxu0 %v1592
        %v3024 = vpop.f32.mrb[0].mxu0
        %v3025 = vadd.f32 %v1683, %v3024
        %v3026 = vpop.f32.mrb[0].mxu0
        %v3027 = vadd.f32 %v1687, %v3026
        %v3028 = vpop.f32.mrb[0].mxu0
        %v3029 = vadd.f32 %v1683, %v3028
        %v3030 = vpop.f32.mrb[0].mxu0
        %v3031 = vadd.f32 %v1687, %v3030
        %3032 = vmatprep.mubr.bf16.mxu0 0
        %3033 = vmatmul.mubr.bf16.gmra.mrb[0].mxu0 %v1593
        %v3034 = vpop.f32.mrb[0].mxu0
        %v3035 = vadd.f32 %v1683, %v3034
        %v3036 = vpop.f32.mrb[0].mxu0
        %v3037 = vadd.f32 %v1687, %v3036
        %v3038 = vpop.f32.mrb[0].mxu0
        %v3039 = vadd.f32 %v1683, %v3038
        %v3040 = vpop.f32.mrb[0].mxu0
        %v3041 = vadd.f32 %v1687, %v3040
        %3042 = vmatprep.mubr.bf16.mxu0 0
        %3043 = vmatmul.mubr.bf16.gmra.mrb[0].mxu0 %v1594
        %v3044 = vpop.f32.mrb[0].mxu0
        %v3045 = vadd.f32 %v1683, %v3044
        %v3046 = vpop.f32.mrb[0].mxu0
        %v3047 = vadd.f32 %v1687, %v3046
        %v3048 = vpop.f32.mrb[0].mxu0
        %v3049 = vadd.f32 %v1683, %v3048
        %v3050 = vpop.f32.mrb[0].mxu0
        %v3051 = vadd.f32 %v1687, %v3050
        %3052 = vmatprep.mubr.bf16.mxu0 0
        %3053 = vmatmul.mubr.bf16.gmra.mrb[0].mxu0 %v1595
        %v3054 = vpop.f32.mrb[0].mxu0
        %v3055 = vadd.f32 %v1683, %v3054
        %v3056 = vpop.f32.mrb[0].mxu0
        %v3057 = vadd.f32 %v1687, %v3056
        %v3058 = vpop.f32.mrb[0].mxu0
        %v3059 = vadd.f32 %v1683, %v3058
        %v3060 = vpop.f32.mrb[0].mxu0
        %v3061 = vadd.f32 %v1687, %v3060
        %3062 = vmatprep.mubr.bf16.mxu0 0
        %3063 = vmatmul.mubr.bf16.gmra.mrb[0].mxu0 %v1596
        %v3064 = vpop.f32.mrb[0].mxu0
        %v3065 = vadd.f32 %v1683, %v3064
        %v3066 = vpop.f32.mrb[0].mxu0
        %v3067 = vadd.f32 %v1687, %v3066
        %v3068 = vpop.f32.mrb[0].mxu0
        %v3069 = vadd.f32 %v1683, %v3068
        %v3070 = vpop.f32.mrb[0].mxu0
        %v3071 = vadd.f32 %v1687, %v3070
        %3072 = vmatprep.mubr.bf16.mxu0 0
        %3073 = vmatmul.mubr.bf16.gmra.mrb[0].mxu0 %v1597
        %v3074 = vpop.f32.mrb[0].mxu0
        %v3075 = vadd.f32 %v1683, %v3074
        %v3076 = vpop.f32.mrb[0].mxu0
        %v3077 = vadd.f32 %v1687, %v3076
        %v3078 = vpop.f32.mrb[0].mxu0
        %v3079 = vadd.f32 %v1683, %v3078
        %v3080 = vpop.f32.mrb[0].mxu0
        %v3081 = vadd.f32 %v1687, %v3080
        %3082 = vdwg.mxu0
        %3083 = vmatprep.subr.bf16.mxu0 %v1903
        %3084 = vmatpush1.bf16.msra.mxu0 %v1902
        %3085 = vmatprep.subr.bf16.mxu0 %v1911
        %3086 = vmatpush1.bf16.msra.mxu0 %v1910
        %3087 = vmatprep.subr.bf16.mxu0 %v1919
        %3088 = vmatpush1.bf16.msra.mxu0 %v1918
        %3089 = vmatprep.subr.bf16.mxu0 %v1927
        %3090 = vmatpush1.bf16.msra.mxu0 %v1926
        %3091 = vmatprep.subr.bf16.mxu0 %v1935
        %3092 = vmatpush1.bf16.msra.mxu0 %v1934
        %3093 = vmatprep.subr.bf16.mxu0 %v1943
        %3094 = vmatpush1.bf16.msra.mxu0 %v1942
        %3095 = vmatprep.subr.bf16.mxu0 %v1951
        %3096 = vmatpush1.bf16.msra.mxu0 %v1950
        %3097 = vmatprep.subr.bf16.mxu0 %v1959
        %3098 = vmatpush1.bf16.msra.mxu0 %v1958
        %3099 = vmatprep.subr.bf16.mxu0 0
        %3100 = vmatpush1.bf16.msra.mxu0 0
        %3101 = vmatprep.subr.bf16.mxu0 0
        %3102 = vmatpush1.bf16.msra.mxu0 0
        %3103 = vmatprep.subr.bf16.mxu0 0
        %3104 = vmatpush1.bf16.msra.mxu0 0
        %3105 = vmatprep.subr.bf16.mxu0 0
        %3106 = vmatpush1.bf16.msra.mxu0 0
        %3107 = vmatprep.subr.bf16.mxu0 0
        %3108 = vmatpush1.bf16.msra.mxu0 0
        %3109 = vmatprep.subr.bf16.mxu0 0
        %3110 = vmatpush1.bf16.msra.mxu0 0
        %3111 = vmatprep.subr.bf16.mxu0 0
        %3112 = vmatpush1.bf16.msra.mxu0 0
        %3113 = vmatprep.subr.bf16.mxu0 0
        %3114 = vmatpush1.bf16.msra.mxu0 0
        %3115 = vmatprep.mubr.bf16.mxu0 0
        %3116 = vmatmul.mubr.bf16.gmra.mrb[0].mxu0 %v1566
        %v3117 = vpop.f32.mrb[0].mxu0
        %v3118 = vadd.f32 %v1691, %v3117
        %v3119 = vpop.f32.mrb[0].mxu0
        %v3120 = vadd.f32 %v1695, %v3119
        %v3121 = vpop.f32.mrb[0].mxu0
        %v3122 = vadd.f32 %v1691, %v3121
        %v3123 = vpop.f32.mrb[0].mxu0
        %v3124 = vadd.f32 %v1695, %v3123
        %3125 = vmatprep.mubr.bf16.mxu0 0
        %3126 = vmatmul.mubr.bf16.gmra.mrb[0].mxu0 %v1567
        %v3127 = vpop.f32.mrb[0].mxu0
        %v3128 = vadd.f32 %v1691, %v3127
        %v3129 = vpop.f32.mrb[0].mxu0
        %v3130 = vadd.f32 %v1695, %v3129
        %v3131 = vpop.f32.mrb[0].mxu0
        %v3132 = vadd.f32 %v1691, %v3131
        %v3133 = vpop.f32.mrb[0].mxu0
        %v3134 = vadd.f32 %v1695, %v3133
        %3135 = vmatprep.mubr.bf16.mxu0 0
        %3136 = vmatmul.mubr.bf16.gmra.mrb[0].mxu0 %v1568
        %v3137 = vpop.f32.mrb[0].mxu0
        %v3138 = vadd.f32 %v1691, %v3137
        %v3139 = vpop.f32.mrb[0].mxu0
        %v3140 = vadd.f32 %v1695, %v3139
        %v3141 = vpop.f32.mrb[0].mxu0
        %v3142 = vadd.f32 %v1691, %v3141
        %v3143 = vpop.f32.mrb[0].mxu0
        %v3144 = vadd.f32 %v1695, %v3143
        %3145 = vmatprep.mubr.bf16.mxu0 0
        %3146 = vmatmul.mubr.bf16.gmra.mrb[0].mxu0 %v1569
        %v3147 = vpop.f32.mrb[0].mxu0
        %v3148 = vadd.f32 %v1691, %v3147
        %v3149 = vpop.f32.mrb[0].mxu0
        %v3150 = vadd.f32 %v1695, %v3149
        %v3151 = vpop.f32.mrb[0].mxu0
        %v3152 = vadd.f32 %v1691, %v3151
        %v3153 = vpop.f32.mrb[0].mxu0
        %v3154 = vadd.f32 %v1695, %v3153
        %3155 = vmatprep.mubr.bf16.mxu0 0
        %3156 = vmatmul.mubr.bf16.gmra.mrb[0].mxu0 %v1570
        %v3157 = vpop.f32.mrb[0].mxu0
        %v3158 = vadd.f32 %v1691, %v3157
        %v3159 = vpop.f32.mrb[0].mxu0
        %v3160 = vadd.f32 %v1695, %v3159
        %v3161 = vpop.f32.mrb[0].mxu0
        %v3162 = vadd.f32 %v1691, %v3161
        %v3163 = vpop.f32.mrb[0].mxu0
        %v3164 = vadd.f32 %v1695, %v3163
        %3165 = vmatprep.mubr.bf16.mxu0 0
        %3166 = vmatmul.mubr.bf16.gmra.mrb[0].mxu0 %v1571
        %v3167 = vpop.f32.mrb[0].mxu0
        %v3168 = vadd.f32 %v1691, %v3167
        %v3169 = vpop.f32.mrb[0].mxu0
        %v3170 = vadd.f32 %v1695, %v3169
        %v3171 = vpop.f32.mrb[0].mxu0
        %v3172 = vadd.f32 %v1691, %v3171
        %v3173 = vpop.f32.mrb[0].mxu0
        %v3174 = vadd.f32 %v1695, %v3173
        %3175 = vmatprep.mubr.bf16.mxu0 0
        %3176 = vmatmul.mubr.bf16.gmra.mrb[0].mxu0 %v1572
        %v3177 = vpop.f32.mrb[0].mxu0
        %v3178 = vadd.f32 %v1691, %v3177
        %v3179 = vpop.f32.mrb[0].mxu0
        %v3180 = vadd.f32 %v1695, %v3179
        %v3181 = vpop.f32.mrb[0].mxu0
        %v3182 = vadd.f32 %v1691, %v3181
        %v3183 = vpop.f32.mrb[0].mxu0
        %v3184 = vadd.f32 %v1695, %v3183
        %3185 = vmatprep.mubr.bf16.mxu0 0
        %3186 = vmatmul.mubr.bf16.gmra.mrb[0].mxu0 %v1573
        %v3187 = vpop.f32.mrb[0].mxu0
        %v3188 = vadd.f32 %v1691, %v3187
        %v3189 = vpop.f32.mrb[0].mxu0
        %v3190 = vadd.f32 %v1695, %v3189
        %v3191 = vpop.f32.mrb[0].mxu0
        %v3192 = vadd.f32 %v1691, %v3191
        %v3193 = vpop.f32.mrb[0].mxu0
        %v3194 = vadd.f32 %v1695, %v3193
        %3195 = vmatprep.mubr.bf16.mxu0 0
        %3196 = vmatmul.mubr.bf16.gmra.mrb[0].mxu0 %v1574
        %v3197 = vpop.f32.mrb[0].mxu0
        %v3198 = vadd.f32 %v1691, %v3197
        %v3199 = vpop.f32.mrb[0].mxu0
        %v3200 = vadd.f32 %v1695, %v3199
        %v3201 = vpop.f32.mrb[0].mxu0
        %v3202 = vadd.f32 %v1691, %v3201
        %v3203 = vpop.f32.mrb[0].mxu0
        %v3204 = vadd.f32 %v1695, %v3203
        %3205 = vmatprep.mubr.bf16.mxu0 0
        %3206 = vmatmul.mubr.bf16.gmra.mrb[0].mxu0 %v1575
        %v3207 = vpop.f32.mrb[0].mxu0
        %v3208 = vadd.f32 %v1691, %v3207
        %v3209 = vpop.f32.mrb[0].mxu0
        %v3210 = vadd.f32 %v1695, %v3209
        %v3211 = vpop.f32.mrb[0].mxu0
        %v3212 = vadd.f32 %v1691, %v3211
        %v3213 = vpop.f32.mrb[0].mxu0
        %v3214 = vadd.f32 %v1695, %v3213
        %3215 = vmatprep.mubr.bf16.mxu0 0
        %3216 = vmatmul.mubr.bf16.gmra.mrb[0].mxu0 %v1576
        %v3217 = vpop.f32.mrb[0].mxu0
        %v3218 = vadd.f32 %v1691, %v3217
        %v3219 = vpop.f32.mrb[0].mxu0
        %v3220 = vadd.f32 %v1695, %v3219
        %v3221 = vpop.f32.mrb[0].mxu0
        %v3222 = vadd.f32 %v1691, %v3221
        %v3223 = vpop.f32.mrb[0].mxu0
        %v3224 = vadd.f32 %v1695, %v3223
        %3225 = vmatprep.mubr.bf16.mxu0 0
        %3226 = vmatmul.mubr.bf16.gmra.mrb[0].mxu0 %v1577
        %v3227 = vpop.f32.mrb[0].mxu0
        %v3228 = vadd.f32 %v1691, %v3227
        %v3229 = vpop.f32.mrb[0].mxu0
        %v3230 = vadd.f32 %v1695, %v3229
        %v3231 = vpop.f32.mrb[0].mxu0
        %v3232 = vadd.f32 %v1691, %v3231
        %v3233 = vpop.f32.mrb[0].mxu0
        %v3234 = vadd.f32 %v1695, %v3233
        %3235 = vmatprep.mubr.bf16.mxu0 0
        %3236 = vmatmul.mubr.bf16.gmra.mrb[0].mxu0 %v1578
        %v3237 = vpop.f32.mrb[0].mxu0
        %v3238 = vadd.f32 %v1691, %v3237
        %v3239 = vpop.f32.mrb[0].mxu0
        %v3240 = vadd.f32 %v1695, %v3239
        %v3241 = vpop.f32.mrb[0].mxu0
        %v3242 = vadd.f32 %v1691, %v3241
        %v3243 = vpop.f32.mrb[0].mxu0
        %v3244 = vadd.f32 %v1695, %v3243
        %3245 = vmatprep.mubr.bf16.mxu0 0
        %3246 = vmatmul.mubr.bf16.gmra.mrb[0].mxu0 %v1579
        %v3247 = vpop.f32.mrb[0].mxu0
        %v3248 = vadd.f32 %v1691, %v3247
        %v3249 = vpop.f32.mrb[0].mxu0
        %v3250 = vadd.f32 %v1695, %v3249
        %v3251 = vpop.f32.mrb[0].mxu0
        %v3252 = vadd.f32 %v1691, %v3251
        %v3253 = vpop.f32.mrb[0].mxu0
        %v3254 = vadd.f32 %v1695, %v3253
        %3255 = vmatprep.mubr.bf16.mxu0 0
        %3256 = vmatmul.mubr.bf16.gmra.mrb[0].mxu0 %v1580
        %v3257 = vpop.f32.mrb[0].mxu0
        %v3258 = vadd.f32 %v1691, %v3257
        %v3259 = vpop.f32.mrb[0].mxu0
        %v3260 = vadd.f32 %v1695, %v3259
        %v3261 = vpop.f32.mrb[0].mxu0
        %v3262 = vadd.f32 %v1691, %v3261
        %v3263 = vpop.f32.mrb[0].mxu0
        %v3264 = vadd.f32 %v1695, %v3263
        %3265 = vmatprep.mubr.bf16.mxu0 0
        %3266 = vmatmul.mubr.bf16.gmra.mrb[0].mxu0 %v1581
        %v3267 = vpop.f32.mrb[0].mxu0
        %v3268 = vadd.f32 %v1691, %v3267
        %v3269 = vpop.f32.mrb[0].mxu0
        %v3270 = vadd.f32 %v1695, %v3269
        %v3271 = vpop.f32.mrb[0].mxu0
        %v3272 = vadd.f32 %v1691, %v3271
        %v3273 = vpop.f32.mrb[0].mxu0
        %v3274 = vadd.f32 %v1695, %v3273
        %3275 = vmatprep.mubr.bf16.mxu0 0
        %3276 = vmatmul.mubr.bf16.gmra.mrb[0].mxu0 %v1582
        %v3277 = vpop.f32.mrb[0].mxu0
        %v3278 = vadd.f32 %v1691, %v3277
        %v3279 = vpop.f32.mrb[0].mxu0
        %v3280 = vadd.f32 %v1695, %v3279
        %v3281 = vpop.f32.mrb[0].mxu0
        %v3282 = vadd.f32 %v1691, %v3281
        %v3283 = vpop.f32.mrb[0].mxu0
        %v3284 = vadd.f32 %v1695, %v3283
        %3285 = vmatprep.mubr.bf16.mxu0 0
        %3286 = vmatmul.mubr.bf16.gmra.mrb[0].mxu0 %v1583
        %v3287 = vpop.f32.mrb[0].mxu0
        %v3288 = vadd.f32 %v1691, %v3287
        %v3289 = vpop.f32.mrb[0].mxu0
        %v3290 = vadd.f32 %v1695, %v3289
        %v3291 = vpop.f32.mrb[0].mxu0
        %v3292 = vadd.f32 %v1691, %v3291
        %v3293 = vpop.f32.mrb[0].mxu0
        %v3294 = vadd.f32 %v1695, %v3293
        %3295 = vmatprep.mubr.bf16.mxu0 0
        %3296 = vmatmul.mubr.bf16.gmra.mrb[0].mxu0 %v1584
        %v3297 = vpop.f32.mrb[0].mxu0
        %v3298 = vadd.f32 %v1691, %v3297
        %v3299 = vpop.f32.mrb[0].mxu0
        %v3300 = vadd.f32 %v1695, %v3299
        %v3301 = vpop.f32.mrb[0].mxu0
        %v3302 = vadd.f32 %v1691, %v3301
        %v3303 = vpop.f32.mrb[0].mxu0
        %v3304 = vadd.f32 %v1695, %v3303
        %3305 = vmatprep.mubr.bf16.mxu0 0
        %3306 = vmatmul.mubr.bf16.gmra.mrb[0].mxu0 %v1585
        %v3307 = vpop.f32.mrb[0].mxu0
        %v3308 = vadd.f32 %v1691, %v3307
        %v3309 = vpop.f32.mrb[0].mxu0
        %v3310 = vadd.f32 %v1695, %v3309
        %v3311 = vpop.f32.mrb[0].mxu0
        %v3312 = vadd.f32 %v1691, %v3311
        %v3313 = vpop.f32.mrb[0].mxu0
        %v3314 = vadd.f32 %v1695, %v3313
        %3315 = vmatprep.mubr.bf16.mxu0 0
        %3316 = vmatmul.mubr.bf16.gmra.mrb[0].mxu0 %v1586
        %v3317 = vpop.f32.mrb[0].mxu0
        %v3318 = vadd.f32 %v1691, %v3317
        %v3319 = vpop.f32.mrb[0].mxu0
        %v3320 = vadd.f32 %v1695, %v3319
        %v3321 = vpop.f32.mrb[0].mxu0
        %v3322 = vadd.f32 %v1691, %v3321
        %v3323 = vpop.f32.mrb[0].mxu0
        %v3324 = vadd.f32 %v1695, %v3323
        %3325 = vmatprep.mubr.bf16.mxu0 0
        %3326 = vmatmul.mubr.bf16.gmra.mrb[0].mxu0 %v1587
        %v3327 = vpop.f32.mrb[0].mxu0
        %v3328 = vadd.f32 %v1691, %v3327
        %v3329 = vpop.f32.mrb[0].mxu0
        %v3330 = vadd.f32 %v1695, %v3329
        %v3331 = vpop.f32.mrb[0].mxu0
        %v3332 = vadd.f32 %v1691, %v3331
        %v3333 = vpop.f32.mrb[0].mxu0
        %v3334 = vadd.f32 %v1695, %v3333
        %3335 = vmatprep.mubr.bf16.mxu0 0
        %3336 = vmatmul.mubr.bf16.gmra.mrb[0].mxu0 %v1588
        %v3337 = vpop.f32.mrb[0].mxu0
        %v3338 = vadd.f32 %v1691, %v3337
        %v3339 = vpop.f32.mrb[0].mxu0
        %v3340 = vadd.f32 %v1695, %v3339
        %v3341 = vpop.f32.mrb[0].mxu0
        %v3342 = vadd.f32 %v1691, %v3341
        %v3343 = vpop.f32.mrb[0].mxu0
        %v3344 = vadd.f32 %v1695, %v3343
        %3345 = vmatprep.mubr.bf16.mxu0 0
        %3346 = vmatmul.mubr.bf16.gmra.mrb[0].mxu0 %v1589
        %v3347 = vpop.f32.mrb[0].mxu0
        %v3348 = vadd.f32 %v1691, %v3347
        %v3349 = vpop.f32.mrb[0].mxu0
        %v3350 = vadd.f32 %v1695, %v3349
        %v3351 = vpop.f32.mrb[0].mxu0
        %v3352 = vadd.f32 %v1691, %v3351
        %v3353 = vpop.f32.mrb[0].mxu0
        %v3354 = vadd.f32 %v1695, %v3353
        %3355 = vmatprep.mubr.bf16.mxu0 0
        %3356 = vmatmul.mubr.bf16.gmra.mrb[0].mxu0 %v1590
        %v3357 = vpop.f32.mrb[0].mxu0
        %v3358 = vadd.f32 %v1691, %v3357
        %v3359 = vpop.f32.mrb[0].mxu0
        %v3360 = vadd.f32 %v1695, %v3359
        %v3361 = vpop.f32.mrb[0].mxu0
        %v3362 = vadd.f32 %v1691, %v3361
        %v3363 = vpop.f32.mrb[0].mxu0
        %v3364 = vadd.f32 %v1695, %v3363
        %3365 = vmatprep.mubr.bf16.mxu0 0
        %3366 = vmatmul.mubr.bf16.gmra.mrb[0].mxu0 %v1591
        %v3367 = vpop.f32.mrb[0].mxu0
        %v3368 = vadd.f32 %v1691, %v3367
        %v3369 = vpop.f32.mrb[0].mxu0
        %v3370 = vadd.f32 %v1695, %v3369
        %v3371 = vpop.f32.mrb[0].mxu0
        %v3372 = vadd.f32 %v1691, %v3371
        %v3373 = vpop.f32.mrb[0].mxu0
        %v3374 = vadd.f32 %v1695, %v3373
        %3375 = vmatprep.mubr.bf16.mxu0 0
        %3376 = vmatmul.mubr.bf16.gmra.mrb[0].mxu0 %v1592
        %v3377 = vpop.f32.mrb[0].mxu0
        %v3378 = vadd.f32 %v1691, %v3377
        %v3379 = vpop.f32.mrb[0].mxu0
        %v3380 = vadd.f32 %v1695, %v3379
        %v3381 = vpop.f32.mrb[0].mxu0
        %v3382 = vadd.f32 %v1691, %v3381
        %v3383 = vpop.f32.mrb[0].mxu0
        %v3384 = vadd.f32 %v1695, %v3383
        %3385 = vmatprep.mubr.bf16.mxu0 0
        %3386 = vmatmul.mubr.bf16.gmra.mrb[0].mxu0 %v1593
        %v3387 = vpop.f32.mrb[0].mxu0
        %v3388 = vadd.f32 %v1691, %v3387
        %v3389 = vpop.f32.mrb[0].mxu0
        %v3390 = vadd.f32 %v1695, %v3389
        %v3391 = vpop.f32.mrb[0].mxu0
        %v3392 = vadd.f32 %v1691, %v3391
        %v3393 = vpop.f32.mrb[0].mxu0
        %v3394 = vadd.f32 %v1695, %v3393
        %3395 = vmatprep.mubr.bf16.mxu0 0
        %3396 = vmatmul.mubr.bf16.gmra.mrb[0].mxu0 %v1594
        %v3397 = vpop.f32.mrb[0].mxu0
        %v3398 = vadd.f32 %v1691, %v3397
        %v3399 = vpop.f32.mrb[0].mxu0
        %v3400 = vadd.f32 %v1695, %v3399
        %v3401 = vpop.f32.mrb[0].mxu0
        %v3402 = vadd.f32 %v1691, %v3401
        %v3403 = vpop.f32.mrb[0].mxu0
        %v3404 = vadd.f32 %v1695, %v3403
        %3405 = vmatprep.mubr.bf16.mxu0 0
        %3406 = vmatmul.mubr.bf16.gmra.mrb[0].mxu0 %v1595
        %v3407 = vpop.f32.mrb[0].mxu0
        %v3408 = vadd.f32 %v1691, %v3407
        %v3409 = vpop.f32.mrb[0].mxu0
        %v3410 = vadd.f32 %v1695, %v3409
        %v3411 = vpop.f32.mrb[0].mxu0
        %v3412 = vadd.f32 %v1691, %v3411
        %v3413 = vpop.f32.mrb[0].mxu0
        %v3414 = vadd.f32 %v1695, %v3413
        %3415 = vmatprep.mubr.bf16.mxu0 0
        %3416 = vmatmul.mubr.bf16.gmra.mrb[0].mxu0 %v1596
        %v3417 = vpop.f32.mrb[0].mxu0
        %v3418 = vadd.f32 %v1691, %v3417
        %v3419 = vpop.f32.mrb[0].mxu0
        %v3420 = vadd.f32 %v1695, %v3419
        %v3421 = vpop.f32.mrb[0].mxu0
        %v3422 = vadd.f32 %v1691, %v3421
        %v3423 = vpop.f32.mrb[0].mxu0
        %v3424 = vadd.f32 %v1695, %v3423
        %3425 = vmatprep.mubr.bf16.mxu0 0
        %3426 = vmatmul.mubr.bf16.gmra.mrb[0].mxu0 %v1597
        %v3427 = vpop.f32.mrb[0].mxu0
        %v3428 = vadd.f32 %v1691, %v3427
        %v3429 = vpop.f32.mrb[0].mxu0
        %v3430 = vadd.f32 %v1695, %v3429
        %v3431 = vpop.f32.mrb[0].mxu0
        %v3432 = vadd.f32 %v1691, %v3431
        %v3433 = vpop.f32.mrb[0].mxu0
        %v3434 = vadd.f32 %v1695, %v3433
        %3435 = vdwg.mxu0
        %v3436 = vld [vmem:[#allocation2] sm:$0xff]
        %v3437 = vmax.f32 %v2059, %v2063
        %v3438 = vmax.f32 %v3437, %v2069
        %v3439 = vmax.f32 %v3438, %v2073
        %v3440 = vmax.f32 %v3439, %v2079
        %v3441 = vmax.f32 %v3440, %v2083
        %v3442 = vmax.f32 %v3441, %v2089
        %v3443 = vmax.f32 %v3442, %v2093
        %v3444 = vmax.f32 %v3443, %v2099
        %v3445 = vmax.f32 %v3444, %v2103
        %v3446 = vmax.f32 %v3445, %v2109
        %v3447 = vmax.f32 %v3446, %v2113
        %v3448 = vmax.f32 %v3447, %v2119
        %v3449 = vmax.f32 %v3448, %v2123
        %v3450 = vmax.f32 %v3449, %v2129
        %v3451 = vmax.f32 %v3450, %v2133
        %v3452 = vmax.f32 %v3451, %v2139
        %v3453 = vmax.f32 %v3452, %v2143
        %v3454 = vmax.f32 %v3453, %v2149
        %v3455 = vmax.f32 %v3454, %v2153
        %v3456 = vmax.f32 %v3455, %v2159
        %v3457 = vmax.f32 %v3456, %v2163
        %v3458 = vmax.f32 %v3457, %v2169
        %v3459 = vmax.f32 %v3458, %v2173
        %v3460 = vmax.f32 %v3459, %v2179
        %v3461 = vmax.f32 %v3460, %v2183
        %v3462 = vmax.f32 %v3461, %v2189
        %v3463 = vmax.f32 %v3462, %v2193
        %v3464 = vmax.f32 %v3463, %v2199
        %v3465 = vmax.f32 %v3464, %v2203
        %v3466 = vmax.f32 %v3465, %v2209
        %v3467 = vmax.f32 %v3466, %v2213
        %v3468 = vmax.f32 %v3467, %v2219
        %v3469 = vmax.f32 %v3468, %v2223
        %v3470 = vmax.f32 %v3469, %v2229
        %v3471 = vmax.f32 %v3470, %v2233
        %v3472 = vmax.f32 %v3471, %v2239
        %v3473 = vmax.f32 %v3472, %v2243
        %v3474 = vmax.f32 %v3473, %v2249
        %v3475 = vmax.f32 %v3474, %v2253
        %v3476 = vmax.f32 %v3475, %v2259
        %v3477 = vmax.f32 %v3476, %v2263
        %v3478 = vmax.f32 %v3477, %v2269
        %v3479 = vmax.f32 %v3478, %v2273
        %v3480 = vmax.f32 %v3479, %v2279
        %v3481 = vmax.f32 %v3480, %v2283
        %v3482 = vmax.f32 %v3481, %v2289
        %v3483 = vmax.f32 %v3482, %v2293
        %v3484 = vmax.f32 %v3483, %v2299
        %v3485 = vmax.f32 %v3484, %v2303
        %v3486 = vmax.f32 %v3485, %v2309
        %v3487 = vmax.f32 %v3486, %v2313
        %v3488 = vmax.f32 %v3487, %v2319
        %v3489 = vmax.f32 %v3488, %v2323
        %v3490 = vmax.f32 %v3489, %v2329
        %v3491 = vmax.f32 %v3490, %v2333
        %v3492 = vmax.f32 %v3491, %v2339
        %v3493 = vmax.f32 %v3492, %v2343
        %v3494 = vmax.f32 %v3493, %v2349
        %v3495 = vmax.f32 %v3494, %v2353
        %v3496 = vmax.f32 %v3495, %v2359
        %v3497 = vmax.f32 %v3496, %v2363
        %v3498 = vmax.f32 %v3497, %v2369
        %v3499 = vmax.f32 %v3498, %v2373
        %v3500 = vrot.slane %v3499, 4
        %v3501 = vmax.f32 %v3499, %v3500
        %v3502 = vrot.slane %v3501, 2
        %v3503 = vmax.f32 %v3501, %v3502
        %v3504 = vrot.slane %v3503, 1
        %v3505 = vmax.f32 %v3503, %v3504
        %v3506 = vmax.f32 %v2061, %v2065
        %v3507 = vmax.f32 %v3506, %v2071
        %v3508 = vmax.f32 %v3507, %v2075
        %v3509 = vmax.f32 %v3508, %v2081
        %v3510 = vmax.f32 %v3509, %v2085
        %v3511 = vmax.f32 %v3510, %v2091
        %v3512 = vmax.f32 %v3511, %v2095
        %v3513 = vmax.f32 %v3512, %v2101
        %v3514 = vmax.f32 %v3513, %v2105
        %v3515 = vmax.f32 %v3514, %v2111
        %v3516 = vmax.f32 %v3515, %v2115
        %v3517 = vmax.f32 %v3516, %v2121
        %v3518 = vmax.f32 %v3517, %v2125
        %v3519 = vmax.f32 %v3518, %v2131
        %v3520 = vmax.f32 %v3519, %v2135
        %v3521 = vmax.f32 %v3520, %v2141
        %v3522 = vmax.f32 %v3521, %v2145
        %v3523 = vmax.f32 %v3522, %v2151
        %v3524 = vmax.f32 %v3523, %v2155
        %v3525 = vmax.f32 %v3524, %v2161
        %v3526 = vmax.f32 %v3525, %v2165
        %v3527 = vmax.f32 %v3526, %v2171
        %v3528 = vmax.f32 %v3527, %v2175
        %v3529 = vmax.f32 %v3528, %v2181
        %v3530 = vmax.f32 %v3529, %v2185
        %v3531 = vmax.f32 %v3530, %v2191
        %v3532 = vmax.f32 %v3531, %v2195
        %v3533 = vmax.f32 %v3532, %v2201
        %v3534 = vmax.f32 %v3533, %v2205
        %v3535 = vmax.f32 %v3534, %v2211
        %v3536 = vmax.f32 %v3535, %v2215
        %v3537 = vmax.f32 %v3536, %v2221
        %v3538 = vmax.f32 %v3537, %v2225
        %v3539 = vmax.f32 %v3538, %v2231
        %v3540 = vmax.f32 %v3539, %v2235
        %v3541 = vmax.f32 %v3540, %v2241
        %v3542 = vmax.f32 %v3541, %v2245
        %v3543 = vmax.f32 %v3542, %v2251
        %v3544 = vmax.f32 %v3543, %v2255
        %v3545 = vmax.f32 %v3544, %v2261
        %v3546 = vmax.f32 %v3545, %v2265
        %v3547 = vmax.f32 %v3546, %v2271
        %v3548 = vmax.f32 %v3547, %v2275
        %v3549 = vmax.f32 %v3548, %v2281
        %v3550 = vmax.f32 %v3549, %v2285
        %v3551 = vmax.f32 %v3550, %v2291
        %v3552 = vmax.f32 %v3551, %v2295
        %v3553 = vmax.f32 %v3552, %v2301
        %v3554 = vmax.f32 %v3553, %v2305
        %v3555 = vmax.f32 %v3554, %v2311
        %v3556 = vmax.f32 %v3555, %v2315
        %v3557 = vmax.f32 %v3556, %v2321
        %v3558 = vmax.f32 %v3557, %v2325
        %v3559 = vmax.f32 %v3558, %v2331
        %v3560 = vmax.f32 %v3559, %v2335
        %v3561 = vmax.f32 %v3560, %v2341
        %v3562 = vmax.f32 %v3561, %v2345
        %v3563 = vmax.f32 %v3562, %v2351
        %v3564 = vmax.f32 %v3563, %v2355
        %v3565 = vmax.f32 %v3564, %v2361
        %v3566 = vmax.f32 %v3565, %v2365
        %v3567 = vmax.f32 %v3566, %v2371
        %v3568 = vmax.f32 %v3567, %v2375
        %v3569 = vrot.slane %v3568, 4
        %v3570 = vmax.f32 %v3568, %v3569
        %v3571 = vrot.slane %v3570, 2
        %v3572 = vmax.f32 %v3570, %v3571
        %v3573 = vrot.slane %v3572, 1
        %v3574 = vmax.f32 %v3572, %v3573
        %v3575 = vmax.f32 %v2412, %v2416
        %v3576 = vmax.f32 %v3575, %v2422
        %v3577 = vmax.f32 %v3576, %v2426
        %v3578 = vmax.f32 %v3577, %v2432
        %v3579 = vmax.f32 %v3578, %v2436
        %v3580 = vmax.f32 %v3579, %v2442
        %v3581 = vmax.f32 %v3580, %v2446
        %v3582 = vmax.f32 %v3581, %v2452
        %v3583 = vmax.f32 %v3582, %v2456
        %v3584 = vmax.f32 %v3583, %v2462
        %v3585 = vmax.f32 %v3584, %v2466
        %v3586 = vmax.f32 %v3585, %v2472
        %v3587 = vmax.f32 %v3586, %v2476
        %v3588 = vmax.f32 %v3587, %v2482
        %v3589 = vmax.f32 %v3588, %v2486
        %v3590 = vmax.f32 %v3589, %v2492
        %v3591 = vmax.f32 %v3590, %v2496
        %v3592 = vmax.f32 %v3591, %v2502
        %v3593 = vmax.f32 %v3592, %v2506
        %v3594 = vmax.f32 %v3593, %v2512
        %v3595 = vmax.f32 %v3594, %v2516
        %v3596 = vmax.f32 %v3595, %v2522
        %v3597 = vmax.f32 %v3596, %v2526
        %v3598 = vmax.f32 %v3597, %v2532
        %v3599 = vmax.f32 %v3598, %v2536
        %v3600 = vmax.f32 %v3599, %v2542
        %v3601 = vmax.f32 %v3600, %v2546
        %v3602 = vmax.f32 %v3601, %v2552
        %v3603 = vmax.f32 %v3602, %v2556
        %v3604 = vmax.f32 %v3603, %v2562
        %v3605 = vmax.f32 %v3604, %v2566
        %v3606 = vmax.f32 %v3605, %v2572
        %v3607 = vmax.f32 %v3606, %v2576
        %v3608 = vmax.f32 %v3607, %v2582
        %v3609 = vmax.f32 %v3608, %v2586
        %v3610 = vmax.f32 %v3609, %v2592
        %v3611 = vmax.f32 %v3610, %v2596
        %v3612 = vmax.f32 %v3611, %v2602
        %v3613 = vmax.f32 %v3612, %v2606
        %v3614 = vmax.f32 %v3613, %v2612
        %v3615 = vmax.f32 %v3614, %v2616
        %v3616 = vmax.f32 %v3615, %v2622
        %v3617 = vmax.f32 %v3616, %v2626
        %v3618 = vmax.f32 %v3617, %v2632
        %v3619 = vmax.f32 %v3618, %v2636
        %v3620 = vmax.f32 %v3619, %v2642
        %v3621 = vmax.f32 %v3620, %v2646
        %v3622 = vmax.f32 %v3621, %v2652
        %v3623 = vmax.f32 %v3622, %v2656
        %v3624 = vmax.f32 %v3623, %v2662
        %v3625 = vmax.f32 %v3624, %v2666
        %v3626 = vmax.f32 %v3625, %v2672
        %v3627 = vmax.f32 %v3626, %v2676
        %v3628 = vmax.f32 %v3627, %v2682
        %v3629 = vmax.f32 %v3628, %v2686
        %v3630 = vmax.f32 %v3629, %v2692
        %v3631 = vmax.f32 %v3630, %v2696
        %v3632 = vmax.f32 %v3631, %v2702
        %v3633 = vmax.f32 %v3632, %v2706
        %v3634 = vmax.f32 %v3633, %v2712
        %v3635 = vmax.f32 %v3634, %v2716
        %v3636 = vmax.f32 %v3635, %v2722
        %v3637 = vmax.f32 %v3636, %v2726
        %v3638 = vrot.slane %v3637, 4
        %v3639 = vmax.f32 %v3637, %v3638
        %v3640 = vrot.slane %v3639, 2
        %v3641 = vmax.f32 %v3639, %v3640
        %v3642 = vrot.slane %v3641, 1
        %v3643 = vmax.f32 %v3641, %v3642
        %v3644 = vmax.f32 %v2414, %v2418
        %v3645 = vmax.f32 %v3644, %v2424
        %v3646 = vmax.f32 %v3645, %v2428
        %v3647 = vmax.f32 %v3646, %v2434
        %v3648 = vmax.f32 %v3647, %v2438
        %v3649 = vmax.f32 %v3648, %v2444
        %v3650 = vmax.f32 %v3649, %v2448
        %v3651 = vmax.f32 %v3650, %v2454
        %v3652 = vmax.f32 %v3651, %v2458
        %v3653 = vmax.f32 %v3652, %v2464
        %v3654 = vmax.f32 %v3653, %v2468
        %v3655 = vmax.f32 %v3654, %v2474
        %v3656 = vmax.f32 %v3655, %v2478
        %v3657 = vmax.f32 %v3656, %v2484
        %v3658 = vmax.f32 %v3657, %v2488
        %v3659 = vmax.f32 %v3658, %v2494
        %v3660 = vmax.f32 %v3659, %v2498
        %v3661 = vmax.f32 %v3660, %v2504
        %v3662 = vmax.f32 %v3661, %v2508
        %v3663 = vmax.f32 %v3662, %v2514
        %v3664 = vmax.f32 %v3663, %v2518
        %v3665 = vmax.f32 %v3664, %v2524
        %v3666 = vmax.f32 %v3665, %v2528
        %v3667 = vmax.f32 %v3666, %v2534
        %v3668 = vmax.f32 %v3667, %v2538
        %v3669 = vmax.f32 %v3668, %v2544
        %v3670 = vmax.f32 %v3669, %v2548
        %v3671 = vmax.f32 %v3670, %v2554
        %v3672 = vmax.f32 %v3671, %v2558
        %v3673 = vmax.f32 %v3672, %v2564
        %v3674 = vmax.f32 %v3673, %v2568
        %v3675 = vmax.f32 %v3674, %v2574
        %v3676 = vmax.f32 %v3675, %v2578
        %v3677 = vmax.f32 %v3676, %v2584
        %v3678 = vmax.f32 %v3677, %v2588
        %v3679 = vmax.f32 %v3678, %v2594
        %v3680 = vmax.f32 %v3679, %v2598
        %v3681 = vmax.f32 %v3680, %v2604
        %v3682 = vmax.f32 %v3681, %v2608
        %v3683 = vmax.f32 %v3682, %v2614
        %v3684 = vmax.f32 %v3683, %v2618
        %v3685 = vmax.f32 %v3684, %v2624
        %v3686 = vmax.f32 %v3685, %v2628
        %v3687 = vmax.f32 %v3686, %v2634
        %v3688 = vmax.f32 %v3687, %v2638
        %v3689 = vmax.f32 %v3688, %v2644
        %v3690 = vmax.f32 %v3689, %v2648
        %v3691 = vmax.f32 %v3690, %v2654
        %v3692 = vmax.f32 %v3691, %v2658
        %v3693 = vmax.f32 %v3692, %v2664
        %v3694 = vmax.f32 %v3693, %v2668
        %v3695 = vmax.f32 %v3694, %v2674
        %v3696 = vmax.f32 %v3695, %v2678
        %v3697 = vmax.f32 %v3696, %v2684
        %v3698 = vmax.f32 %v3697, %v2688
        %v3699 = vmax.f32 %v3698, %v2694
        %v3700 = vmax.f32 %v3699, %v2698
        %v3701 = vmax.f32 %v3700, %v2704
        %v3702 = vmax.f32 %v3701, %v2708
        %v3703 = vmax.f32 %v3702, %v2714
        %v3704 = vmax.f32 %v3703, %v2718
        %v3705 = vmax.f32 %v3704, %v2724
        %v3706 = vmax.f32 %v3705, %v2728
        %v3707 = vrot.slane %v3706, 4
        %v3708 = vmax.f32 %v3706, %v3707
        %v3709 = vrot.slane %v3708, 2
        %v3710 = vmax.f32 %v3708, %v3709
        %v3711 = vrot.slane %v3710, 1
        %v3712 = vmax.f32 %v3710, %v3711
        %v3713 = vmax.f32 %v2765, %v2769
        %v3714 = vmax.f32 %v3713, %v2775
        %v3715 = vmax.f32 %v3714, %v2779
        %v3716 = vmax.f32 %v3715, %v2785
        %v3717 = vmax.f32 %v3716, %v2789
        %v3718 = vmax.f32 %v3717, %v2795
        %v3719 = vmax.f32 %v3718, %v2799
        %v3720 = vmax.f32 %v3719, %v2805
        %v3721 = vmax.f32 %v3720, %v2809
        %v3722 = vmax.f32 %v3721, %v2815
        %v3723 = vmax.f32 %v3722, %v2819
        %v3724 = vmax.f32 %v3723, %v2825
        %v3725 = vmax.f32 %v3724, %v2829
        %v3726 = vmax.f32 %v3725, %v2835
        %v3727 = vmax.f32 %v3726, %v2839
        %v3728 = vmax.f32 %v3727, %v2845
        %v3729 = vmax.f32 %v3728, %v2849
        %v3730 = vmax.f32 %v3729, %v2855
        %v3731 = vmax.f32 %v3730, %v2859
        %v3732 = vmax.f32 %v3731, %v2865
        %v3733 = vmax.f32 %v3732, %v2869
        %v3734 = vmax.f32 %v3733, %v2875
        %v3735 = vmax.f32 %v3734, %v2879
        %v3736 = vmax.f32 %v3735, %v2885
        %v3737 = vmax.f32 %v3736, %v2889
        %v3738 = vmax.f32 %v3737, %v2895
        %v3739 = vmax.f32 %v3738, %v2899
        %v3740 = vmax.f32 %v3739, %v2905
        %v3741 = vmax.f32 %v3740, %v2909
        %v3742 = vmax.f32 %v3741, %v2915
        %v3743 = vmax.f32 %v3742, %v2919
        %v3744 = vmax.f32 %v3743, %v2925
        %v3745 = vmax.f32 %v3744, %v2929
        %v3746 = vmax.f32 %v3745, %v2935
        %v3747 = vmax.f32 %v3746, %v2939
        %v3748 = vmax.f32 %v3747, %v2945
        %v3749 = vmax.f32 %v3748, %v2949
        %v3750 = vmax.f32 %v3749, %v2955
        %v3751 = vmax.f32 %v3750, %v2959
        %v3752 = vmax.f32 %v3751, %v2965
        %v3753 = vmax.f32 %v3752, %v2969
        %v3754 = vmax.f32 %v3753, %v2975
        %v3755 = vmax.f32 %v3754, %v2979
        %v3756 = vmax.f32 %v3755, %v2985
        %v3757 = vmax.f32 %v3756, %v2989
        %v3758 = vmax.f32 %v3757, %v2995
        %v3759 = vmax.f32 %v3758, %v2999
        %v3760 = vmax.f32 %v3759, %v3005
        %v3761 = vmax.f32 %v3760, %v3009
        %v3762 = vmax.f32 %v3761, %v3015
        %v3763 = vmax.f32 %v3762, %v3019
        %v3764 = vmax.f32 %v3763, %v3025
        %v3765 = vmax.f32 %v3764, %v3029
        %v3766 = vmax.f32 %v3765, %v3035
        %v3767 = vmax.f32 %v3766, %v3039
        %v3768 = vmax.f32 %v3767, %v3045
        %v3769 = vmax.f32 %v3768, %v3049
        %v3770 = vmax.f32 %v3769, %v3055
        %v3771 = vmax.f32 %v3770, %v3059
        %v3772 = vmax.f32 %v3771, %v3065
        %v3773 = vmax.f32 %v3772, %v3069
        %v3774 = vmax.f32 %v3773, %v3075
        %v3775 = vmax.f32 %v3774, %v3079
        %v3776 = vrot.slane %v3775, 4
        %v3777 = vmax.f32 %v3775, %v3776
        %v3778 = vrot.slane %v3777, 2
        %v3779 = vmax.f32 %v3777, %v3778
        %v3780 = vrot.slane %v3779, 1
        %v3781 = vmax.f32 %v3779, %v3780
        %v3782 = vmax.f32 %v2767, %v2771
        %v3783 = vmax.f32 %v3782, %v2777
        %v3784 = vmax.f32 %v3783, %v2781
        %v3785 = vmax.f32 %v3784, %v2787
        %v3786 = vmax.f32 %v3785, %v2791
        %v3787 = vmax.f32 %v3786, %v2797
        %v3788 = vmax.f32 %v3787, %v2801
        %v3789 = vmax.f32 %v3788, %v2807
        %v3790 = vmax.f32 %v3789, %v2811
        %v3791 = vmax.f32 %v3790, %v2817
        %v3792 = vmax.f32 %v3791, %v2821
        %v3793 = vmax.f32 %v3792, %v2827
        %v3794 = vmax.f32 %v3793, %v2831
        %v3795 = vmax.f32 %v3794, %v2837
        %v3796 = vmax.f32 %v3795, %v2841
        %v3797 = vmax.f32 %v3796, %v2847
        %v3798 = vmax.f32 %v3797, %v2851
        %v3799 = vmax.f32 %v3798, %v2857
        %v3800 = vmax.f32 %v3799, %v2861
        %v3801 = vmax.f32 %v3800, %v2867
        %v3802 = vmax.f32 %v3801, %v2871
        %v3803 = vmax.f32 %v3802, %v2877
        %v3804 = vmax.f32 %v3803, %v2881
        %v3805 = vmax.f32 %v3804, %v2887
        %v3806 = vmax.f32 %v3805, %v2891
        %v3807 = vmax.f32 %v3806, %v2897
        %v3808 = vmax.f32 %v3807, %v2901
        %v3809 = vmax.f32 %v3808, %v2907
        %v3810 = vmax.f32 %v3809, %v2911
        %v3811 = vmax.f32 %v3810, %v2917
        %v3812 = vmax.f32 %v3811, %v2921
        %v3813 = vmax.f32 %v3812, %v2927
        %v3814 = vmax.f32 %v3813, %v2931
        %v3815 = vmax.f32 %v3814, %v2937
        %v3816 = vmax.f32 %v3815, %v2941
        %v3817 = vmax.f32 %v3816, %v2947
        %v3818 = vmax.f32 %v3817, %v2951
        %v3819 = vmax.f32 %v3818, %v2957
        %v3820 = vmax.f32 %v3819, %v2961
        %v3821 = vmax.f32 %v3820, %v2967
        %v3822 = vmax.f32 %v3821, %v2971
        %v3823 = vmax.f32 %v3822, %v2977
        %v3824 = vmax.f32 %v3823, %v2981
        %v3825 = vmax.f32 %v3824, %v2987
        %v3826 = vmax.f32 %v3825, %v2991
        %v3827 = vmax.f32 %v3826, %v2997
        %v3828 = vmax.f32 %v3827, %v3001
        %v3829 = vmax.f32 %v3828, %v3007
        %v3830 = vmax.f32 %v3829, %v3011
        %v3831 = vmax.f32 %v3830, %v3017
        %v3832 = vmax.f32 %v3831, %v3021
        %v3833 = vmax.f32 %v3832, %v3027
        %v3834 = vmax.f32 %v3833, %v3031
        %v3835 = vmax.f32 %v3834, %v3037
        %v3836 = vmax.f32 %v3835, %v3041
        %v3837 = vmax.f32 %v3836, %v3047
        %v3838 = vmax.f32 %v3837, %v3051
        %v3839 = vmax.f32 %v3838, %v3057
        %v3840 = vmax.f32 %v3839, %v3061
        %v3841 = vmax.f32 %v3840, %v3067
        %v3842 = vmax.f32 %v3841, %v3071
        %v3843 = vmax.f32 %v3842, %v3077
        %v3844 = vmax.f32 %v3843, %v3081
        %v3845 = vrot.slane %v3844, 4
        %v3846 = vmax.f32 %v3844, %v3845
        %v3847 = vrot.slane %v3846, 2
        %v3848 = vmax.f32 %v3846, %v3847
        %v3849 = vrot.slane %v3848, 1
        %v3850 = vmax.f32 %v3848, %v3849
        %v3851 = vmax.f32 %v3118, %v3122
        %v3852 = vmax.f32 %v3851, %v3128
        %v3853 = vmax.f32 %v3852, %v3132
        %v3854 = vmax.f32 %v3853, %v3138
        %v3855 = vmax.f32 %v3854, %v3142
        %v3856 = vmax.f32 %v3855, %v3148
        %v3857 = vmax.f32 %v3856, %v3152
        %v3858 = vmax.f32 %v3857, %v3158
        %v3859 = vmax.f32 %v3858, %v3162
        %v3860 = vmax.f32 %v3859, %v3168
        %v3861 = vmax.f32 %v3860, %v3172
        %v3862 = vmax.f32 %v3861, %v3178
        %v3863 = vmax.f32 %v3862, %v3182
        %v3864 = vmax.f32 %v3863, %v3188
        %v3865 = vmax.f32 %v3864, %v3192
        %v3866 = vmax.f32 %v3865, %v3198
        %v3867 = vmax.f32 %v3866, %v3202
        %v3868 = vmax.f32 %v3867, %v3208
        %v3869 = vmax.f32 %v3868, %v3212
        %v3870 = vmax.f32 %v3869, %v3218
        %v3871 = vmax.f32 %v3870, %v3222
        %v3872 = vmax.f32 %v3871, %v3228
        %v3873 = vmax.f32 %v3872, %v3232
        %v3874 = vmax.f32 %v3873, %v3238
        %v3875 = vmax.f32 %v3874, %v3242
        %v3876 = vmax.f32 %v3875, %v3248
        %v3877 = vmax.f32 %v3876, %v3252
        %v3878 = vmax.f32 %v3877, %v3258
        %v3879 = vmax.f32 %v3878, %v3262
        %v3880 = vmax.f32 %v3879, %v3268
        %v3881 = vmax.f32 %v3880, %v3272
        %v3882 = vmax.f32 %v3881, %v3278
        %v3883 = vmax.f32 %v3882, %v3282
        %v3884 = vmax.f32 %v3883, %v3288
        %v3885 = vmax.f32 %v3884, %v3292
        %v3886 = vmax.f32 %v3885, %v3298
        %v3887 = vmax.f32 %v3886, %v3302
        %v3888 = vmax.f32 %v3887, %v3308
        %v3889 = vmax.f32 %v3888, %v3312
        %v3890 = vmax.f32 %v3889, %v3318
        %v3891 = vmax.f32 %v3890, %v3322
        %v3892 = vmax.f32 %v3891, %v3328
        %v3893 = vmax.f32 %v3892, %v3332
        %v3894 = vmax.f32 %v3893, %v3338
        %v3895 = vmax.f32 %v3894, %v3342
        %v3896 = vmax.f32 %v3895, %v3348
        %v3897 = vmax.f32 %v3896, %v3352
        %v3898 = vmax.f32 %v3897, %v3358
        %v3899 = vmax.f32 %v3898, %v3362
        %v3900 = vmax.f32 %v3899, %v3368
        %v3901 = vmax.f32 %v3900, %v3372
        %v3902 = vmax.f32 %v3901, %v3378
        %v3903 = vmax.f32 %v3902, %v3382
        %v3904 = vmax.f32 %v3903, %v3388
        %v3905 = vmax.f32 %v3904, %v3392
        %v3906 = vmax.f32 %v3905, %v3398
        %v3907 = vmax.f32 %v3906, %v3402
        %v3908 = vmax.f32 %v3907, %v3408
        %v3909 = vmax.f32 %v3908, %v3412
        %v3910 = vmax.f32 %v3909, %v3418
        %v3911 = vmax.f32 %v3910, %v3422
        %v3912 = vmax.f32 %v3911, %v3428
        %v3913 = vmax.f32 %v3912, %v3432
        %v3914 = vrot.slane %v3913, 4
        %v3915 = vmax.f32 %v3913, %v3914
        %v3916 = vrot.slane %v3915, 2
        %v3917 = vmax.f32 %v3915, %v3916
        %v3918 = vrot.slane %v3917, 1
        %v3919 = vmax.f32 %v3917, %v3918
        %v3920 = vmax.f32 %v3120, %v3124
        %v3921 = vmax.f32 %v3920, %v3130
        %v3922 = vmax.f32 %v3921, %v3134
        %v3923 = vmax.f32 %v3922, %v3140
        %v3924 = vmax.f32 %v3923, %v3144
        %v3925 = vmax.f32 %v3924, %v3150
        %v3926 = vmax.f32 %v3925, %v3154
        %v3927 = vmax.f32 %v3926, %v3160
        %v3928 = vmax.f32 %v3927, %v3164
        %v3929 = vmax.f32 %v3928, %v3170
        %v3930 = vmax.f32 %v3929, %v3174
        %v3931 = vmax.f32 %v3930, %v3180
        %v3932 = vmax.f32 %v3931, %v3184
        %v3933 = vmax.f32 %v3932, %v3190
        %v3934 = vmax.f32 %v3933, %v3194
        %v3935 = vmax.f32 %v3934, %v3200
        %v3936 = vmax.f32 %v3935, %v3204
        %v3937 = vmax.f32 %v3936, %v3210
        %v3938 = vmax.f32 %v3937, %v3214
        %v3939 = vmax.f32 %v3938, %v3220
        %v3940 = vmax.f32 %v3939, %v3224
        %v3941 = vmax.f32 %v3940, %v3230
        %v3942 = vmax.f32 %v3941, %v3234
        %v3943 = vmax.f32 %v3942, %v3240
        %v3944 = vmax.f32 %v3943, %v3244
        %v3945 = vmax.f32 %v3944, %v3250
        %v3946 = vmax.f32 %v3945, %v3254
        %v3947 = vmax.f32 %v3946, %v3260
        %v3948 = vmax.f32 %v3947, %v3264
        %v3949 = vmax.f32 %v3948, %v3270
        %v3950 = vmax.f32 %v3949, %v3274
        %v3951 = vmax.f32 %v3950, %v3280
        %v3952 = vmax.f32 %v3951, %v3284
        %v3953 = vmax.f32 %v3952, %v3290
        %v3954 = vmax.f32 %v3953, %v3294
        %v3955 = vmax.f32 %v3954, %v3300
        %v3956 = vmax.f32 %v3955, %v3304
        %v3957 = vmax.f32 %v3956, %v3310
        %v3958 = vmax.f32 %v3957, %v3314
        %v3959 = vmax.f32 %v3958, %v3320
        %v3960 = vmax.f32 %v3959, %v3324
        %v3961 = vmax.f32 %v3960, %v3330
        %v3962 = vmax.f32 %v3961, %v3334
        %v3963 = vmax.f32 %v3962, %v3340
        %v3964 = vmax.f32 %v3963, %v3344
        %v3965 = vmax.f32 %v3964, %v3350
        %v3966 = vmax.f32 %v3965, %v3354
        %v3967 = vmax.f32 %v3966, %v3360
        %v3968 = vmax.f32 %v3967, %v3364
        %v3969 = vmax.f32 %v3968, %v3370
        %v3970 = vmax.f32 %v3969, %v3374
        %v3971 = vmax.f32 %v3970, %v3380
        %v3972 = vmax.f32 %v3971, %v3384
        %v3973 = vmax.f32 %v3972, %v3390
        %v3974 = vmax.f32 %v3973, %v3394
        %v3975 = vmax.f32 %v3974, %v3400
        %v3976 = vmax.f32 %v3975, %v3404
        %v3977 = vmax.f32 %v3976, %v3410
        %v3978 = vmax.f32 %v3977, %v3414
        %v3979 = vmax.f32 %v3978, %v3420
        %v3980 = vmax.f32 %v3979, %v3424
        %v3981 = vmax.f32 %v3980, %v3430
        %v3982 = vmax.f32 %v3981, %v3434
        %v3983 = vrot.slane %v3982, 4
        %v3984 = vmax.f32 %v3982, %v3983
        %v3985 = vrot.slane %v3984, 2
        %v3986 = vmax.f32 %v3984, %v3985
        %v3987 = vrot.slane %v3986, 1
        %v3988 = vmax.f32 %v3986, %v3987
        %v3997 = vcombine.low %v3505, %v3574
        %v3998 = vcombine.low %v3643, %v3712
        %v3999 = vcombine.low %v3781, %v3850
        %v4000 = vcombine.low %v3919, %v3988
        %v4002 = vunpack.c.l.s4 1966171168
        %v4003 = vunpack.c.0.s8 %v4002
        %v4004 = vlaneseq
        %v4005 = vshrl.u32 %v4004, 7
        %v4006 = vsub.s32 %v4003, %v4005
        %v4007 = vrot.slane %v3997, %v4006
        %v4009 = vunpack.c.l.s4 1966171168
        %v4010 = vunpack.c.0.s8 %v4009
        %v4011 = vlaneseq
        %v4012 = vshrl.u32 %v4011, 7
        %v4013 = vsub.s32 %v4010, %v4012
        %v4014 = vrot.slane %v3998, %v4013
        %v4016 = vunpack.c.l.s4 1966171168
        %v4017 = vunpack.c.0.s8 %v4016
        %v4018 = vlaneseq
        %v4019 = vshrl.u32 %v4018, 7
        %v4020 = vsub.s32 %v4017, %v4019
        %v4021 = vrot.slane %v3999, %v4020
        %v4023 = vunpack.c.l.s4 1966171168
        %v4024 = vunpack.c.0.s8 %v4023
        %v4025 = vlaneseq
        %v4026 = vshrl.u32 %v4025, 7
        %v4027 = vsub.s32 %v4024, %v4026
        %v4028 = vrot.slane %v4000, %v4027
        %v4029 = vcombine.low %v4007, %v4014
        %v4030 = vcombine.low %v4021, %v4028
        %v4032 = vunpack.c.l.s4 1966171168
        %v4033 = vunpack.c.0.s8 %v4032
        %v4034 = vlaneseq
        %v4035 = vshrl.u32 %v4034, 7
        %v4036 = vsub.s32 %v4033, %v4035
        %v4037 = vrot.slane %v4029, %v4036
        %v4039 = vunpack.c.l.s4 1966171168
        %v4040 = vunpack.c.0.s8 %v4039
        %v4041 = vlaneseq
        %v4042 = vshrl.u32 %v4041, 7
        %v4043 = vsub.s32 %v4040, %v4042
        %v4044 = vrot.slane %v4030, %v4043
        %v4045 = vcombine.low %v4037, %v4044
        %v4047 = vmax.f32 %v3436, %v4045
        %4048 = vst [vmem:[#allocation2] sm:$0xff] %v4047
        // Predicated region
        $region53: #{tpu_custom_call.1} parent=47 // pred_check
          %p4049 = pneg %p322
        $region54: #{tpu_custom_call.1} parent=47 // pred_check_branch
          %4051 = sbr.rel (%p4049) target = $region56
        $region55: #{tpu_custom_call.1} parent=47 // pred_region
          %v4052 = vld [vmem:[#allocation2] sm:$0xff]
          %4053 = vst [vmem:[%s308] sm:$0xff] %v4052
        $region56: #{tpu_custom_call.1} parent=47 // pred_fallthru
          _
        %s4054 = sand.u32 %s206, 1
        %s4055 = scalar_lea.sflag [#allocation4], %s4054
        %s4056 = sand.u32 %s206, 1
        %s4057 = smul.addr %s4056, 8
        %s4058 = scalar_lea.vmem [#allocation3], %s4057
        // Predicated region
        $region57: #{tpu_custom_call.1} parent=47 // pred_check
          %p4059 = pneg %p216
        $region58: #{tpu_custom_call.1} parent=47 // pred_check_branch
          %4061 = sbr.rel (%p4059) target = $region60
        $region59: #{tpu_custom_call.1} parent=47 // pred_region
          %s4063 = ssub.s32 128, 128
          %4064 = vsyncadd %s4055, %s4063
          %s4065 = smul.addr %s27, 8
          %s4066 = smul.addr %s26, 16
          %s4067 = sadd.s32 %s4065, %s4066
          %s4068 = smul.addr %s4067, 16
          %s4069 = scalar_lea.hbm %s7, %s4068
          %s4071 = sshll.u32 %s4058, 4
          %s4072 = int_to_ptr.vmem [resolvable:$true] %s4071
          %4074 = dma.vmem_to_hbm [thread:$0]  %s4072, 128, %s4069, %s4055
        $region60: #{tpu_custom_call.1} parent=47 // pred_fallthru
          _
      $region48: #{tpu_custom_call.1} parent=5 // pred_fallthru
        _
      %p4075 = scmp.le.s32.totalorder 2, %s16
      // Predicated region
      $region61: #{tpu_custom_call.1} parent=5 // pred_check
        %p4076 = pneg %p4075
      $region62: #{tpu_custom_call.1} parent=5 // pred_check_branch
        %4078 = sbr.rel (%p4076) target = $region64
      $region63: #{tpu_custom_call.1} parent=5 // pred_region
        %s4079 = ssub.s32 %s16, 2
        // Predicated region
        $region65: #{tpu_custom_call.1} parent=63 // pred_check
          %p4080 = pneg %p222
        $region66: #{tpu_custom_call.1} parent=63 // pred_check_branch
          %4082 = sbr.rel (%p4080) target = $region68
        $region67: #{tpu_custom_call.1} parent=63 // pred_region
          %s4083 = sand.u32 %s207, 1
          %s4084 = scalar_lea.sflag [#allocation4], %s4083
          %s4085 = sand.u32 %s207, 1
          %s4086 = smul.addr %s4085, 8
          %s4087 = scalar_lea.vmem [#allocation3], %s4086
          %4088 = dma.done %s4084, 128
        $region68: #{tpu_custom_call.1} parent=63 // pred_fallthru
          _
      $region64: #{tpu_custom_call.1} parent=5 // pred_fallthru
        _
    $region6: #{tpu_custom_call.1} parent=1 // loop_footer
      %s20 = sadd.s32 1, %s16
    $region7: #{tpu_custom_call.1} parent=1 // loop_footer_branch
      %15 = sbr.rel target = $region3
    $region8: #{tpu_custom_call.1} parent=1 // loop_exit
      _
    %4089 = vsyncpa [#allocation4], 1
    %s4090 = scalar_lea.sflag [#allocation4], 1
    %4091 = vsyncpa %s4090, 1

</llo_original>
